<compile_context>
chip_gen: v6e
topology: v6e:2x2x1
jax: 0.10.0
libtpu: 0.0.40
codegen_flags: <defaults>
</compile_context>

<pallas_src>
import functools

import jax
import jax.numpy as jnp
from jax.experimental import pallas as pl
from jax.experimental.pallas import tpu as pltpu


def _bahdanau_kernel(vals_ref, s2_ref, w1t_ref, vt_ref, bv_ref,
                     ctx_ref, attn_ref):
    BB, T, F = vals_ref.shape
    H = w1t_ref.shape[1]
    O = vt_ref.shape[1]

    vals = vals_ref[...]                                  # (BB, T, F)
    vals2d = vals.reshape(BB * T, F)                      # free: F stays in lanes

    # W1 projection of all BB*T rows in one MXU matmul (b1/b2 are folded in s2).
    s1 = jnp.dot(vals2d, w1t_ref[...],
                 preferred_element_type=jnp.float32)      # (BB*T, H) f32
    s2 = s2_ref[...]                                      # (BB, H)   f32 = hidden@W2^T + b1 + b2
    t = jnp.tanh(s1.reshape(BB, T, H) + s2[:, None, :])   # (BB, T, H) f32 (EUP)

    score = jnp.dot(t.reshape(BB * T, H).astype(vt_ref.dtype), vt_ref[...],
                    preferred_element_type=jnp.float32)
    score = (score + bv_ref[...]).reshape(BB, T, O)       # (BB, T, O) f32

    # Softmax over the time axis (PyTorch Softmax(dim=1)).
    m = jnp.max(score, axis=1, keepdims=True)
    e = jnp.exp(score - m)
    attn = e * pl.reciprocal(jnp.sum(e, axis=1, keepdims=True), approx=False)
    attn_ref[...] = attn.astype(attn_ref.dtype)           # (BB, T, O)

    # context[b] = attn[b]^T @ vals[b] -> (BB, O, F), contracting over T with
    # no explicit transposes; store as a lane-dense (BB, O*F) slab.
    ctx = jax.lax.dot_general(
        attn.astype(vals.dtype), vals,
        dimension_numbers=(((1,), (1,)), ((0,), (0,))),
        preferred_element_type=jnp.float32)               # (BB, O, F)
    ctx_ref[...] = ctx.reshape(BB, O * F).astype(ctx_ref.dtype)


@functools.partial(jax.jit, static_argnames=("block_b", "compute_dtype"))
def bahdanau_attention(hidden_states, values, w1, b1, w2, b2, v, bv,
                       *, block_b=None, compute_dtype=None):
    """hidden_states: (B, F); values: (B, T, F).
    w1, w2: (H, F) torch-style; v: (O, H); biases: (H,), (H,), (O,).
    compute_dtype: dtype of the MXU operands (e.g. jnp.bfloat16 on v6e/v7x);
    accumulation, tanh and softmax stay in f32."""
    B, T, F = values.shape
    H = w1.shape[0]
    O = v.shape[0]
    out_dtype = values.dtype
    if compute_dtype is None:
        compute_dtype = values.dtype

    # Hoisted hidden projection: one (B, F) @ (F, H) XLA matmul; both biases
    # are folded in so the kernel adds a single (BB, H) term.
    s2 = (hidden_states.astype(jnp.float32) @ w2.T.astype(jnp.float32)
          + (b1 + b2).astype(jnp.float32))                          # (B, H)

    w1t = w1.T.astype(compute_dtype)                                # (F, H)
    vt = v.T.astype(compute_dtype)                                  # (H, O)
    bvr = bv.reshape(1, O).astype(jnp.float32)
    vals_c = values.astype(compute_dtype)                           # halves DMA in bf16

    # Batch tile: target ~512 matmul rows per step (amortizes the ~0.35us
    # per-grid-step overhead), capped so the values tile stays <= ~4 MiB per
    # buffer (double-buffered by the pipeline).  Keep sublane alignment: the
    # block's batch extent must be a multiple of 8 unless it spans the full
    # (padded) batch.
    if block_b is None:
        row_bytes = T * F * jnp.dtype(compute_dtype).itemsize
        max_rows_vmem = max(1, (4 * 1024 * 1024) // max(row_bytes, 1))
        target = max(1, min(pl.cdiv(512, T), max_rows_vmem))
        block_b = B if B <= target else pl.cdiv(target, 8) * 8
    elif block_b < B:
        block_b = pl.cdiv(block_b, 8) * 8
    n_blocks = pl.cdiv(B, block_b)
    Bp = n_blocks * block_b
    if Bp != B:                                   # pad batch; padded rows are finite & discarded
        vals_c = jnp.pad(vals_c, ((0, Bp - B), (0, 0), (0, 0)))
        s2 = jnp.pad(s2, ((0, Bp - B), (0, 0)))

    grid_spec = pltpu.PrefetchScalarGridSpec(
        num_scalar_prefetch=0,
        grid=(n_blocks,),
        in_specs=[
            pl.BlockSpec((block_b, T, F), lambda b: (b, 0, 0)),   # values tile
            pl.BlockSpec((block_b, H), lambda b: (b, 0)),         # hidden proj + biases
            pl.BlockSpec((F, H), lambda b: (0, 0)),               # W1^T (resident)
            pl.BlockSpec((H, O), lambda b: (0, 0)),               # V^T  (resident)
            pl.BlockSpec((1, O), lambda b: (0, 0)),               # bV
        ],
        out_specs=[
            pl.BlockSpec((block_b, O * F), lambda b: (b, 0)),     # context, lane-dense
            pl.BlockSpec((block_b, T, O), lambda b: (b, 0, 0)),   # attention weights
        ],
    )

    ctx_flat, attn = pl.pallas_call(
        _bahdanau_kernel,
        out_shape=(
            jax.ShapeDtypeStruct((Bp, O * F), out_dtype),
            jax.ShapeDtypeStruct((Bp, T, O), out_dtype),
        ),
        grid_spec=grid_spec,
        compiler_params=pltpu.CompilerParams(
            dimension_semantics=("parallel",),          # shard batch tiles across TCs (v7x)
            vmem_limit_bytes=32 * 1024 * 1024),         # tiny footprint; safe on 64 MiB v7x
    )(vals_c, s2, w1t, vt, bvr)

    ctx = ctx_flat[:B].reshape(B, O, F)                 # free layout plumbing in the wrapper
    attn = attn[:B]
    return ctx, attn


def _reference(hidden_states, values, w1, b1, w2, b2, v, bv):
    s = jnp.tanh(values @ w1.T + b1 + (hidden_states @ w2.T + b2)[:, None, :])
    score = s @ v.T + bv                                     # (B, T, O)
    attn = jax.nn.softmax(score, axis=1)                     # softmax over T
    ctx = jnp.einsum("btf,bto->bof", values, attn)           # (B, O, F)
    return ctx, attn


if __name__ == "__main__":
    # Small shapes; B=20 exercises the batch-dim handling of the kernel.
    B, T, F, H, O = 20, 8, 32, 32, 8

    key = jax.random.PRNGKey(0)
    k = jax.random.split(key, 8)
    hidden_states = jax.random.normal(k[0], (B, F), jnp.float32)
    values = jax.random.normal(k[1], (B, T, F), jnp.float32)
    # Deterministic synthetic parameters (torch Linear shapes: (out, in)).
    w1 = jax.random.normal(k[2], (H, F), jnp.float32) * 0.1
    b1 = jax.random.normal(k[3], (H,), jnp.float32) * 0.1
    w2 = jax.random.normal(k[4], (H, F), jnp.float32) * 0.1
    b2 = jax.random.normal(k[5], (H,), jnp.float32) * 0.1
    v = jax.random.normal(k[6], (O, H), jnp.float32) * 0.1
    bv = jax.random.normal(k[7], (O,), jnp.float32) * 0.1

    ctx_ref, attn_ref = _reference(hidden_states, values, w1, b1, w2, b2, v, bv)

    # f32 path (works on all generations).
    ctx, attn = bahdanau_attention(hidden_states, values, w1, b1, w2, b2, v, bv)
    jax.block_until_ready((ctx, attn))
    assert jnp.allclose(ctx, ctx_ref, atol=1e-4, rtol=1e-4)
    assert jnp.allclose(attn, attn_ref, atol=1e-5, rtol=1e-5)

    # Explicit multi-step grid path (block_b forces 2 grid steps + padding).
    ctx2, attn2 = bahdanau_attention(hidden_states, values, w1, b1, w2, b2,
                                     v, bv, block_b=16)
    jax.block_until_ready((ctx2, attn2))
    assert jnp.allclose(ctx2, ctx_ref, atol=1e-4, rtol=1e-4)
    assert jnp.allclose(attn2, attn_ref, atol=1e-5, rtol=1e-5)

    # bf16 MXU-operand path (v6e/v7x-style); f32 accumulation/tanh/softmax.
    ctx_bf, attn_bf = bahdanau_attention(hidden_states, values, w1, b1, w2, b2,
                                         v, bv, compute_dtype=jnp.bfloat16)
    jax.block_until_ready((ctx_bf, attn_bf))
    assert jnp.allclose(ctx_bf, ctx_ref, atol=5e-2, rtol=5e-2)
    assert jnp.allclose(attn_bf, attn_ref, atol=2e-2, rtol=2e-2)

    print("KERNEL_OK")
</pallas_src>

<mosaic_0001>
module attributes {stable_mosaic.version = 11 : i64} {
  func.func @_bahdanau_kernel(%arg0: i32, %arg1: memref<20x8x32xf32, #tpu.memory_space<vmem>>, %arg2: memref<20x32xf32, #tpu.memory_space<vmem>>, %arg3: memref<32x32xf32, #tpu.memory_space<vmem>>, %arg4: memref<32x8xf32, #tpu.memory_space<vmem>>, %arg5: memref<1x8xf32, #tpu.memory_space<vmem>>, %arg6: memref<20x256xf32, #tpu.memory_space<vmem>>, %arg7: memref<20x8x8xf32, #tpu.memory_space<vmem>>) attributes {dimension_semantics = [#tpu.dimension_semantics<parallel>], iteration_bounds = array<i64: 1>, scalar_prefetch = 0 : i64, scratch_operands = 0 : i64, tpu.core_type = #tpu.core_type<tc>, window_params = [{transform_indices = @transform_0, window_bounds = array<i64: 20, 8, 32>}, {transform_indices = @transform_1, window_bounds = array<i64: 20, 32>}, {pipeline_mode = #tpu.pipeline_mode<synchronous>, transform_indices = @transform_2, window_bounds = array<i64: 32, 32>}, {pipeline_mode = #tpu.pipeline_mode<synchronous>, transform_indices = @transform_3, window_bounds = array<i64: 32, 8>}, {pipeline_mode = #tpu.pipeline_mode<synchronous>, transform_indices = @transform_4, window_bounds = array<i64: 1, 8>}, {transform_indices = @transform_5, window_bounds = array<i64: 20, 256>}, {transform_indices = @transform_6, window_bounds = array<i64: 20, 8, 8>}]} {
    %c0 = arith.constant 0 : index
    %c0_0 = arith.constant 0 : index
    %c0_1 = arith.constant 0 : index
    %0 = vector.load %arg1[%c0, %c0_0, %c0_1] : memref<20x8x32xf32, #tpu.memory_space<vmem>>, vector<20x8x32xf32>
    %1 = vector.shape_cast %0 : vector<20x8x32xf32> to vector<160x32xf32>
    %c0_2 = arith.constant 0 : index
    %c0_3 = arith.constant 0 : index
    %2 = vector.load %arg3[%c0_2, %c0_3] : memref<32x32xf32, #tpu.memory_space<vmem>>, vector<32x32xf32>
    %cst = arith.constant dense<0.000000e+00> : vector<160x32xf32>
    %3 = tpu.matmul %1, %2, %cst {dimension_numbers = #tpu.dot_dimension_numbers<[1], [0], [0], [1], [0, 0, 1, 1], [], []>} : vector<160x32xf32>, vector<32x32xf32>, vector<160x32xf32> -> vector<160x32xf32>
    %c0_4 = arith.constant 0 : index
    %c0_5 = arith.constant 0 : index
    %4 = vector.load %arg2[%c0_4, %c0_5] : memref<20x32xf32, #tpu.memory_space<vmem>>, vector<20x32xf32>
    %5 = vector.shape_cast %3 : vector<160x32xf32> to vector<20x8x32xf32>
    %6 = vector.shape_cast %4 : vector<20x32xf32> to vector<20x1x32xf32>
    %7 = vector.broadcast %6 : vector<20x1x32xf32> to vector<20x8x32xf32>
    %8 = arith.addf %5, %7 : vector<20x8x32xf32>
    %9 = math.tanh %8 : vector<20x8x32xf32>
    %10 = vector.shape_cast %9 : vector<20x8x32xf32> to vector<160x32xf32>
    %c0_6 = arith.constant 0 : index
    %c0_7 = arith.constant 0 : index
    %11 = vector.load %arg4[%c0_6, %c0_7] : memref<32x8xf32, #tpu.memory_space<vmem>>, vector<32x8xf32>
    %cst_8 = arith.constant dense<0.000000e+00> : vector<160x8xf32>
    %12 = tpu.matmul %10, %11, %cst_8 {dimension_numbers = #tpu.dot_dimension_numbers<[1], [0], [0], [1], [0, 0, 1, 1], [], []>} : vector<160x32xf32>, vector<32x8xf32>, vector<160x8xf32> -> vector<160x8xf32>
    %c0_9 = arith.constant 0 : index
    %c0_10 = arith.constant 0 : index
    %13 = vector.load %arg5[%c0_9, %c0_10] : memref<1x8xf32, #tpu.memory_space<vmem>>, vector<1x8xf32>
    %14 = vector.broadcast %13 : vector<1x8xf32> to vector<160x8xf32>
    %15 = arith.addf %12, %14 : vector<160x8xf32>
    %16 = vector.shape_cast %15 : vector<160x8xf32> to vector<20x8x8xf32>
    %cst_11 = arith.constant dense<0xFF800000> : vector<20x8xf32>
    %17 = vector.multi_reduction <maximumf>, %16, %cst_11 [1] : vector<20x8x8xf32> to vector<20x8xf32>
    %18 = vector.shape_cast %17 : vector<20x8xf32> to vector<20x1x8xf32>
    %19 = vector.broadcast %18 : vector<20x1x8xf32> to vector<20x8x8xf32>
    %20 = arith.subf %16, %19 : vector<20x8x8xf32>
    %21 = math.exp %20 : vector<20x8x8xf32>
    %cst_12 = arith.constant dense<0.000000e+00> : vector<20x8xf32>
    %22 = vector.multi_reduction <add>, %21, %cst_12 [1] : vector<20x8x8xf32> to vector<20x8xf32>
    %23 = vector.shape_cast %22 : vector<20x8xf32> to vector<20x1x8xf32>
    %24 = tpu.reciprocal %23 : vector<20x1x8xf32> -> vector<20x1x8xf32>
    %25 = vector.broadcast %24 : vector<20x1x8xf32> to vector<20x8x8xf32>
    %26 = arith.mulf %21, %25 : vector<20x8x8xf32>
    %c0_13 = arith.constant 0 : index
    %c0_14 = arith.constant 0 : index
    %c0_15 = arith.constant 0 : index
    %27 = vector.load %arg7[%c0_13, %c0_14, %c0_15] : memref<20x8x8xf32, #tpu.memory_space<vmem>>, vector<20x8x8xf32>
    tpu.vector_store %arg7[%c0_13, %c0_14, %c0_15], %26 {strides = array<i32>} : memref<20x8x8xf32, #tpu.memory_space<vmem>>, vector<20x8x8xf32>,
    %cst_16 = arith.constant dense<0.000000e+00> : vector<20x8x32xf32>
    %28 = tpu.matmul %26, %0, %cst_16 {dimension_numbers = #tpu.dot_dimension_numbers<[1], [1], [2], [2], [0, 0, 0, 2, 1, 2], [0], [0]>} : vector<20x8x8xf32>, vector<20x8x32xf32>, vector<20x8x32xf32> -> vector<20x8x32xf32>
    %29 = vector.shape_cast %28 : vector<20x8x32xf32> to vector<20x256xf32>
    %c0_17 = arith.constant 0 : index
    %c0_18 = arith.constant 0 : index
    %30 = vector.load %arg6[%c0_17, %c0_18] : memref<20x256xf32, #tpu.memory_space<vmem>>, vector<20x256xf32>
    tpu.vector_store %arg6[%c0_17, %c0_18], %29 {strides = array<i32>} : memref<20x256xf32, #tpu.memory_space<vmem>>, vector<20x256xf32>,
    return
  }
  func.func @transform_0(%arg0: i32) -> (i32, i32, i32) {
    %c0_i32 = arith.constant 0 : i32
    %c0_i32_0 = arith.constant 0 : i32
    %c0_i32_1 = arith.constant 0 : i32
    return %arg0, %c0_i32, %c0_i32_0 : i32, i32, i32
  }
  func.func @transform_1(%arg0: i32) -> (i32, i32) {
    %c0_i32 = arith.constant 0 : i32
    %c0_i32_0 = arith.constant 0 : i32
    return %arg0, %c0_i32 : i32, i32
  }
  func.func @transform_2(%arg0: i32) -> (i32, i32) {
    %c0_i32 = arith.constant 0 : i32
    %c0_i32_0 = arith.constant 0 : i32
    %c0_i32_1 = arith.constant 0 : i32
    return %c0_i32, %c0_i32_0 : i32, i32
  }
  func.func @transform_3(%arg0: i32) -> (i32, i32) {
    %c0_i32 = arith.constant 0 : i32
    %c0_i32_0 = arith.constant 0 : i32
    %c0_i32_1 = arith.constant 0 : i32
    return %c0_i32, %c0_i32_0 : i32, i32
  }
  func.func @transform_4(%arg0: i32) -> (i32, i32) {
    %c0_i32 = arith.constant 0 : i32
    %c0_i32_0 = arith.constant 0 : i32
    %c0_i32_1 = arith.constant 0 : i32
    return %c0_i32, %c0_i32_0 : i32, i32
  }
  func.func @transform_5(%arg0: i32) -> (i32, i32) {
    %c0_i32 = arith.constant 0 : i32
    %c0_i32_0 = arith.constant 0 : i32
    return %arg0, %c0_i32 : i32, i32
  }
  func.func @transform_6(%arg0: i32) -> (i32, i32, i32) {
    %c0_i32 = arith.constant 0 : i32
    %c0_i32_0 = arith.constant 0 : i32
    %c0_i32_1 = arith.constant 0 : i32
    return %arg0, %c0_i32, %c0_i32_0 : i32, i32, i32
  }
}

</mosaic_0001>

<llo_original>
// kernel: bahdanau_attention.1
$region0: #{bahdanau_attention.1}
  #allocation0 [shape = 'u32[]', space=smem, size = 0x4, offset = 0x4, fixed_abs, tag = 'smem constant byte address 0x4 - core index']
  #allocation1 [shape = 'u32[144,128]{1,0:T(1,128)}', space=vmem, size = 0x12000, scoped, tag = 'internal scratch']
  %s0 = inlined_call_operand.vmem [shape: f32[20,8,32], index: 0, kind: input, shape index: {}]
  %s1 = inlined_call_operand.vmem [shape: f32[20,32], index: 1, kind: input, shape index: {}]
  %s2 = inlined_call_operand.vmem [shape: f32[32,32], index: 2, kind: input, shape index: {}]
  %s3 = inlined_call_operand.vmem [shape: f32[32,8], index: 3, kind: input, shape index: {}]
  %s4 = inlined_call_operand.vmem [shape: f32[1,8], index: 4, kind: input, shape index: {}]
  %s5 = inlined_call_operand.vmem [shape: f32[20,256], index: 5, kind: output, shape index: {0}]
  %s6 = inlined_call_operand.vmem [shape: f32[20,8,8], index: 6, kind: output, shape index: {1}]
  %7 = xla_tuple %s5, %s6
  %s8 = sld [smem:[#allocation0]]
  $region38: #{bahdanau_attention.1} parent=0
    _
  %s10 = ssub.s32 1, %s8
  %s11 = scalar_select 0, %s10, %s8
  // Predicated region
  $region2: #{bahdanau_attention.1} parent=0 // pred_check
    _
  $region3: #{bahdanau_attention.1} parent=0 // pred_check_branch
    %13 = sbr.rel (0) target = $region5
  $region4: #{bahdanau_attention.1} parent=0 // pred_region
    _
  $region5: #{bahdanau_attention.1} parent=0 // pred_fallthru
    _
  // Predicated region
  $region6: #{bahdanau_attention.1} parent=0 // pred_check
    _
  $region7: #{bahdanau_attention.1} parent=0 // pred_check_branch
    %15 = sbr.rel (0) target = $region9
  $region8: #{bahdanau_attention.1} parent=0 // pred_region
    _
  $region9: #{bahdanau_attention.1} parent=0 // pred_fallthru
    _
  // Predicated region
  $region10: #{bahdanau_attention.1} parent=0 // pred_check
    _
  $region11: #{bahdanau_attention.1} parent=0 // pred_check_branch
    %17 = sbr.rel (0) target = $region13
  $region12: #{bahdanau_attention.1} parent=0 // pred_region
    _
  $region13: #{bahdanau_attention.1} parent=0 // pred_fallthru
    _
  // Predicated region
  $region14: #{bahdanau_attention.1} parent=0 // pred_check
    _
  $region15: #{bahdanau_attention.1} parent=0 // pred_check_branch
    %19 = sbr.rel (0) target = $region17
  $region16: #{bahdanau_attention.1} parent=0 // pred_region
    _
  $region17: #{bahdanau_attention.1} parent=0 // pred_fallthru
    _
  // Predicated region
  $region18: #{bahdanau_attention.1} parent=0 // pred_check
    _
  $region19: #{bahdanau_attention.1} parent=0 // pred_check_branch
    %21 = sbr.rel (0) target = $region21
  $region20: #{bahdanau_attention.1} parent=0 // pred_region
    _
  $region21: #{bahdanau_attention.1} parent=0 // pred_fallthru
    _
  %v22 = vld [vmem:[%s0] sm:$0xff]
  %v23 = vld [vmem:[%s0 + $0x8] sm:$0xff]
  %v24 = vld [vmem:[%s0 + $0x10] sm:$0xff]
  %v25 = vld [vmem:[%s0 + $0x18] sm:$0xff]
  %v26 = vld [vmem:[%s0 + $0x20] sm:$0xff]
  %v27 = vld [vmem:[%s0 + $0x28] sm:$0xff]
  %v28 = vld [vmem:[%s0 + $0x30] sm:$0xff]
  %v29 = vld [vmem:[%s0 + $0x38] sm:$0xff]
  %v30 = vld [vmem:[%s0 + $0x40] sm:$0xff]
  %v31 = vld [vmem:[%s0 + $0x48] sm:$0xff]
  %v32 = vld [vmem:[%s0 + $0x50] sm:$0xff]
  %v33 = vld [vmem:[%s0 + $0x58] sm:$0xff]
  %v34 = vld [vmem:[%s0 + $0x60] sm:$0xff]
  %v35 = vld [vmem:[%s0 + $0x68] sm:$0xff]
  %v36 = vld [vmem:[%s0 + $0x70] sm:$0xff]
  %v37 = vld [vmem:[%s0 + $0x78] sm:$0xff]
  %v38 = vld [vmem:[%s0 + $0x80] sm:$0xff]
  %v39 = vld [vmem:[%s0 + $0x88] sm:$0xff]
  %v40 = vld [vmem:[%s0 + $0x90] sm:$0xff]
  %v41 = vld [vmem:[%s0 + $0x98] sm:$0xff]
  %v42 = vld [vmem:[%s2] sm:$0xff]
  %v43 = vld [vmem:[%s2 + $0x8] sm:$0xff]
  %v44 = vld [vmem:[%s2 + $0x10] sm:$0xff]
  %v45 = vld [vmem:[%s2 + $0x18] sm:$0xff]
  %vm46 = vcmask 261120
  %v48 = vsel %vm46, %v22, 0
  %v51 = vsel %vm46, %v23, 0
  %v54 = vsel %vm46, %v24, 0
  %v57 = vsel %vm46, %v25, 0
  %v60 = vsel %vm46, %v26, 0
  %v63 = vsel %vm46, %v27, 0
  %v66 = vsel %vm46, %v28, 0
  %v69 = vsel %vm46, %v29, 0
  %v72 = vsel %vm46, %v30, 0
  %v75 = vsel %vm46, %v31, 0
  %v78 = vsel %vm46, %v32, 0
  %v81 = vsel %vm46, %v33, 0
  %v84 = vsel %vm46, %v34, 0
  %v87 = vsel %vm46, %v35, 0
  %v90 = vsel %vm46, %v36, 0
  %v93 = vsel %vm46, %v37, 0
  %v96 = vsel %vm46, %v38, 0
  %v99 = vsel %vm46, %v39, 0
  %v102 = vsel %vm46, %v40, 0
  %v105 = vsel %vm46, %v41, 0
  %107 = vmatprep.subr.mxu0 0.0
  %108 = vmatpush1.msra.mxu0 0.0
  %109 = vmatprep.subr.mxu0 0.0
  %110 = vmatpush1.msra.mxu0 0.0
  %111 = vmatprep.subr.mxu0 0.0
  %112 = vmatpush1.msra.mxu0 0.0
  %113 = vmatprep.subr.mxu0 0.0
  %114 = vmatpush1.msra.mxu0 0.0
  %115 = vmatprep.subr.mxu0 0.0
  %116 = vmatpush1.msra.mxu0 0.0
  %117 = vmatprep.subr.mxu0 0.0
  %118 = vmatpush1.msra.mxu0 0.0
  %119 = vmatprep.subr.mxu0 0.0
  %120 = vmatpush1.msra.mxu0 0.0
  %121 = vmatprep.subr.mxu0 0.0
  %122 = vmatpush1.msra.mxu0 0.0
  %123 = vmatprep.subr.mxu0 0.0
  %124 = vmatpush1.msra.mxu0 0.0
  %125 = vmatprep.subr.mxu0 0.0
  %126 = vmatpush1.msra.mxu0 0.0
  %127 = vmatprep.subr.mxu0 0.0
  %128 = vmatpush1.msra.mxu0 0.0
  %129 = vmatprep.subr.mxu0 0.0
  %130 = vmatpush1.msra.mxu0 0.0
  %131 = vmatprep.subr.mxu0 0.0
  %132 = vmatpush1.msra.mxu0 %v45
  %133 = vmatprep.subr.mxu0 0.0
  %134 = vmatpush1.msra.mxu0 %v44
  %135 = vmatprep.subr.mxu0 0.0
  %136 = vmatpush1.msra.mxu0 %v43
  %137 = vmatprep.subr.mxu0 0.0
  %138 = vmatpush1.msra.mxu0 %v42
  %139 = vmatprep.subr.mxu0 0.0
  %140 = vmatpush2.msra.mxu0 0.0
  %141 = vmatprep.subr.mxu0 0.0
  %142 = vmatpush2.msra.mxu0 0.0
  %143 = vmatprep.subr.mxu0 0.0
  %144 = vmatpush2.msra.mxu0 0.0
  %145 = vmatprep.subr.mxu0 0.0
  %146 = vmatpush2.msra.mxu0 0.0
  %147 = vmatprep.subr.mxu0 0.0
  %148 = vmatpush2.msra.mxu0 0.0
  %149 = vmatprep.subr.mxu0 0.0
  %150 = vmatpush2.msra.mxu0 0.0
  %151 = vmatprep.subr.mxu0 0.0
  %152 = vmatpush2.msra.mxu0 0.0
  %153 = vmatprep.subr.mxu0 0.0
  %154 = vmatpush2.msra.mxu0 0.0
  %155 = vmatprep.subr.mxu0 0.0
  %156 = vmatpush2.msra.mxu0 0.0
  %157 = vmatprep.subr.mxu0 0.0
  %158 = vmatpush2.msra.mxu0 0.0
  %159 = vmatprep.subr.mxu0 0.0
  %160 = vmatpush2.msra.mxu0 0.0
  %161 = vmatprep.subr.mxu0 0.0
  %162 = vmatpush2.msra.mxu0 0.0
  %163 = vmatprep.subr.mxu0 0.0
  %164 = vmatpush2.msra.mxu0 0.0
  %165 = vmatprep.subr.mxu0 0.0
  %166 = vmatpush2.msra.mxu0 0.0
  %167 = vmatprep.subr.mxu0 0.0
  %168 = vmatpush2.msra.mxu0 0.0
  %169 = vmatprep.subr.mxu0 0.0
  %170 = vmatpush2.msra.mxu0 0.0
  %171 = vmatprep.mubr.f32.mxu0 0.0
  %172 = vmatmul.mubr.f32.gmra.mxu0 %v48
  %v173 = vpop.f32.mrf.mxu0
  %v174 = vadd.f32 0.0, %v173
  %v175 = vpop.f32.mrf.mxu0
  %176 = vmatprep.mubr.f32.mxu0 0.0
  %177 = vmatmul.mubr.f32.gmra.mxu0 %v51
  %v178 = vpop.f32.mrf.mxu0
  %v179 = vadd.f32 0.0, %v178
  %v180 = vpop.f32.mrf.mxu0
  %181 = vmatprep.mubr.f32.mxu0 0.0
  %182 = vmatmul.mubr.f32.gmra.mxu0 %v54
  %v183 = vpop.f32.mrf.mxu0
  %v184 = vadd.f32 0.0, %v183
  %v185 = vpop.f32.mrf.mxu0
  %186 = vmatprep.mubr.f32.mxu0 0.0
  %187 = vmatmul.mubr.f32.gmra.mxu0 %v57
  %v188 = vpop.f32.mrf.mxu0
  %v189 = vadd.f32 0.0, %v188
  %v190 = vpop.f32.mrf.mxu0
  %191 = vmatprep.mubr.f32.mxu0 0.0
  %192 = vmatmul.mubr.f32.gmra.mxu0 %v60
  %v193 = vpop.f32.mrf.mxu0
  %v194 = vadd.f32 0.0, %v193
  %v195 = vpop.f32.mrf.mxu0
  %196 = vmatprep.mubr.f32.mxu0 0.0
  %197 = vmatmul.mubr.f32.gmra.mxu0 %v63
  %v198 = vpop.f32.mrf.mxu0
  %v199 = vadd.f32 0.0, %v198
  %v200 = vpop.f32.mrf.mxu0
  %201 = vmatprep.mubr.f32.mxu0 0.0
  %202 = vmatmul.mubr.f32.gmra.mxu0 %v66
  %v203 = vpop.f32.mrf.mxu0
  %v204 = vadd.f32 0.0, %v203
  %v205 = vpop.f32.mrf.mxu0
  %206 = vmatprep.mubr.f32.mxu0 0.0
  %207 = vmatmul.mubr.f32.gmra.mxu0 %v69
  %v208 = vpop.f32.mrf.mxu0
  %v209 = vadd.f32 0.0, %v208
  %v210 = vpop.f32.mrf.mxu0
  %211 = vmatprep.mubr.f32.mxu0 0.0
  %212 = vmatmul.mubr.f32.gmra.mxu0 %v72
  %v213 = vpop.f32.mrf.mxu0
  %v214 = vadd.f32 0.0, %v213
  %v215 = vpop.f32.mrf.mxu0
  %216 = vmatprep.mubr.f32.mxu0 0.0
  %217 = vmatmul.mubr.f32.gmra.mxu0 %v75
  %v218 = vpop.f32.mrf.mxu0
  %v219 = vadd.f32 0.0, %v218
  %v220 = vpop.f32.mrf.mxu0
  %221 = vmatprep.mubr.f32.mxu0 0.0
  %222 = vmatmul.mubr.f32.gmra.mxu0 %v78
  %v223 = vpop.f32.mrf.mxu0
  %v224 = vadd.f32 0.0, %v223
  %v225 = vpop.f32.mrf.mxu0
  %226 = vmatprep.mubr.f32.mxu0 0.0
  %227 = vmatmul.mubr.f32.gmra.mxu0 %v81
  %v228 = vpop.f32.mrf.mxu0
  %v229 = vadd.f32 0.0, %v228
  %v230 = vpop.f32.mrf.mxu0
  %231 = vmatprep.mubr.f32.mxu0 0.0
  %232 = vmatmul.mubr.f32.gmra.mxu0 %v84
  %v233 = vpop.f32.mrf.mxu0
  %v234 = vadd.f32 0.0, %v233
  %v235 = vpop.f32.mrf.mxu0
  %236 = vmatprep.mubr.f32.mxu0 0.0
  %237 = vmatmul.mubr.f32.gmra.mxu0 %v87
  %v238 = vpop.f32.mrf.mxu0
  %v239 = vadd.f32 0.0, %v238
  %v240 = vpop.f32.mrf.mxu0
  %241 = vmatprep.mubr.f32.mxu0 0.0
  %242 = vmatmul.mubr.f32.gmra.mxu0 %v90
  %v243 = vpop.f32.mrf.mxu0
  %v244 = vadd.f32 0.0, %v243
  %v245 = vpop.f32.mrf.mxu0
  %246 = vmatprep.mubr.f32.mxu0 0.0
  %247 = vmatmul.mubr.f32.gmra.mxu0 %v93
  %v248 = vpop.f32.mrf.mxu0
  %v249 = vadd.f32 0.0, %v248
  %v250 = vpop.f32.mrf.mxu0
  %251 = vmatprep.mubr.f32.mxu0 0.0
  %252 = vmatmul.mubr.f32.gmra.mxu0 %v96
  %v253 = vpop.f32.mrf.mxu0
  %v254 = vadd.f32 0.0, %v253
  %v255 = vpop.f32.mrf.mxu0
  %256 = vmatprep.mubr.f32.mxu0 0.0
  %257 = vmatmul.mubr.f32.gmra.mxu0 %v99
  %v258 = vpop.f32.mrf.mxu0
  %v259 = vadd.f32 0.0, %v258
  %v260 = vpop.f32.mrf.mxu0
  %261 = vmatprep.mubr.f32.mxu0 0.0
  %262 = vmatmul.mubr.f32.gmra.mxu0 %v102
  %v263 = vpop.f32.mrf.mxu0
  %v264 = vadd.f32 0.0, %v263
  %v265 = vpop.f32.mrf.mxu0
  %266 = vmatprep.mubr.f32.mxu0 0.0
  %267 = vmatmul.mubr.f32.gmra.mxu0 %v105
  %v268 = vpop.f32.mrf.mxu0
  %v269 = vadd.f32 0.0, %v268
  %v270 = vpop.f32.mrf.mxu0
  %271 = vdwg.mxu0
  %v272 = vld [vmem:[%s1] sm:$0xff]
  %v273 = vld [vmem:[%s1 + $0x8] sm:$0xff]
  %v274 = vld [vmem:[%s1 + $0x10] sm:$0xf]
  %v278 = vcombine.high %v272, %v272
  %v280 = vunpack.c.l.s4 1966171168
  %v281 = vunpack.c.0.s8 %v280
  %v282 = vlaneseq
  %v283 = vshrl.u32 %v282, 7
  %v284 = vsub.s32 %v281, %v283
  %v285 = vrot.slane %v272, %v284
  %v287 = vunpack.c.l.s4 1966171168
  %v288 = vunpack.c.0.s8 %v287
  %v289 = vlaneseq
  %v290 = vshrl.u32 %v289, 7
  %v291 = vsub.s32 %v288, %v290
  %v292 = vrot.slane %v278, %v291
  %v293 = vcombine.high %v285, %v285
  %v294 = vcombine.high %v292, %v292
  %v296 = vunpack.c.l.s4 1966171168
  %v297 = vunpack.c.0.s8 %v296
  %v298 = vlaneseq
  %v299 = vshrl.u32 %v298, 7
  %v300 = vsub.s32 %v297, %v299
  %v301 = vrot.slane %v285, %v300
  %v303 = vunpack.c.l.s4 1966171168
  %v304 = vunpack.c.0.s8 %v303
  %v305 = vlaneseq
  %v306 = vshrl.u32 %v305, 7
  %v307 = vsub.s32 %v304, %v306
  %v308 = vrot.slane %v292, %v307
  %v310 = vunpack.c.l.s4 1966171168
  %v311 = vunpack.c.0.s8 %v310
  %v312 = vlaneseq
  %v313 = vshrl.u32 %v312, 7
  %v314 = vsub.s32 %v311, %v313
  %v315 = vrot.slane %v293, %v314
  %v317 = vunpack.c.l.s4 1966171168
  %v318 = vunpack.c.0.s8 %v317
  %v319 = vlaneseq
  %v320 = vshrl.u32 %v319, 7
  %v321 = vsub.s32 %v318, %v320
  %v322 = vrot.slane %v294, %v321
  %v323 = vcombine.high %v301, %v301
  %v324 = vcombine.high %v308, %v308
  %v325 = vcombine.high %v315, %v315
  %v326 = vcombine.high %v322, %v322
  %v327 = vcombine.high %v273, %v273
  %v329 = vunpack.c.l.s4 1966171168
  %v330 = vunpack.c.0.s8 %v329
  %v331 = vlaneseq
  %v332 = vshrl.u32 %v331, 7
  %v333 = vsub.s32 %v330, %v332
  %v334 = vrot.slane %v273, %v333
  %v336 = vunpack.c.l.s4 1966171168
  %v337 = vunpack.c.0.s8 %v336
  %v338 = vlaneseq
  %v339 = vshrl.u32 %v338, 7
  %v340 = vsub.s32 %v337, %v339
  %v341 = vrot.slane %v327, %v340
  %v342 = vcombine.high %v334, %v334
  %v343 = vcombine.high %v341, %v341
  %v345 = vunpack.c.l.s4 1966171168
  %v346 = vunpack.c.0.s8 %v345
  %v347 = vlaneseq
  %v348 = vshrl.u32 %v347, 7
  %v349 = vsub.s32 %v346, %v348
  %v350 = vrot.slane %v334, %v349
  %v352 = vunpack.c.l.s4 1966171168
  %v353 = vunpack.c.0.s8 %v352
  %v354 = vlaneseq
  %v355 = vshrl.u32 %v354, 7
  %v356 = vsub.s32 %v353, %v355
  %v357 = vrot.slane %v341, %v356
  %v359 = vunpack.c.l.s4 1966171168
  %v360 = vunpack.c.0.s8 %v359
  %v361 = vlaneseq
  %v362 = vshrl.u32 %v361, 7
  %v363 = vsub.s32 %v360, %v362
  %v364 = vrot.slane %v342, %v363
  %v366 = vunpack.c.l.s4 1966171168
  %v367 = vunpack.c.0.s8 %v366
  %v368 = vlaneseq
  %v369 = vshrl.u32 %v368, 7
  %v370 = vsub.s32 %v367, %v369
  %v371 = vrot.slane %v343, %v370
  %v372 = vcombine.high %v350, %v350
  %v373 = vcombine.high %v357, %v357
  %v374 = vcombine.high %v364, %v364
  %v375 = vcombine.high %v371, %v371
  %v377 = vunpack.c.l.s4 1966171168
  %v378 = vunpack.c.0.s8 %v377
  %v379 = vlaneseq
  %v380 = vshrl.u32 %v379, 7
  %v381 = vsub.s32 %v378, %v380
  %v382 = vrot.slane %v274, %v381
  %v383 = vcombine.high %v382, %v382
  %v385 = vunpack.c.l.s4 1966171168
  %v386 = vunpack.c.0.s8 %v385
  %v387 = vlaneseq
  %v388 = vshrl.u32 %v387, 7
  %v389 = vsub.s32 %v386, %v388
  %v390 = vrot.slane %v382, %v389
  %v392 = vunpack.c.l.s4 1966171168
  %v393 = vunpack.c.0.s8 %v392
  %v394 = vlaneseq
  %v395 = vshrl.u32 %v394, 7
  %v396 = vsub.s32 %v393, %v395
  %v397 = vrot.slane %v383, %v396
  %v398 = vcombine.high %v390, %v390
  %v399 = vcombine.high %v397, %v397
  %v400 = vlaneseq
  %v401 = vshrl.u32 %v400, 7
  %v402 = vsub.s32 0, %v401
  %v403 = vrot.slane %v301, %v402
  %v404 = vlaneseq
  %v405 = vshrl.u32 %v404, 7
  %v406 = vsub.s32 0, %v405
  %v407 = vrot.slane %v315, %v406
  %v408 = vlaneseq
  %v409 = vshrl.u32 %v408, 7
  %v410 = vsub.s32 0, %v409
  %v411 = vrot.slane %v323, %v410
  %v412 = vlaneseq
  %v413 = vshrl.u32 %v412, 7
  %v414 = vsub.s32 0, %v413
  %v415 = vrot.slane %v325, %v414
  %v416 = vlaneseq
  %v417 = vshrl.u32 %v416, 7
  %v418 = vsub.s32 0, %v417
  %v419 = vrot.slane %v308, %v418
  %v420 = vlaneseq
  %v421 = vshrl.u32 %v420, 7
  %v422 = vsub.s32 0, %v421
  %v423 = vrot.slane %v322, %v422
  %v424 = vlaneseq
  %v425 = vshrl.u32 %v424, 7
  %v426 = vsub.s32 0, %v425
  %v427 = vrot.slane %v324, %v426
  %v428 = vlaneseq
  %v429 = vshrl.u32 %v428, 7
  %v430 = vsub.s32 0, %v429
  %v431 = vrot.slane %v326, %v430
  %v432 = vlaneseq
  %v433 = vshrl.u32 %v432, 7
  %v434 = vsub.s32 0, %v433
  %v435 = vrot.slane %v350, %v434
  %v436 = vlaneseq
  %v437 = vshrl.u32 %v436, 7
  %v438 = vsub.s32 0, %v437
  %v439 = vrot.slane %v364, %v438
  %v440 = vlaneseq
  %v441 = vshrl.u32 %v440, 7
  %v442 = vsub.s32 0, %v441
  %v443 = vrot.slane %v372, %v442
  %v444 = vlaneseq
  %v445 = vshrl.u32 %v444, 7
  %v446 = vsub.s32 0, %v445
  %v447 = vrot.slane %v374, %v446
  %v448 = vlaneseq
  %v449 = vshrl.u32 %v448, 7
  %v450 = vsub.s32 0, %v449
  %v451 = vrot.slane %v357, %v450
  %v452 = vlaneseq
  %v453 = vshrl.u32 %v452, 7
  %v454 = vsub.s32 0, %v453
  %v455 = vrot.slane %v371, %v454
  %v456 = vlaneseq
  %v457 = vshrl.u32 %v456, 7
  %v458 = vsub.s32 0, %v457
  %v459 = vrot.slane %v373, %v458
  %v460 = vlaneseq
  %v461 = vshrl.u32 %v460, 7
  %v462 = vsub.s32 0, %v461
  %v463 = vrot.slane %v375, %v462
  %v464 = vlaneseq
  %v465 = vshrl.u32 %v464, 7
  %v466 = vsub.s32 0, %v465
  %v467 = vrot.slane %v390, %v466
  %v468 = vlaneseq
  %v469 = vshrl.u32 %v468, 7
  %v470 = vsub.s32 0, %v469
  %v471 = vrot.slane %v397, %v470
  %v472 = vlaneseq
  %v473 = vshrl.u32 %v472, 7
  %v474 = vsub.s32 0, %v473
  %v475 = vrot.slane %v398, %v474
  %v476 = vlaneseq
  %v477 = vshrl.u32 %v476, 7
  %v478 = vsub.s32 0, %v477
  %v479 = vrot.slane %v399, %v478
  %v500 = vadd.f32 %v174, %v403
  %v501 = vadd.f32 %v179, %v407
  %v502 = vadd.f32 %v184, %v411
  %v503 = vadd.f32 %v189, %v415
  %v504 = vadd.f32 %v194, %v419
  %v505 = vadd.f32 %v199, %v423
  %v506 = vadd.f32 %v204, %v427
  %v507 = vadd.f32 %v209, %v431
  %v508 = vadd.f32 %v214, %v435
  %v509 = vadd.f32 %v219, %v439
  %v510 = vadd.f32 %v224, %v443
  %v511 = vadd.f32 %v229, %v447
  %v512 = vadd.f32 %v234, %v451
  %v513 = vadd.f32 %v239, %v455
  %v514 = vadd.f32 %v244, %v459
  %v515 = vadd.f32 %v249, %v463
  %v516 = vadd.f32 %v254, %v467
  %v517 = vadd.f32 %v259, %v471
  %v518 = vadd.f32 %v264, %v475
  %v519 = vadd.f32 %v269, %v479
  %v520 = vtanh.pop %v500
  %v521 = vtanh.pop %v501
  %v522 = vtanh.pop %v502
  %v523 = vtanh.pop %v503
  %v524 = vtanh.pop %v504
  %v525 = vtanh.pop %v505
  %v526 = vtanh.pop %v506
  %v527 = vtanh.pop %v507
  %v528 = vtanh.pop %v508
  %v529 = vtanh.pop %v509
  %v530 = vtanh.pop %v510
  %v531 = vtanh.pop %v511
  %v532 = vtanh.pop %v512
  %v533 = vtanh.pop %v513
  %v534 = vtanh.pop %v514
  %v535 = vtanh.pop %v515
  %v536 = vtanh.pop %v516
  %v537 = vtanh.pop %v517
  %v538 = vtanh.pop %v518
  %v539 = vtanh.pop %v519
  %v540 = vld [vmem:[%s3] sm:$0xff]
  %v541 = vld [vmem:[%s3 + $0x8] sm:$0xff]
  %v542 = vld [vmem:[%s3 + $0x10] sm:$0xff]
  %v543 = vld [vmem:[%s3 + $0x18] sm:$0xff]
  %v544 = vld [vmem:[%s4] sm:$0x1]
  %v546 = vlaneseq
  %v547 = vshrl.u32 %v546, 7
  %v548 = vsub.s32 0, %v547
  %v549 = vrot.slane %v544, %v548
  %v552 = vsel %vm46, %v520, 0
  %v555 = vsel %vm46, %v521, 0
  %v558 = vsel %vm46, %v522, 0
  %v561 = vsel %vm46, %v523, 0
  %v564 = vsel %vm46, %v524, 0
  %v567 = vsel %vm46, %v525, 0
  %v570 = vsel %vm46, %v526, 0
  %v573 = vsel %vm46, %v527, 0
  %v576 = vsel %vm46, %v528, 0
  %v579 = vsel %vm46, %v529, 0
  %v582 = vsel %vm46, %v530, 0
  %v585 = vsel %vm46, %v531, 0
  %v588 = vsel %vm46, %v532, 0
  %v591 = vsel %vm46, %v533, 0
  %v594 = vsel %vm46, %v534, 0
  %v597 = vsel %vm46, %v535, 0
  %v600 = vsel %vm46, %v536, 0
  %v603 = vsel %vm46, %v537, 0
  %v606 = vsel %vm46, %v538, 0
  %v609 = vsel %vm46, %v539, 0
  %611 = vmatprep.subr.mxu0 0.0
  %612 = vmatpush1.msra.mxu0 0.0
  %613 = vmatprep.subr.mxu0 0.0
  %614 = vmatpush1.msra.mxu0 0.0
  %615 = vmatprep.subr.mxu0 0.0
  %616 = vmatpush1.msra.mxu0 0.0
  %617 = vmatprep.subr.mxu0 0.0
  %618 = vmatpush1.msra.mxu0 0.0
  %619 = vmatprep.subr.mxu0 0.0
  %620 = vmatpush1.msra.mxu0 0.0
  %621 = vmatprep.subr.mxu0 0.0
  %622 = vmatpush1.msra.mxu0 0.0
  %623 = vmatprep.subr.mxu0 0.0
  %624 = vmatpush1.msra.mxu0 0.0
  %625 = vmatprep.subr.mxu0 0.0
  %626 = vmatpush1.msra.mxu0 0.0
  %627 = vmatprep.subr.mxu0 0.0
  %628 = vmatpush1.msra.mxu0 0.0
  %629 = vmatprep.subr.mxu0 0.0
  %630 = vmatpush1.msra.mxu0 0.0
  %631 = vmatprep.subr.mxu0 0.0
  %632 = vmatpush1.msra.mxu0 0.0
  %633 = vmatprep.subr.mxu0 0.0
  %634 = vmatpush1.msra.mxu0 0.0
  %635 = vmatprep.subr.mxu0 0.0
  %636 = vmatpush1.msra.mxu0 %v543
  %637 = vmatprep.subr.mxu0 0.0
  %638 = vmatpush1.msra.mxu0 %v542
  %639 = vmatprep.subr.mxu0 0.0
  %640 = vmatpush1.msra.mxu0 %v541
  %641 = vmatprep.subr.mxu0 0.0
  %642 = vmatpush1.msra.mxu0 %v540
  %643 = vmatprep.subr.mxu0 0.0
  %644 = vmatpush2.msra.mxu0 0.0
  %645 = vmatprep.subr.mxu0 0.0
  %646 = vmatpush2.msra.mxu0 0.0
  %647 = vmatprep.subr.mxu0 0.0
  %648 = vmatpush2.msra.mxu0 0.0
  %649 = vmatprep.subr.mxu0 0.0
  %650 = vmatpush2.msra.mxu0 0.0
  %651 = vmatprep.subr.mxu0 0.0
  %652 = vmatpush2.msra.mxu0 0.0
  %653 = vmatprep.subr.mxu0 0.0
  %654 = vmatpush2.msra.mxu0 0.0
  %655 = vmatprep.subr.mxu0 0.0
  %656 = vmatpush2.msra.mxu0 0.0
  %657 = vmatprep.subr.mxu0 0.0
  %658 = vmatpush2.msra.mxu0 0.0
  %659 = vmatprep.subr.mxu0 0.0
  %660 = vmatpush2.msra.mxu0 0.0
  %661 = vmatprep.subr.mxu0 0.0
  %662 = vmatpush2.msra.mxu0 0.0
  %663 = vmatprep.subr.mxu0 0.0
  %664 = vmatpush2.msra.mxu0 0.0
  %665 = vmatprep.subr.mxu0 0.0
  %666 = vmatpush2.msra.mxu0 0.0
  %667 = vmatprep.subr.mxu0 0.0
  %668 = vmatpush2.msra.mxu0 0.0
  %669 = vmatprep.subr.mxu0 0.0
  %670 = vmatpush2.msra.mxu0 0.0
  %671 = vmatprep.subr.mxu0 0.0
  %672 = vmatpush2.msra.mxu0 0.0
  %673 = vmatprep.subr.mxu0 0.0
  %674 = vmatpush2.msra.mxu0 0.0
  %675 = vmatprep.mubr.f32.mxu0 0.0
  %676 = vmatmul.mubr.f32.gmra.mxu0 %v552
  %v677 = vpop.f32.mrf.mxu0
  %v678 = vadd.f32 %v549, %v677
  %v679 = vpop.f32.mrf.mxu0
  %680 = vmatprep.mubr.f32.mxu0 0.0
  %681 = vmatmul.mubr.f32.gmra.mxu0 %v555
  %v682 = vpop.f32.mrf.mxu0
  %v683 = vadd.f32 %v549, %v682
  %v684 = vpop.f32.mrf.mxu0
  %685 = vmatprep.mubr.f32.mxu0 0.0
  %686 = vmatmul.mubr.f32.gmra.mxu0 %v558
  %v687 = vpop.f32.mrf.mxu0
  %v688 = vadd.f32 %v549, %v687
  %v689 = vpop.f32.mrf.mxu0
  %690 = vmatprep.mubr.f32.mxu0 0.0
  %691 = vmatmul.mubr.f32.gmra.mxu0 %v561
  %v692 = vpop.f32.mrf.mxu0
  %v693 = vadd.f32 %v549, %v692
  %v694 = vpop.f32.mrf.mxu0
  %695 = vmatprep.mubr.f32.mxu0 0.0
  %696 = vmatmul.mubr.f32.gmra.mxu0 %v564
  %v697 = vpop.f32.mrf.mxu0
  %v698 = vadd.f32 %v549, %v697
  %v699 = vpop.f32.mrf.mxu0
  %700 = vmatprep.mubr.f32.mxu0 0.0
  %701 = vmatmul.mubr.f32.gmra.mxu0 %v567
  %v702 = vpop.f32.mrf.mxu0
  %v703 = vadd.f32 %v549, %v702
  %v704 = vpop.f32.mrf.mxu0
  %705 = vmatprep.mubr.f32.mxu0 0.0
  %706 = vmatmul.mubr.f32.gmra.mxu0 %v570
  %v707 = vpop.f32.mrf.mxu0
  %v708 = vadd.f32 %v549, %v707
  %v709 = vpop.f32.mrf.mxu0
  %710 = vmatprep.mubr.f32.mxu0 0.0
  %711 = vmatmul.mubr.f32.gmra.mxu0 %v573
  %v712 = vpop.f32.mrf.mxu0
  %v713 = vadd.f32 %v549, %v712
  %v714 = vpop.f32.mrf.mxu0
  %715 = vmatprep.mubr.f32.mxu0 0.0
  %716 = vmatmul.mubr.f32.gmra.mxu0 %v576
  %v717 = vpop.f32.mrf.mxu0
  %v718 = vadd.f32 %v549, %v717
  %v719 = vpop.f32.mrf.mxu0
  %720 = vmatprep.mubr.f32.mxu0 0.0
  %721 = vmatmul.mubr.f32.gmra.mxu0 %v579
  %v722 = vpop.f32.mrf.mxu0
  %v723 = vadd.f32 %v549, %v722
  %v724 = vpop.f32.mrf.mxu0
  %725 = vmatprep.mubr.f32.mxu0 0.0
  %726 = vmatmul.mubr.f32.gmra.mxu0 %v582
  %v727 = vpop.f32.mrf.mxu0
  %v728 = vadd.f32 %v549, %v727
  %v729 = vpop.f32.mrf.mxu0
  %730 = vmatprep.mubr.f32.mxu0 0.0
  %731 = vmatmul.mubr.f32.gmra.mxu0 %v585
  %v732 = vpop.f32.mrf.mxu0
  %v733 = vadd.f32 %v549, %v732
  %v734 = vpop.f32.mrf.mxu0
  %735 = vmatprep.mubr.f32.mxu0 0.0
  %736 = vmatmul.mubr.f32.gmra.mxu0 %v588
  %v737 = vpop.f32.mrf.mxu0
  %v738 = vadd.f32 %v549, %v737
  %v739 = vpop.f32.mrf.mxu0
  %740 = vmatprep.mubr.f32.mxu0 0.0
  %741 = vmatmul.mubr.f32.gmra.mxu0 %v591
  %v742 = vpop.f32.mrf.mxu0
  %v743 = vadd.f32 %v549, %v742
  %v744 = vpop.f32.mrf.mxu0
  %745 = vmatprep.mubr.f32.mxu0 0.0
  %746 = vmatmul.mubr.f32.gmra.mxu0 %v594
  %v747 = vpop.f32.mrf.mxu0
  %v748 = vadd.f32 %v549, %v747
  %v749 = vpop.f32.mrf.mxu0
  %750 = vmatprep.mubr.f32.mxu0 0.0
  %751 = vmatmul.mubr.f32.gmra.mxu0 %v597
  %v752 = vpop.f32.mrf.mxu0
  %v753 = vadd.f32 %v549, %v752
  %v754 = vpop.f32.mrf.mxu0
  %755 = vmatprep.mubr.f32.mxu0 0.0
  %756 = vmatmul.mubr.f32.gmra.mxu0 %v600
  %v757 = vpop.f32.mrf.mxu0
  %v758 = vadd.f32 %v549, %v757
  %v759 = vpop.f32.mrf.mxu0
  %760 = vmatprep.mubr.f32.mxu0 0.0
  %761 = vmatmul.mubr.f32.gmra.mxu0 %v603
  %v762 = vpop.f32.mrf.mxu0
  %v763 = vadd.f32 %v549, %v762
  %v764 = vpop.f32.mrf.mxu0
  %765 = vmatprep.mubr.f32.mxu0 0.0
  %766 = vmatmul.mubr.f32.gmra.mxu0 %v606
  %v767 = vpop.f32.mrf.mxu0
  %v768 = vadd.f32 %v549, %v767
  %v769 = vpop.f32.mrf.mxu0
  %770 = vmatprep.mubr.f32.mxu0 0.0
  %771 = vmatmul.mubr.f32.gmra.mxu0 %v609
  %v772 = vpop.f32.mrf.mxu0
  %v773 = vadd.f32 %v549, %v772
  %v774 = vpop.f32.mrf.mxu0
  %775 = vdwg.mxu0
  %vm776 = vcmask 64512
  %v777 = vsel %vm776, %v678, -inf
  %v778 = vrot.slane %v777, 4
  %v779 = vmax.f32 %v777, %v778
  %v780 = vrot.slane %v779, 2
  %v781 = vmax.f32 %v779, %v780
  %v782 = vrot.slane %v781, 1
  %v783 = vmax.f32 %v781, %v782
  %v784 = vsel %vm776, %v683, -inf
  %v785 = vrot.slane %v784, 4
  %v786 = vmax.f32 %v784, %v785
  %v787 = vrot.slane %v786, 2
  %v788 = vmax.f32 %v786, %v787
  %v789 = vrot.slane %v788, 1
  %v790 = vmax.f32 %v788, %v789
  %v791 = vsel %vm776, %v688, -inf
  %v792 = vrot.slane %v791, 4
  %v793 = vmax.f32 %v791, %v792
  %v794 = vrot.slane %v793, 2
  %v795 = vmax.f32 %v793, %v794
  %v796 = vrot.slane %v795, 1
  %v797 = vmax.f32 %v795, %v796
  %v798 = vsel %vm776, %v693, -inf
  %v799 = vrot.slane %v798, 4
  %v800 = vmax.f32 %v798, %v799
  %v801 = vrot.slane %v800, 2
  %v802 = vmax.f32 %v800, %v801
  %v803 = vrot.slane %v802, 1
  %v804 = vmax.f32 %v802, %v803
  %v805 = vsel %vm776, %v698, -inf
  %v806 = vrot.slane %v805, 4
  %v807 = vmax.f32 %v805, %v806
  %v808 = vrot.slane %v807, 2
  %v809 = vmax.f32 %v807, %v808
  %v810 = vrot.slane %v809, 1
  %v811 = vmax.f32 %v809, %v810
  %v812 = vsel %vm776, %v703, -inf
  %v813 = vrot.slane %v812, 4
  %v814 = vmax.f32 %v812, %v813
  %v815 = vrot.slane %v814, 2
  %v816 = vmax.f32 %v814, %v815
  %v817 = vrot.slane %v816, 1
  %v818 = vmax.f32 %v816, %v817
  %v819 = vsel %vm776, %v708, -inf
  %v820 = vrot.slane %v819, 4
  %v821 = vmax.f32 %v819, %v820
  %v822 = vrot.slane %v821, 2
  %v823 = vmax.f32 %v821, %v822
  %v824 = vrot.slane %v823, 1
  %v825 = vmax.f32 %v823, %v824
  %v826 = vsel %vm776, %v713, -inf
  %v827 = vrot.slane %v826, 4
  %v828 = vmax.f32 %v826, %v827
  %v829 = vrot.slane %v828, 2
  %v830 = vmax.f32 %v828, %v829
  %v831 = vrot.slane %v830, 1
  %v832 = vmax.f32 %v830, %v831
  %v833 = vsel %vm776, %v718, -inf
  %v834 = vrot.slane %v833, 4
  %v835 = vmax.f32 %v833, %v834
  %v836 = vrot.slane %v835, 2
  %v837 = vmax.f32 %v835, %v836
  %v838 = vrot.slane %v837, 1
  %v839 = vmax.f32 %v837, %v838
  %v840 = vsel %vm776, %v723, -inf
  %v841 = vrot.slane %v840, 4
  %v842 = vmax.f32 %v840, %v841
  %v843 = vrot.slane %v842, 2
  %v844 = vmax.f32 %v842, %v843
  %v845 = vrot.slane %v844, 1
  %v846 = vmax.f32 %v844, %v845
  %v847 = vsel %vm776, %v728, -inf
  %v848 = vrot.slane %v847, 4
  %v849 = vmax.f32 %v847, %v848
  %v850 = vrot.slane %v849, 2
  %v851 = vmax.f32 %v849, %v850
  %v852 = vrot.slane %v851, 1
  %v853 = vmax.f32 %v851, %v852
  %v854 = vsel %vm776, %v733, -inf
  %v855 = vrot.slane %v854, 4
  %v856 = vmax.f32 %v854, %v855
  %v857 = vrot.slane %v856, 2
  %v858 = vmax.f32 %v856, %v857
  %v859 = vrot.slane %v858, 1
  %v860 = vmax.f32 %v858, %v859
  %v861 = vsel %vm776, %v738, -inf
  %v862 = vrot.slane %v861, 4
  %v863 = vmax.f32 %v861, %v862
  %v864 = vrot.slane %v863, 2
  %v865 = vmax.f32 %v863, %v864
  %v866 = vrot.slane %v865, 1
  %v867 = vmax.f32 %v865, %v866
  %v868 = vsel %vm776, %v743, -inf
  %v869 = vrot.slane %v868, 4
  %v870 = vmax.f32 %v868, %v869
  %v871 = vrot.slane %v870, 2
  %v872 = vmax.f32 %v870, %v871
  %v873 = vrot.slane %v872, 1
  %v874 = vmax.f32 %v872, %v873
  %v875 = vsel %vm776, %v748, -inf
  %v876 = vrot.slane %v875, 4
  %v877 = vmax.f32 %v875, %v876
  %v878 = vrot.slane %v877, 2
  %v879 = vmax.f32 %v877, %v878
  %v880 = vrot.slane %v879, 1
  %v881 = vmax.f32 %v879, %v880
  %v882 = vsel %vm776, %v753, -inf
  %v883 = vrot.slane %v882, 4
  %v884 = vmax.f32 %v882, %v883
  %v885 = vrot.slane %v884, 2
  %v886 = vmax.f32 %v884, %v885
  %v887 = vrot.slane %v886, 1
  %v888 = vmax.f32 %v886, %v887
  %v889 = vsel %vm776, %v758, -inf
  %v890 = vrot.slane %v889, 4
  %v891 = vmax.f32 %v889, %v890
  %v892 = vrot.slane %v891, 2
  %v893 = vmax.f32 %v891, %v892
  %v894 = vrot.slane %v893, 1
  %v895 = vmax.f32 %v893, %v894
  %v896 = vsel %vm776, %v763, -inf
  %v897 = vrot.slane %v896, 4
  %v898 = vmax.f32 %v896, %v897
  %v899 = vrot.slane %v898, 2
  %v900 = vmax.f32 %v898, %v899
  %v901 = vrot.slane %v900, 1
  %v902 = vmax.f32 %v900, %v901
  %v903 = vsel %vm776, %v768, -inf
  %v904 = vrot.slane %v903, 4
  %v905 = vmax.f32 %v903, %v904
  %v906 = vrot.slane %v905, 2
  %v907 = vmax.f32 %v905, %v906
  %v908 = vrot.slane %v907, 1
  %v909 = vmax.f32 %v907, %v908
  %v910 = vsel %vm776, %v773, -inf
  %v911 = vrot.slane %v910, 4
  %v912 = vmax.f32 %v910, %v911
  %v913 = vrot.slane %v912, 2
  %v914 = vmax.f32 %v912, %v913
  %v915 = vrot.slane %v914, 1
  %v916 = vmax.f32 %v914, %v915
  %v917 = vsub.f32 %v678, %v783
  %v918 = vsub.f32 %v683, %v790
  %v919 = vsub.f32 %v688, %v797
  %v920 = vsub.f32 %v693, %v804
  %v921 = vsub.f32 %v698, %v811
  %v922 = vsub.f32 %v703, %v818
  %v923 = vsub.f32 %v708, %v825
  %v924 = vsub.f32 %v713, %v832
  %v925 = vsub.f32 %v718, %v839
  %v926 = vsub.f32 %v723, %v846
  %v927 = vsub.f32 %v728, %v853
  %v928 = vsub.f32 %v733, %v860
  %v929 = vsub.f32 %v738, %v867
  %v930 = vsub.f32 %v743, %v874
  %v931 = vsub.f32 %v748, %v881
  %v932 = vsub.f32 %v753, %v888
  %v933 = vsub.f32 %v758, %v895
  %v934 = vsub.f32 %v763, %v902
  %v935 = vsub.f32 %v768, %v909
  %v936 = vsub.f32 %v773, %v916
  %v937 = vmul.f32 %v917, 1.442695
  %v938 = vpow.pop %v937
  %v939 = vmul.f32 %v918, 1.442695
  %v940 = vpow.pop %v939
  %v941 = vmul.f32 %v919, 1.442695
  %v942 = vpow.pop %v941
  %v943 = vmul.f32 %v920, 1.442695
  %v944 = vpow.pop %v943
  %v945 = vmul.f32 %v921, 1.442695
  %v946 = vpow.pop %v945
  %v947 = vmul.f32 %v922, 1.442695
  %v948 = vpow.pop %v947
  %v949 = vmul.f32 %v923, 1.442695
  %v950 = vpow.pop %v949
  %v951 = vmul.f32 %v924, 1.442695
  %v952 = vpow.pop %v951
  %v953 = vmul.f32 %v925, 1.442695
  %v954 = vpow.pop %v953
  %v955 = vmul.f32 %v926, 1.442695
  %v956 = vpow.pop %v955
  %v957 = vmul.f32 %v927, 1.442695
  %v958 = vpow.pop %v957
  %v959 = vmul.f32 %v928, 1.442695
  %v960 = vpow.pop %v959
  %v961 = vmul.f32 %v929, 1.442695
  %v962 = vpow.pop %v961
  %v963 = vmul.f32 %v930, 1.442695
  %v964 = vpow.pop %v963
  %v965 = vmul.f32 %v931, 1.442695
  %v966 = vpow.pop %v965
  %v967 = vmul.f32 %v932, 1.442695
  %v968 = vpow.pop %v967
  %v969 = vmul.f32 %v933, 1.442695
  %v970 = vpow.pop %v969
  %v971 = vmul.f32 %v934, 1.442695
  %v972 = vpow.pop %v971
  %v973 = vmul.f32 %v935, 1.442695
  %v974 = vpow.pop %v973
  %v975 = vmul.f32 %v936, 1.442695
  %v976 = vpow.pop %v975
  %v977 = vsel %vm776, %v938, 0.0
  %v978 = vrot.slane %v977, 4
  %v979 = vadd.f32 %v977, %v978
  %v980 = vrot.slane %v979, 2
  %v981 = vadd.f32 %v979, %v980
  %v982 = vrot.slane %v981, 1
  %v983 = vadd.f32 %v981, %v982
  %v984 = vsel %vm776, %v940, 0.0
  %v985 = vrot.slane %v984, 4
  %v986 = vadd.f32 %v984, %v985
  %v987 = vrot.slane %v986, 2
  %v988 = vadd.f32 %v986, %v987
  %v989 = vrot.slane %v988, 1
  %v990 = vadd.f32 %v988, %v989
  %v991 = vsel %vm776, %v942, 0.0
  %v992 = vrot.slane %v991, 4
  %v993 = vadd.f32 %v991, %v992
  %v994 = vrot.slane %v993, 2
  %v995 = vadd.f32 %v993, %v994
  %v996 = vrot.slane %v995, 1
  %v997 = vadd.f32 %v995, %v996
  %v998 = vsel %vm776, %v944, 0.0
  %v999 = vrot.slane %v998, 4
  %v1000 = vadd.f32 %v998, %v999
  %v1001 = vrot.slane %v1000, 2
  %v1002 = vadd.f32 %v1000, %v1001
  %v1003 = vrot.slane %v1002, 1
  %v1004 = vadd.f32 %v1002, %v1003
  %v1005 = vsel %vm776, %v946, 0.0
  %v1006 = vrot.slane %v1005, 4
  %v1007 = vadd.f32 %v1005, %v1006
  %v1008 = vrot.slane %v1007, 2
  %v1009 = vadd.f32 %v1007, %v1008
  %v1010 = vrot.slane %v1009, 1
  %v1011 = vadd.f32 %v1009, %v1010
  %v1012 = vsel %vm776, %v948, 0.0
  %v1013 = vrot.slane %v1012, 4
  %v1014 = vadd.f32 %v1012, %v1013
  %v1015 = vrot.slane %v1014, 2
  %v1016 = vadd.f32 %v1014, %v1015
  %v1017 = vrot.slane %v1016, 1
  %v1018 = vadd.f32 %v1016, %v1017
  %v1019 = vsel %vm776, %v950, 0.0
  %v1020 = vrot.slane %v1019, 4
  %v1021 = vadd.f32 %v1019, %v1020
  %v1022 = vrot.slane %v1021, 2
  %v1023 = vadd.f32 %v1021, %v1022
  %v1024 = vrot.slane %v1023, 1
  %v1025 = vadd.f32 %v1023, %v1024
  %v1026 = vsel %vm776, %v952, 0.0
  %v1027 = vrot.slane %v1026, 4
  %v1028 = vadd.f32 %v1026, %v1027
  %v1029 = vrot.slane %v1028, 2
  %v1030 = vadd.f32 %v1028, %v1029
  %v1031 = vrot.slane %v1030, 1
  %v1032 = vadd.f32 %v1030, %v1031
  %v1033 = vsel %vm776, %v954, 0.0
  %v1034 = vrot.slane %v1033, 4
  %v1035 = vadd.f32 %v1033, %v1034
  %v1036 = vrot.slane %v1035, 2
  %v1037 = vadd.f32 %v1035, %v1036
  %v1038 = vrot.slane %v1037, 1
  %v1039 = vadd.f32 %v1037, %v1038
  %v1040 = vsel %vm776, %v956, 0.0
  %v1041 = vrot.slane %v1040, 4
  %v1042 = vadd.f32 %v1040, %v1041
  %v1043 = vrot.slane %v1042, 2
  %v1044 = vadd.f32 %v1042, %v1043
  %v1045 = vrot.slane %v1044, 1
  %v1046 = vadd.f32 %v1044, %v1045
  %v1047 = vsel %vm776, %v958, 0.0
  %v1048 = vrot.slane %v1047, 4
  %v1049 = vadd.f32 %v1047, %v1048
  %v1050 = vrot.slane %v1049, 2
  %v1051 = vadd.f32 %v1049, %v1050
  %v1052 = vrot.slane %v1051, 1
  %v1053 = vadd.f32 %v1051, %v1052
  %v1054 = vsel %vm776, %v960, 0.0
  %v1055 = vrot.slane %v1054, 4
  %v1056 = vadd.f32 %v1054, %v1055
  %v1057 = vrot.slane %v1056, 2
  %v1058 = vadd.f32 %v1056, %v1057
  %v1059 = vrot.slane %v1058, 1
  %v1060 = vadd.f32 %v1058, %v1059
  %v1061 = vsel %vm776, %v962, 0.0
  %v1062 = vrot.slane %v1061, 4
  %v1063 = vadd.f32 %v1061, %v1062
  %v1064 = vrot.slane %v1063, 2
  %v1065 = vadd.f32 %v1063, %v1064
  %v1066 = vrot.slane %v1065, 1
  %v1067 = vadd.f32 %v1065, %v1066
  %v1068 = vsel %vm776, %v964, 0.0
  %v1069 = vrot.slane %v1068, 4
  %v1070 = vadd.f32 %v1068, %v1069
  %v1071 = vrot.slane %v1070, 2
  %v1072 = vadd.f32 %v1070, %v1071
  %v1073 = vrot.slane %v1072, 1
  %v1074 = vadd.f32 %v1072, %v1073
  %v1075 = vsel %vm776, %v966, 0.0
  %v1076 = vrot.slane %v1075, 4
  %v1077 = vadd.f32 %v1075, %v1076
  %v1078 = vrot.slane %v1077, 2
  %v1079 = vadd.f32 %v1077, %v1078
  %v1080 = vrot.slane %v1079, 1
  %v1081 = vadd.f32 %v1079, %v1080
  %v1082 = vsel %vm776, %v968, 0.0
  %v1083 = vrot.slane %v1082, 4
  %v1084 = vadd.f32 %v1082, %v1083
  %v1085 = vrot.slane %v1084, 2
  %v1086 = vadd.f32 %v1084, %v1085
  %v1087 = vrot.slane %v1086, 1
  %v1088 = vadd.f32 %v1086, %v1087
  %v1089 = vsel %vm776, %v970, 0.0
  %v1090 = vrot.slane %v1089, 4
  %v1091 = vadd.f32 %v1089, %v1090
  %v1092 = vrot.slane %v1091, 2
  %v1093 = vadd.f32 %v1091, %v1092
  %v1094 = vrot.slane %v1093, 1
  %v1095 = vadd.f32 %v1093, %v1094
  %v1096 = vsel %vm776, %v972, 0.0
  %v1097 = vrot.slane %v1096, 4
  %v1098 = vadd.f32 %v1096, %v1097
  %v1099 = vrot.slane %v1098, 2
  %v1100 = vadd.f32 %v1098, %v1099
  %v1101 = vrot.slane %v1100, 1
  %v1102 = vadd.f32 %v1100, %v1101
  %v1103 = vsel %vm776, %v974, 0.0
  %v1104 = vrot.slane %v1103, 4
  %v1105 = vadd.f32 %v1103, %v1104
  %v1106 = vrot.slane %v1105, 2
  %v1107 = vadd.f32 %v1105, %v1106
  %v1108 = vrot.slane %v1107, 1
  %v1109 = vadd.f32 %v1107, %v1108
  %v1110 = vsel %vm776, %v976, 0.0
  %v1111 = vrot.slane %v1110, 4
  %v1112 = vadd.f32 %v1110, %v1111
  %v1113 = vrot.slane %v1112, 2
  %v1114 = vadd.f32 %v1112, %v1113
  %v1115 = vrot.slane %v1114, 1
  %v1116 = vadd.f32 %v1114, %v1115
  %v1117 = vrcp.pop %v983
  %v1118 = vrcp.pop %v990
  %v1119 = vrcp.pop %v997
  %v1120 = vrcp.pop %v1004
  %v1121 = vrcp.pop %v1011
  %v1122 = vrcp.pop %v1018
  %v1123 = vrcp.pop %v1025
  %v1124 = vrcp.pop %v1032
  %v1125 = vrcp.pop %v1039
  %v1126 = vrcp.pop %v1046
  %v1127 = vrcp.pop %v1053
  %v1128 = vrcp.pop %v1060
  %v1129 = vrcp.pop %v1067
  %v1130 = vrcp.pop %v1074
  %v1131 = vrcp.pop %v1081
  %v1132 = vrcp.pop %v1088
  %v1133 = vrcp.pop %v1095
  %v1134 = vrcp.pop %v1102
  %v1135 = vrcp.pop %v1109
  %v1136 = vrcp.pop %v1116
  %v1137 = vmul.f32 %v938, %v1117
  %v1138 = vmul.f32 %v940, %v1118
  %v1139 = vmul.f32 %v942, %v1119
  %v1140 = vmul.f32 %v944, %v1120
  %v1141 = vmul.f32 %v946, %v1121
  %v1142 = vmul.f32 %v948, %v1122
  %v1143 = vmul.f32 %v950, %v1123
  %v1144 = vmul.f32 %v952, %v1124
  %v1145 = vmul.f32 %v954, %v1125
  %v1146 = vmul.f32 %v956, %v1126
  %v1147 = vmul.f32 %v958, %v1127
  %v1148 = vmul.f32 %v960, %v1128
  %v1149 = vmul.f32 %v962, %v1129
  %v1150 = vmul.f32 %v964, %v1130
  %v1151 = vmul.f32 %v966, %v1131
  %v1152 = vmul.f32 %v968, %v1132
  %v1153 = vmul.f32 %v970, %v1133
  %v1154 = vmul.f32 %v972, %v1134
  %v1155 = vmul.f32 %v974, %v1135
  %v1156 = vmul.f32 %v976, %v1136
  %1157 = vst.msk [vmem:[%s6] sm:$0xff] %vm776, %v1137
  %1158 = vst.msk [vmem:[%s6 + $0x8] sm:$0xff] %vm776, %v1138
  %1159 = vst.msk [vmem:[%s6 + $0x10] sm:$0xff] %vm776, %v1139
  %1160 = vst.msk [vmem:[%s6 + $0x18] sm:$0xff] %vm776, %v1140
  %1161 = vst.msk [vmem:[%s6 + $0x20] sm:$0xff] %vm776, %v1141
  %1162 = vst.msk [vmem:[%s6 + $0x28] sm:$0xff] %vm776, %v1142
  %1163 = vst.msk [vmem:[%s6 + $0x30] sm:$0xff] %vm776, %v1143
  %1164 = vst.msk [vmem:[%s6 + $0x38] sm:$0xff] %vm776, %v1144
  %1165 = vst.msk [vmem:[%s6 + $0x40] sm:$0xff] %vm776, %v1145
  %1166 = vst.msk [vmem:[%s6 + $0x48] sm:$0xff] %vm776, %v1146
  %1167 = vst.msk [vmem:[%s6 + $0x50] sm:$0xff] %vm776, %v1147
  %1168 = vst.msk [vmem:[%s6 + $0x58] sm:$0xff] %vm776, %v1148
  %1169 = vst.msk [vmem:[%s6 + $0x60] sm:$0xff] %vm776, %v1149
  %1170 = vst.msk [vmem:[%s6 + $0x68] sm:$0xff] %vm776, %v1150
  %1171 = vst.msk [vmem:[%s6 + $0x70] sm:$0xff] %vm776, %v1151
  %1172 = vst.msk [vmem:[%s6 + $0x78] sm:$0xff] %vm776, %v1152
  %1173 = vst.msk [vmem:[%s6 + $0x80] sm:$0xff] %vm776, %v1153
  %1174 = vst.msk [vmem:[%s6 + $0x88] sm:$0xff] %vm776, %v1154
  %1175 = vst.msk [vmem:[%s6 + $0x90] sm:$0xff] %vm776, %v1155
  %1176 = vst.msk [vmem:[%s6 + $0x98] sm:$0xff] %vm776, %v1156
  %1177 = vxpose.xlu0.b32.start [1/16] %v1137, 128
  %1178 = vxpose.xlu0.b32.cont [2/16] 0.0, 128
  %1179 = vxpose.xlu0.b32.cont [3/16] 0.0, 128
  %1180 = vxpose.xlu0.b32.cont [4/16] 0.0, 128
  %1181 = vxpose.xlu0.b32.cont [5/16] 0.0, 128
  %1182 = vxpose.xlu0.b32.cont [6/16] 0.0, 128
  %1183 = vxpose.xlu0.b32.cont [7/16] 0.0, 128
  %1184 = vxpose.xlu0.b32.cont [8/16] 0.0, 128
  %1185 = vxpose.xlu0.b32.cont [9/16] 0.0, 128
  %1186 = vxpose.xlu0.b32.cont [10/16] 0.0, 128
  %1187 = vxpose.xlu0.b32.cont [11/16] 0.0, 128
  %1188 = vxpose.xlu0.b32.cont [12/16] 0.0, 128
  %1189 = vxpose.xlu0.b32.cont [13/16] 0.0, 128
  %1190 = vxpose.xlu0.b32.cont [14/16] 0.0, 128
  %1191 = vxpose.xlu0.b32.cont [15/16] 0.0, 128
  %1192 = vxpose.xlu0.b32.end [16/16] 0.0, 128
  %v1193 = vpop.trf.xlu0
  %v1194 = vpop.trf.xlu0
  %v1195 = vpop.trf.xlu0
  %v1196 = vpop.trf.xlu0
  %v1197 = vpop.trf.xlu0
  %v1198 = vpop.trf.xlu0
  %v1199 = vpop.trf.xlu0
  %v1200 = vpop.trf.xlu0
  %v1201 = vpop.trf.xlu0
  %v1202 = vpop.trf.xlu0
  %v1203 = vpop.trf.xlu0
  %v1204 = vpop.trf.xlu0
  %v1205 = vpop.trf.xlu0
  %v1206 = vpop.trf.xlu0
  %v1207 = vpop.trf.xlu0
  %v1208 = vpop.trf.xlu0
  %v1210 = vsel %vm776, %v1193, 0
  %1212 = vmatprep.subr.mxu0 0.0
  %1213 = vmatpush1.msra.mxu0 0.0
  %1214 = vmatprep.subr.mxu0 0.0
  %1215 = vmatpush1.msra.mxu0 0.0
  %1216 = vmatprep.subr.mxu0 0.0
  %1217 = vmatpush1.msra.mxu0 0.0
  %1218 = vmatprep.subr.mxu0 0.0
  %1219 = vmatpush1.msra.mxu0 0.0
  %1220 = vmatprep.subr.mxu0 0.0
  %1221 = vmatpush1.msra.mxu0 0.0
  %1222 = vmatprep.subr.mxu0 0.0
  %1223 = vmatpush1.msra.mxu0 0.0
  %1224 = vmatprep.subr.mxu0 0.0
  %1225 = vmatpush1.msra.mxu0 0.0
  %1226 = vmatprep.subr.mxu0 0.0
  %1227 = vmatpush1.msra.mxu0 0.0
  %1228 = vmatprep.subr.mxu0 0.0
  %1229 = vmatpush1.msra.mxu0 0.0
  %1230 = vmatprep.subr.mxu0 0.0
  %1231 = vmatpush1.msra.mxu0 0.0
  %1232 = vmatprep.subr.mxu0 0.0
  %1233 = vmatpush1.msra.mxu0 0.0
  %1234 = vmatprep.subr.mxu0 0.0
  %1235 = vmatpush1.msra.mxu0 0.0
  %1236 = vmatprep.subr.mxu0 0.0
  %1237 = vmatpush1.msra.mxu0 0.0
  %1238 = vmatprep.subr.mxu0 0.0
  %1239 = vmatpush1.msra.mxu0 0.0
  %1240 = vmatprep.subr.mxu0 0.0
  %1241 = vmatpush1.msra.mxu0 0.0
  %1242 = vmatprep.subr.mxu0 0.0
  %1243 = vmatpush1.msra.mxu0 %v22
  %1244 = vmatprep.subr.mxu0 0.0
  %1245 = vmatpush2.msra.mxu0 0.0
  %1246 = vmatprep.subr.mxu0 0.0
  %1247 = vmatpush2.msra.mxu0 0.0
  %1248 = vmatprep.subr.mxu0 0.0
  %1249 = vmatpush2.msra.mxu0 0.0
  %1250 = vmatprep.subr.mxu0 0.0
  %1251 = vmatpush2.msra.mxu0 0.0
  %1252 = vmatprep.subr.mxu0 0.0
  %1253 = vmatpush2.msra.mxu0 0.0
  %1254 = vmatprep.subr.mxu0 0.0
  %1255 = vmatpush2.msra.mxu0 0.0
  %1256 = vmatprep.subr.mxu0 0.0
  %1257 = vmatpush2.msra.mxu0 0.0
  %1258 = vmatprep.subr.mxu0 0.0
  %1259 = vmatpush2.msra.mxu0 0.0
  %1260 = vmatprep.subr.mxu0 0.0
  %1261 = vmatpush2.msra.mxu0 0.0
  %1262 = vmatprep.subr.mxu0 0.0
  %1263 = vmatpush2.msra.mxu0 0.0
  %1264 = vmatprep.subr.mxu0 0.0
  %1265 = vmatpush2.msra.mxu0 0.0
  %1266 = vmatprep.subr.mxu0 0.0
  %1267 = vmatpush2.msra.mxu0 0.0
  %1268 = vmatprep.subr.mxu0 0.0
  %1269 = vmatpush2.msra.mxu0 0.0
  %1270 = vmatprep.subr.mxu0 0.0
  %1271 = vmatpush2.msra.mxu0 0.0
  %1272 = vmatprep.subr.mxu0 0.0
  %1273 = vmatpush2.msra.mxu0 0.0
  %1274 = vmatprep.subr.mxu0 0.0
  %1275 = vmatpush2.msra.mxu0 0.0
  %1276 = vmatprep.mubr.f32.mxu0 0.0
  %1277 = vmatmul.mubr.f32.gmra.mxu0 %v1210
  %v1278 = vpop.f32.mrf.mxu0
  %v1279 = vadd.f32 0.0, %v1278
  %v1280 = vpop.f32.mrf.mxu0
  %1281 = vdwg.mxu0
  %1282 = vxpose.xlu0.b32.start [1/16] %v1138, 128
  %1283 = vxpose.xlu0.b32.cont [2/16] 0.0, 128
  %1284 = vxpose.xlu0.b32.cont [3/16] 0.0, 128
  %1285 = vxpose.xlu0.b32.cont [4/16] 0.0, 128
  %1286 = vxpose.xlu0.b32.cont [5/16] 0.0, 128
  %1287 = vxpose.xlu0.b32.cont [6/16] 0.0, 128
  %1288 = vxpose.xlu0.b32.cont [7/16] 0.0, 128
  %1289 = vxpose.xlu0.b32.cont [8/16] 0.0, 128
  %1290 = vxpose.xlu0.b32.cont [9/16] 0.0, 128
  %1291 = vxpose.xlu0.b32.cont [10/16] 0.0, 128
  %1292 = vxpose.xlu0.b32.cont [11/16] 0.0, 128
  %1293 = vxpose.xlu0.b32.cont [12/16] 0.0, 128
  %1294 = vxpose.xlu0.b32.cont [13/16] 0.0, 128
  %1295 = vxpose.xlu0.b32.cont [14/16] 0.0, 128
  %1296 = vxpose.xlu0.b32.cont [15/16] 0.0, 128
  %1297 = vxpose.xlu0.b32.end [16/16] 0.0, 128
  %v1298 = vpop.trf.xlu0
  %v1299 = vpop.trf.xlu0
  %v1300 = vpop.trf.xlu0
  %v1301 = vpop.trf.xlu0
  %v1302 = vpop.trf.xlu0
  %v1303 = vpop.trf.xlu0
  %v1304 = vpop.trf.xlu0
  %v1305 = vpop.trf.xlu0
  %v1306 = vpop.trf.xlu0
  %v1307 = vpop.trf.xlu0
  %v1308 = vpop.trf.xlu0
  %v1309 = vpop.trf.xlu0
  %v1310 = vpop.trf.xlu0
  %v1311 = vpop.trf.xlu0
  %v1312 = vpop.trf.xlu0
  %v1313 = vpop.trf.xlu0
  %v1315 = vsel %vm776, %v1298, 0
  %1317 = vmatprep.subr.mxu0 0.0
  %1318 = vmatpush1.msra.mxu0 0.0
  %1319 = vmatprep.subr.mxu0 0.0
  %1320 = vmatpush1.msra.mxu0 0.0
  %1321 = vmatprep.subr.mxu0 0.0
  %1322 = vmatpush1.msra.mxu0 0.0
  %1323 = vmatprep.subr.mxu0 0.0
  %1324 = vmatpush1.msra.mxu0 0.0
  %1325 = vmatprep.subr.mxu0 0.0
  %1326 = vmatpush1.msra.mxu0 0.0
  %1327 = vmatprep.subr.mxu0 0.0
  %1328 = vmatpush1.msra.mxu0 0.0
  %1329 = vmatprep.subr.mxu0 0.0
  %1330 = vmatpush1.msra.mxu0 0.0
  %1331 = vmatprep.subr.mxu0 0.0
  %1332 = vmatpush1.msra.mxu0 0.0
  %1333 = vmatprep.subr.mxu0 0.0
  %1334 = vmatpush1.msra.mxu0 0.0
  %1335 = vmatprep.subr.mxu0 0.0
  %1336 = vmatpush1.msra.mxu0 0.0
  %1337 = vmatprep.subr.mxu0 0.0
  %1338 = vmatpush1.msra.mxu0 0.0
  %1339 = vmatprep.subr.mxu0 0.0
  %1340 = vmatpush1.msra.mxu0 0.0
  %1341 = vmatprep.subr.mxu0 0.0
  %1342 = vmatpush1.msra.mxu0 0.0
  %1343 = vmatprep.subr.mxu0 0.0
  %1344 = vmatpush1.msra.mxu0 0.0
  %1345 = vmatprep.subr.mxu0 0.0
  %1346 = vmatpush1.msra.mxu0 0.0
  %1347 = vmatprep.subr.mxu0 0.0
  %1348 = vmatpush1.msra.mxu0 %v23
  %1349 = vmatprep.subr.mxu0 0.0
  %1350 = vmatpush2.msra.mxu0 0.0
  %1351 = vmatprep.subr.mxu0 0.0
  %1352 = vmatpush2.msra.mxu0 0.0
  %1353 = vmatprep.subr.mxu0 0.0
  %1354 = vmatpush2.msra.mxu0 0.0
  %1355 = vmatprep.subr.mxu0 0.0
  %1356 = vmatpush2.msra.mxu0 0.0
  %1357 = vmatprep.subr.mxu0 0.0
  %1358 = vmatpush2.msra.mxu0 0.0
  %1359 = vmatprep.subr.mxu0 0.0
  %1360 = vmatpush2.msra.mxu0 0.0
  %1361 = vmatprep.subr.mxu0 0.0
  %1362 = vmatpush2.msra.mxu0 0.0
  %1363 = vmatprep.subr.mxu0 0.0
  %1364 = vmatpush2.msra.mxu0 0.0
  %1365 = vmatprep.subr.mxu0 0.0
  %1366 = vmatpush2.msra.mxu0 0.0
  %1367 = vmatprep.subr.mxu0 0.0
  %1368 = vmatpush2.msra.mxu0 0.0
  %1369 = vmatprep.subr.mxu0 0.0
  %1370 = vmatpush2.msra.mxu0 0.0
  %1371 = vmatprep.subr.mxu0 0.0
  %1372 = vmatpush2.msra.mxu0 0.0
  %1373 = vmatprep.subr.mxu0 0.0
  %1374 = vmatpush2.msra.mxu0 0.0
  %1375 = vmatprep.subr.mxu0 0.0
  %1376 = vmatpush2.msra.mxu0 0.0
  %1377 = vmatprep.subr.mxu0 0.0
  %1378 = vmatpush2.msra.mxu0 0.0
  %1379 = vmatprep.subr.mxu0 0.0
  %1380 = vmatpush2.msra.mxu0 0.0
  %1381 = vmatprep.mubr.f32.mxu0 0.0
  %1382 = vmatmul.mubr.f32.gmra.mxu0 %v1315
  %v1383 = vpop.f32.mrf.mxu0
  %v1384 = vadd.f32 0.0, %v1383
  %v1385 = vpop.f32.mrf.mxu0
  %1386 = vdwg.mxu0
  %1387 = vxpose.xlu0.b32.start [1/16] %v1139, 128
  %1388 = vxpose.xlu0.b32.cont [2/16] 0.0, 128
  %1389 = vxpose.xlu0.b32.cont [3/16] 0.0, 128
  %1390 = vxpose.xlu0.b32.cont [4/16] 0.0, 128
  %1391 = vxpose.xlu0.b32.cont [5/16] 0.0, 128
  %1392 = vxpose.xlu0.b32.cont [6/16] 0.0, 128
  %1393 = vxpose.xlu0.b32.cont [7/16] 0.0, 128
  %1394 = vxpose.xlu0.b32.cont [8/16] 0.0, 128
  %1395 = vxpose.xlu0.b32.cont [9/16] 0.0, 128
  %1396 = vxpose.xlu0.b32.cont [10/16] 0.0, 128
  %1397 = vxpose.xlu0.b32.cont [11/16] 0.0, 128
  %1398 = vxpose.xlu0.b32.cont [12/16] 0.0, 128
  %1399 = vxpose.xlu0.b32.cont [13/16] 0.0, 128
  %1400 = vxpose.xlu0.b32.cont [14/16] 0.0, 128
  %1401 = vxpose.xlu0.b32.cont [15/16] 0.0, 128
  %1402 = vxpose.xlu0.b32.end [16/16] 0.0, 128
  %v1403 = vpop.trf.xlu0
  %v1404 = vpop.trf.xlu0
  %v1405 = vpop.trf.xlu0
  %v1406 = vpop.trf.xlu0
  %v1407 = vpop.trf.xlu0
  %v1408 = vpop.trf.xlu0
  %v1409 = vpop.trf.xlu0
  %v1410 = vpop.trf.xlu0
  %v1411 = vpop.trf.xlu0
  %v1412 = vpop.trf.xlu0
  %v1413 = vpop.trf.xlu0
  %v1414 = vpop.trf.xlu0
  %v1415 = vpop.trf.xlu0
  %v1416 = vpop.trf.xlu0
  %v1417 = vpop.trf.xlu0
  %v1418 = vpop.trf.xlu0
  %v1420 = vsel %vm776, %v1403, 0
  %1422 = vmatprep.subr.mxu0 0.0
  %1423 = vmatpush1.msra.mxu0 0.0
  %1424 = vmatprep.subr.mxu0 0.0
  %1425 = vmatpush1.msra.mxu0 0.0
  %1426 = vmatprep.subr.mxu0 0.0
  %1427 = vmatpush1.msra.mxu0 0.0
  %1428 = vmatprep.subr.mxu0 0.0
  %1429 = vmatpush1.msra.mxu0 0.0
  %1430 = vmatprep.subr.mxu0 0.0
  %1431 = vmatpush1.msra.mxu0 0.0
  %1432 = vmatprep.subr.mxu0 0.0
  %1433 = vmatpush1.msra.mxu0 0.0
  %1434 = vmatprep.subr.mxu0 0.0
  %1435 = vmatpush1.msra.mxu0 0.0
  %1436 = vmatprep.subr.mxu0 0.0
  %1437 = vmatpush1.msra.mxu0 0.0
  %1438 = vmatprep.subr.mxu0 0.0
  %1439 = vmatpush1.msra.mxu0 0.0
  %1440 = vmatprep.subr.mxu0 0.0
  %1441 = vmatpush1.msra.mxu0 0.0
  %1442 = vmatprep.subr.mxu0 0.0
  %1443 = vmatpush1.msra.mxu0 0.0
  %1444 = vmatprep.subr.mxu0 0.0
  %1445 = vmatpush1.msra.mxu0 0.0
  %1446 = vmatprep.subr.mxu0 0.0
  %1447 = vmatpush1.msra.mxu0 0.0
  %1448 = vmatprep.subr.mxu0 0.0
  %1449 = vmatpush1.msra.mxu0 0.0
  %1450 = vmatprep.subr.mxu0 0.0
  %1451 = vmatpush1.msra.mxu0 0.0
  %1452 = vmatprep.subr.mxu0 0.0
  %1453 = vmatpush1.msra.mxu0 %v24
  %1454 = vmatprep.subr.mxu0 0.0
  %1455 = vmatpush2.msra.mxu0 0.0
  %1456 = vmatprep.subr.mxu0 0.0
  %1457 = vmatpush2.msra.mxu0 0.0
  %1458 = vmatprep.subr.mxu0 0.0
  %1459 = vmatpush2.msra.mxu0 0.0
  %1460 = vmatprep.subr.mxu0 0.0
  %1461 = vmatpush2.msra.mxu0 0.0
  %1462 = vmatprep.subr.mxu0 0.0
  %1463 = vmatpush2.msra.mxu0 0.0
  %1464 = vmatprep.subr.mxu0 0.0
  %1465 = vmatpush2.msra.mxu0 0.0
  %1466 = vmatprep.subr.mxu0 0.0
  %1467 = vmatpush2.msra.mxu0 0.0
  %1468 = vmatprep.subr.mxu0 0.0
  %1469 = vmatpush2.msra.mxu0 0.0
  %1470 = vmatprep.subr.mxu0 0.0
  %1471 = vmatpush2.msra.mxu0 0.0
  %1472 = vmatprep.subr.mxu0 0.0
  %1473 = vmatpush2.msra.mxu0 0.0
  %1474 = vmatprep.subr.mxu0 0.0
  %1475 = vmatpush2.msra.mxu0 0.0
  %1476 = vmatprep.subr.mxu0 0.0
  %1477 = vmatpush2.msra.mxu0 0.0
  %1478 = vmatprep.subr.mxu0 0.0
  %1479 = vmatpush2.msra.mxu0 0.0
  %1480 = vmatprep.subr.mxu0 0.0
  %1481 = vmatpush2.msra.mxu0 0.0
  %1482 = vmatprep.subr.mxu0 0.0
  %1483 = vmatpush2.msra.mxu0 0.0
  %1484 = vmatprep.subr.mxu0 0.0
  %1485 = vmatpush2.msra.mxu0 0.0
  %1486 = vmatprep.mubr.f32.mxu0 0.0
  %1487 = vmatmul.mubr.f32.gmra.mxu0 %v1420
  %v1488 = vpop.f32.mrf.mxu0
  %v1489 = vadd.f32 0.0, %v1488
  %v1490 = vpop.f32.mrf.mxu0
  %1491 = vdwg.mxu0
  %1492 = vxpose.xlu0.b32.start [1/16] %v1140, 128
  %1493 = vxpose.xlu0.b32.cont [2/16] 0.0, 128
  %1494 = vxpose.xlu0.b32.cont [3/16] 0.0, 128
  %1495 = vxpose.xlu0.b32.cont [4/16] 0.0, 128
  %1496 = vxpose.xlu0.b32.cont [5/16] 0.0, 128
  %1497 = vxpose.xlu0.b32.cont [6/16] 0.0, 128
  %1498 = vxpose.xlu0.b32.cont [7/16] 0.0, 128
  %1499 = vxpose.xlu0.b32.cont [8/16] 0.0, 128
  %1500 = vxpose.xlu0.b32.cont [9/16] 0.0, 128
  %1501 = vxpose.xlu0.b32.cont [10/16] 0.0, 128
  %1502 = vxpose.xlu0.b32.cont [11/16] 0.0, 128
  %1503 = vxpose.xlu0.b32.cont [12/16] 0.0, 128
  %1504 = vxpose.xlu0.b32.cont [13/16] 0.0, 128
  %1505 = vxpose.xlu0.b32.cont [14/16] 0.0, 128
  %1506 = vxpose.xlu0.b32.cont [15/16] 0.0, 128
  %1507 = vxpose.xlu0.b32.end [16/16] 0.0, 128
  %v1508 = vpop.trf.xlu0
  %v1509 = vpop.trf.xlu0
  %v1510 = vpop.trf.xlu0
  %v1511 = vpop.trf.xlu0
  %v1512 = vpop.trf.xlu0
  %v1513 = vpop.trf.xlu0
  %v1514 = vpop.trf.xlu0
  %v1515 = vpop.trf.xlu0
  %v1516 = vpop.trf.xlu0
  %v1517 = vpop.trf.xlu0
  %v1518 = vpop.trf.xlu0
  %v1519 = vpop.trf.xlu0
  %v1520 = vpop.trf.xlu0
  %v1521 = vpop.trf.xlu0
  %v1522 = vpop.trf.xlu0
  %v1523 = vpop.trf.xlu0
  %v1525 = vsel %vm776, %v1508, 0
  %1527 = vmatprep.subr.mxu0 0.0
  %1528 = vmatpush1.msra.mxu0 0.0
  %1529 = vmatprep.subr.mxu0 0.0
  %1530 = vmatpush1.msra.mxu0 0.0
  %1531 = vmatprep.subr.mxu0 0.0
  %1532 = vmatpush1.msra.mxu0 0.0
  %1533 = vmatprep.subr.mxu0 0.0
  %1534 = vmatpush1.msra.mxu0 0.0
  %1535 = vmatprep.subr.mxu0 0.0
  %1536 = vmatpush1.msra.mxu0 0.0
  %1537 = vmatprep.subr.mxu0 0.0
  %1538 = vmatpush1.msra.mxu0 0.0
  %1539 = vmatprep.subr.mxu0 0.0
  %1540 = vmatpush1.msra.mxu0 0.0
  %1541 = vmatprep.subr.mxu0 0.0
  %1542 = vmatpush1.msra.mxu0 0.0
  %1543 = vmatprep.subr.mxu0 0.0
  %1544 = vmatpush1.msra.mxu0 0.0
  %1545 = vmatprep.subr.mxu0 0.0
  %1546 = vmatpush1.msra.mxu0 0.0
  %1547 = vmatprep.subr.mxu0 0.0
  %1548 = vmatpush1.msra.mxu0 0.0
  %1549 = vmatprep.subr.mxu0 0.0
  %1550 = vmatpush1.msra.mxu0 0.0
  %1551 = vmatprep.subr.mxu0 0.0
  %1552 = vmatpush1.msra.mxu0 0.0
  %1553 = vmatprep.subr.mxu0 0.0
  %1554 = vmatpush1.msra.mxu0 0.0
  %1555 = vmatprep.subr.mxu0 0.0
  %1556 = vmatpush1.msra.mxu0 0.0
  %1557 = vmatprep.subr.mxu0 0.0
  %1558 = vmatpush1.msra.mxu0 %v25
  %1559 = vmatprep.subr.mxu0 0.0
  %1560 = vmatpush2.msra.mxu0 0.0
  %1561 = vmatprep.subr.mxu0 0.0
  %1562 = vmatpush2.msra.mxu0 0.0
  %1563 = vmatprep.subr.mxu0 0.0
  %1564 = vmatpush2.msra.mxu0 0.0
  %1565 = vmatprep.subr.mxu0 0.0
  %1566 = vmatpush2.msra.mxu0 0.0
  %1567 = vmatprep.subr.mxu0 0.0
  %1568 = vmatpush2.msra.mxu0 0.0
  %1569 = vmatprep.subr.mxu0 0.0
  %1570 = vmatpush2.msra.mxu0 0.0
  %1571 = vmatprep.subr.mxu0 0.0
  %1572 = vmatpush2.msra.mxu0 0.0
  %1573 = vmatprep.subr.mxu0 0.0
  %1574 = vmatpush2.msra.mxu0 0.0
  %1575 = vmatprep.subr.mxu0 0.0
  %1576 = vmatpush2.msra.mxu0 0.0
  %1577 = vmatprep.subr.mxu0 0.0
  %1578 = vmatpush2.msra.mxu0 0.0
  %1579 = vmatprep.subr.mxu0 0.0
  %1580 = vmatpush2.msra.mxu0 0.0
  %1581 = vmatprep.subr.mxu0 0.0
  %1582 = vmatpush2.msra.mxu0 0.0
  %1583 = vmatprep.subr.mxu0 0.0
  %1584 = vmatpush2.msra.mxu0 0.0
  %1585 = vmatprep.subr.mxu0 0.0
  %1586 = vmatpush2.msra.mxu0 0.0
  %1587 = vmatprep.subr.mxu0 0.0
  %1588 = vmatpush2.msra.mxu0 0.0
  %1589 = vmatprep.subr.mxu0 0.0
  %1590 = vmatpush2.msra.mxu0 0.0
  %1591 = vmatprep.mubr.f32.mxu0 0.0
  %1592 = vmatmul.mubr.f32.gmra.mxu0 %v1525
  %v1593 = vpop.f32.mrf.mxu0
  %v1594 = vadd.f32 0.0, %v1593
  %v1595 = vpop.f32.mrf.mxu0
  %1596 = vdwg.mxu0
  %1597 = vxpose.xlu0.b32.start [1/16] %v1141, 128
  %1598 = vxpose.xlu0.b32.cont [2/16] 0.0, 128
  %1599 = vxpose.xlu0.b32.cont [3/16] 0.0, 128
  %1600 = vxpose.xlu0.b32.cont [4/16] 0.0, 128
  %1601 = vxpose.xlu0.b32.cont [5/16] 0.0, 128
  %1602 = vxpose.xlu0.b32.cont [6/16] 0.0, 128
  %1603 = vxpose.xlu0.b32.cont [7/16] 0.0, 128
  %1604 = vxpose.xlu0.b32.cont [8/16] 0.0, 128
  %1605 = vxpose.xlu0.b32.cont [9/16] 0.0, 128
  %1606 = vxpose.xlu0.b32.cont [10/16] 0.0, 128
  %1607 = vxpose.xlu0.b32.cont [11/16] 0.0, 128
  %1608 = vxpose.xlu0.b32.cont [12/16] 0.0, 128
  %1609 = vxpose.xlu0.b32.cont [13/16] 0.0, 128
  %1610 = vxpose.xlu0.b32.cont [14/16] 0.0, 128
  %1611 = vxpose.xlu0.b32.cont [15/16] 0.0, 128
  %1612 = vxpose.xlu0.b32.end [16/16] 0.0, 128
  %v1613 = vpop.trf.xlu0
  %v1614 = vpop.trf.xlu0
  %v1615 = vpop.trf.xlu0
  %v1616 = vpop.trf.xlu0
  %v1617 = vpop.trf.xlu0
  %v1618 = vpop.trf.xlu0
  %v1619 = vpop.trf.xlu0
  %v1620 = vpop.trf.xlu0
  %v1621 = vpop.trf.xlu0
  %v1622 = vpop.trf.xlu0
  %v1623 = vpop.trf.xlu0
  %v1624 = vpop.trf.xlu0
  %v1625 = vpop.trf.xlu0
  %v1626 = vpop.trf.xlu0
  %v1627 = vpop.trf.xlu0
  %v1628 = vpop.trf.xlu0
  %v1630 = vsel %vm776, %v1613, 0
  %1632 = vmatprep.subr.mxu0 0.0
  %1633 = vmatpush1.msra.mxu0 0.0
  %1634 = vmatprep.subr.mxu0 0.0
  %1635 = vmatpush1.msra.mxu0 0.0
  %1636 = vmatprep.subr.mxu0 0.0
  %1637 = vmatpush1.msra.mxu0 0.0
  %1638 = vmatprep.subr.mxu0 0.0
  %1639 = vmatpush1.msra.mxu0 0.0
  %1640 = vmatprep.subr.mxu0 0.0
  %1641 = vmatpush1.msra.mxu0 0.0
  %1642 = vmatprep.subr.mxu0 0.0
  %1643 = vmatpush1.msra.mxu0 0.0
  %1644 = vmatprep.subr.mxu0 0.0
  %1645 = vmatpush1.msra.mxu0 0.0
  %1646 = vmatprep.subr.mxu0 0.0
  %1647 = vmatpush1.msra.mxu0 0.0
  %1648 = vmatprep.subr.mxu0 0.0
  %1649 = vmatpush1.msra.mxu0 0.0
  %1650 = vmatprep.subr.mxu0 0.0
  %1651 = vmatpush1.msra.mxu0 0.0
  %1652 = vmatprep.subr.mxu0 0.0
  %1653 = vmatpush1.msra.mxu0 0.0
  %1654 = vmatprep.subr.mxu0 0.0
  %1655 = vmatpush1.msra.mxu0 0.0
  %1656 = vmatprep.subr.mxu0 0.0
  %1657 = vmatpush1.msra.mxu0 0.0
  %1658 = vmatprep.subr.mxu0 0.0
  %1659 = vmatpush1.msra.mxu0 0.0
  %1660 = vmatprep.subr.mxu0 0.0
  %1661 = vmatpush1.msra.mxu0 0.0
  %1662 = vmatprep.subr.mxu0 0.0
  %1663 = vmatpush1.msra.mxu0 %v26
  %1664 = vmatprep.subr.mxu0 0.0
  %1665 = vmatpush2.msra.mxu0 0.0
  %1666 = vmatprep.subr.mxu0 0.0
  %1667 = vmatpush2.msra.mxu0 0.0
  %1668 = vmatprep.subr.mxu0 0.0
  %1669 = vmatpush2.msra.mxu0 0.0
  %1670 = vmatprep.subr.mxu0 0.0
  %1671 = vmatpush2.msra.mxu0 0.0
  %1672 = vmatprep.subr.mxu0 0.0
  %1673 = vmatpush2.msra.mxu0 0.0
  %1674 = vmatprep.subr.mxu0 0.0
  %1675 = vmatpush2.msra.mxu0 0.0
  %1676 = vmatprep.subr.mxu0 0.0
  %1677 = vmatpush2.msra.mxu0 0.0
  %1678 = vmatprep.subr.mxu0 0.0
  %1679 = vmatpush2.msra.mxu0 0.0
  %1680 = vmatprep.subr.mxu0 0.0
  %1681 = vmatpush2.msra.mxu0 0.0
  %1682 = vmatprep.subr.mxu0 0.0
  %1683 = vmatpush2.msra.mxu0 0.0
  %1684 = vmatprep.subr.mxu0 0.0
  %1685 = vmatpush2.msra.mxu0 0.0
  %1686 = vmatprep.subr.mxu0 0.0
  %1687 = vmatpush2.msra.mxu0 0.0
  %1688 = vmatprep.subr.mxu0 0.0
  %1689 = vmatpush2.msra.mxu0 0.0
  %1690 = vmatprep.subr.mxu0 0.0
  %1691 = vmatpush2.msra.mxu0 0.0
  %1692 = vmatprep.subr.mxu0 0.0
  %1693 = vmatpush2.msra.mxu0 0.0
  %1694 = vmatprep.subr.mxu0 0.0
  %1695 = vmatpush2.msra.mxu0 0.0
  %1696 = vmatprep.mubr.f32.mxu0 0.0
  %1697 = vmatmul.mubr.f32.gmra.mxu0 %v1630
  %v1698 = vpop.f32.mrf.mxu0
  %v1699 = vadd.f32 0.0, %v1698
  %v1700 = vpop.f32.mrf.mxu0
  %1701 = vdwg.mxu0
  %1702 = vxpose.xlu0.b32.start [1/16] %v1142, 128
  %1703 = vxpose.xlu0.b32.cont [2/16] 0.0, 128
  %1704 = vxpose.xlu0.b32.cont [3/16] 0.0, 128
  %1705 = vxpose.xlu0.b32.cont [4/16] 0.0, 128
  %1706 = vxpose.xlu0.b32.cont [5/16] 0.0, 128
  %1707 = vxpose.xlu0.b32.cont [6/16] 0.0, 128
  %1708 = vxpose.xlu0.b32.cont [7/16] 0.0, 128
  %1709 = vxpose.xlu0.b32.cont [8/16] 0.0, 128
  %1710 = vxpose.xlu0.b32.cont [9/16] 0.0, 128
  %1711 = vxpose.xlu0.b32.cont [10/16] 0.0, 128
  %1712 = vxpose.xlu0.b32.cont [11/16] 0.0, 128
  %1713 = vxpose.xlu0.b32.cont [12/16] 0.0, 128
  %1714 = vxpose.xlu0.b32.cont [13/16] 0.0, 128
  %1715 = vxpose.xlu0.b32.cont [14/16] 0.0, 128
  %1716 = vxpose.xlu0.b32.cont [15/16] 0.0, 128
  %1717 = vxpose.xlu0.b32.end [16/16] 0.0, 128
  %v1718 = vpop.trf.xlu0
  %v1719 = vpop.trf.xlu0
  %v1720 = vpop.trf.xlu0
  %v1721 = vpop.trf.xlu0
  %v1722 = vpop.trf.xlu0
  %v1723 = vpop.trf.xlu0
  %v1724 = vpop.trf.xlu0
  %v1725 = vpop.trf.xlu0
  %v1726 = vpop.trf.xlu0
  %v1727 = vpop.trf.xlu0
  %v1728 = vpop.trf.xlu0
  %v1729 = vpop.trf.xlu0
  %v1730 = vpop.trf.xlu0
  %v1731 = vpop.trf.xlu0
  %v1732 = vpop.trf.xlu0
  %v1733 = vpop.trf.xlu0
  %v1735 = vsel %vm776, %v1718, 0
  %1737 = vmatprep.subr.mxu0 0.0
  %1738 = vmatpush1.msra.mxu0 0.0
  %1739 = vmatprep.subr.mxu0 0.0
  %1740 = vmatpush1.msra.mxu0 0.0
  %1741 = vmatprep.subr.mxu0 0.0
  %1742 = vmatpush1.msra.mxu0 0.0
  %1743 = vmatprep.subr.mxu0 0.0
  %1744 = vmatpush1.msra.mxu0 0.0
  %1745 = vmatprep.subr.mxu0 0.0
  %1746 = vmatpush1.msra.mxu0 0.0
  %1747 = vmatprep.subr.mxu0 0.0
  %1748 = vmatpush1.msra.mxu0 0.0
  %1749 = vmatprep.subr.mxu0 0.0
  %1750 = vmatpush1.msra.mxu0 0.0
  %1751 = vmatprep.subr.mxu0 0.0
  %1752 = vmatpush1.msra.mxu0 0.0
  %1753 = vmatprep.subr.mxu0 0.0
  %1754 = vmatpush1.msra.mxu0 0.0
  %1755 = vmatprep.subr.mxu0 0.0
  %1756 = vmatpush1.msra.mxu0 0.0
  %1757 = vmatprep.subr.mxu0 0.0
  %1758 = vmatpush1.msra.mxu0 0.0
  %1759 = vmatprep.subr.mxu0 0.0
  %1760 = vmatpush1.msra.mxu0 0.0
  %1761 = vmatprep.subr.mxu0 0.0
  %1762 = vmatpush1.msra.mxu0 0.0
  %1763 = vmatprep.subr.mxu0 0.0
  %1764 = vmatpush1.msra.mxu0 0.0
  %1765 = vmatprep.subr.mxu0 0.0
  %1766 = vmatpush1.msra.mxu0 0.0
  %1767 = vmatprep.subr.mxu0 0.0
  %1768 = vmatpush1.msra.mxu0 %v27
  %1769 = vmatprep.subr.mxu0 0.0
  %1770 = vmatpush2.msra.mxu0 0.0
  %1771 = vmatprep.subr.mxu0 0.0
  %1772 = vmatpush2.msra.mxu0 0.0
  %1773 = vmatprep.subr.mxu0 0.0
  %1774 = vmatpush2.msra.mxu0 0.0
  %1775 = vmatprep.subr.mxu0 0.0
  %1776 = vmatpush2.msra.mxu0 0.0
  %1777 = vmatprep.subr.mxu0 0.0
  %1778 = vmatpush2.msra.mxu0 0.0
  %1779 = vmatprep.subr.mxu0 0.0
  %1780 = vmatpush2.msra.mxu0 0.0
  %1781 = vmatprep.subr.mxu0 0.0
  %1782 = vmatpush2.msra.mxu0 0.0
  %1783 = vmatprep.subr.mxu0 0.0
  %1784 = vmatpush2.msra.mxu0 0.0
  %1785 = vmatprep.subr.mxu0 0.0
  %1786 = vmatpush2.msra.mxu0 0.0
  %1787 = vmatprep.subr.mxu0 0.0
  %1788 = vmatpush2.msra.mxu0 0.0
  %1789 = vmatprep.subr.mxu0 0.0
  %1790 = vmatpush2.msra.mxu0 0.0
  %1791 = vmatprep.subr.mxu0 0.0
  %1792 = vmatpush2.msra.mxu0 0.0
  %1793 = vmatprep.subr.mxu0 0.0
  %1794 = vmatpush2.msra.mxu0 0.0
  %1795 = vmatprep.subr.mxu0 0.0
  %1796 = vmatpush2.msra.mxu0 0.0
  %1797 = vmatprep.subr.mxu0 0.0
  %1798 = vmatpush2.msra.mxu0 0.0
  %1799 = vmatprep.subr.mxu0 0.0
  %1800 = vmatpush2.msra.mxu0 0.0
  %1801 = vmatprep.mubr.f32.mxu0 0.0
  %1802 = vmatmul.mubr.f32.gmra.mxu0 %v1735
  %v1803 = vpop.f32.mrf.mxu0
  %v1804 = vadd.f32 0.0, %v1803
  %v1805 = vpop.f32.mrf.mxu0
  %1806 = vdwg.mxu0
  %1807 = vxpose.xlu0.b32.start [1/16] %v1143, 128
  %1808 = vxpose.xlu0.b32.cont [2/16] 0.0, 128
  %1809 = vxpose.xlu0.b32.cont [3/16] 0.0, 128
  %1810 = vxpose.xlu0.b32.cont [4/16] 0.0, 128
  %1811 = vxpose.xlu0.b32.cont [5/16] 0.0, 128
  %1812 = vxpose.xlu0.b32.cont [6/16] 0.0, 128
  %1813 = vxpose.xlu0.b32.cont [7/16] 0.0, 128
  %1814 = vxpose.xlu0.b32.cont [8/16] 0.0, 128
  %1815 = vxpose.xlu0.b32.cont [9/16] 0.0, 128
  %1816 = vxpose.xlu0.b32.cont [10/16] 0.0, 128
  %1817 = vxpose.xlu0.b32.cont [11/16] 0.0, 128
  %1818 = vxpose.xlu0.b32.cont [12/16] 0.0, 128
  %1819 = vxpose.xlu0.b32.cont [13/16] 0.0, 128
  %1820 = vxpose.xlu0.b32.cont [14/16] 0.0, 128
  %1821 = vxpose.xlu0.b32.cont [15/16] 0.0, 128
  %1822 = vxpose.xlu0.b32.end [16/16] 0.0, 128
  %v1823 = vpop.trf.xlu0
  %v1824 = vpop.trf.xlu0
  %v1825 = vpop.trf.xlu0
  %v1826 = vpop.trf.xlu0
  %v1827 = vpop.trf.xlu0
  %v1828 = vpop.trf.xlu0
  %v1829 = vpop.trf.xlu0
  %v1830 = vpop.trf.xlu0
  %v1831 = vpop.trf.xlu0
  %v1832 = vpop.trf.xlu0
  %v1833 = vpop.trf.xlu0
  %v1834 = vpop.trf.xlu0
  %v1835 = vpop.trf.xlu0
  %v1836 = vpop.trf.xlu0
  %v1837 = vpop.trf.xlu0
  %v1838 = vpop.trf.xlu0
  %v1840 = vsel %vm776, %v1823, 0
  %1842 = vmatprep.subr.mxu0 0.0
  %1843 = vmatpush1.msra.mxu0 0.0
  %1844 = vmatprep.subr.mxu0 0.0
  %1845 = vmatpush1.msra.mxu0 0.0
  %1846 = vmatprep.subr.mxu0 0.0
  %1847 = vmatpush1.msra.mxu0 0.0
  %1848 = vmatprep.subr.mxu0 0.0
  %1849 = vmatpush1.msra.mxu0 0.0
  %1850 = vmatprep.subr.mxu0 0.0
  %1851 = vmatpush1.msra.mxu0 0.0
  %1852 = vmatprep.subr.mxu0 0.0
  %1853 = vmatpush1.msra.mxu0 0.0
  %1854 = vmatprep.subr.mxu0 0.0
  %1855 = vmatpush1.msra.mxu0 0.0
  %1856 = vmatprep.subr.mxu0 0.0
  %1857 = vmatpush1.msra.mxu0 0.0
  %1858 = vmatprep.subr.mxu0 0.0
  %1859 = vmatpush1.msra.mxu0 0.0
  %1860 = vmatprep.subr.mxu0 0.0
  %1861 = vmatpush1.msra.mxu0 0.0
  %1862 = vmatprep.subr.mxu0 0.0
  %1863 = vmatpush1.msra.mxu0 0.0
  %1864 = vmatprep.subr.mxu0 0.0
  %1865 = vmatpush1.msra.mxu0 0.0
  %1866 = vmatprep.subr.mxu0 0.0
  %1867 = vmatpush1.msra.mxu0 0.0
  %1868 = vmatprep.subr.mxu0 0.0
  %1869 = vmatpush1.msra.mxu0 0.0
  %1870 = vmatprep.subr.mxu0 0.0
  %1871 = vmatpush1.msra.mxu0 0.0
  %1872 = vmatprep.subr.mxu0 0.0
  %1873 = vmatpush1.msra.mxu0 %v28
  %1874 = vmatprep.subr.mxu0 0.0
  %1875 = vmatpush2.msra.mxu0 0.0
  %1876 = vmatprep.subr.mxu0 0.0
  %1877 = vmatpush2.msra.mxu0 0.0
  %1878 = vmatprep.subr.mxu0 0.0
  %1879 = vmatpush2.msra.mxu0 0.0
  %1880 = vmatprep.subr.mxu0 0.0
  %1881 = vmatpush2.msra.mxu0 0.0
  %1882 = vmatprep.subr.mxu0 0.0
  %1883 = vmatpush2.msra.mxu0 0.0
  %1884 = vmatprep.subr.mxu0 0.0
  %1885 = vmatpush2.msra.mxu0 0.0
  %1886 = vmatprep.subr.mxu0 0.0
  %1887 = vmatpush2.msra.mxu0 0.0
  %1888 = vmatprep.subr.mxu0 0.0
  %1889 = vmatpush2.msra.mxu0 0.0
  %1890 = vmatprep.subr.mxu0 0.0
  %1891 = vmatpush2.msra.mxu0 0.0
  %1892 = vmatprep.subr.mxu0 0.0
  %1893 = vmatpush2.msra.mxu0 0.0
  %1894 = vmatprep.subr.mxu0 0.0
  %1895 = vmatpush2.msra.mxu0 0.0
  %1896 = vmatprep.subr.mxu0 0.0
  %1897 = vmatpush2.msra.mxu0 0.0
  %1898 = vmatprep.subr.mxu0 0.0
  %1899 = vmatpush2.msra.mxu0 0.0
  %1900 = vmatprep.subr.mxu0 0.0
  %1901 = vmatpush2.msra.mxu0 0.0
  %1902 = vmatprep.subr.mxu0 0.0
  %1903 = vmatpush2.msra.mxu0 0.0
  %1904 = vmatprep.subr.mxu0 0.0
  %1905 = vmatpush2.msra.mxu0 0.0
  %1906 = vmatprep.mubr.f32.mxu0 0.0
  %1907 = vmatmul.mubr.f32.gmra.mxu0 %v1840
  %v1908 = vpop.f32.mrf.mxu0
  %v1909 = vadd.f32 0.0, %v1908
  %v1910 = vpop.f32.mrf.mxu0
  %1911 = vdwg.mxu0
  %1912 = vxpose.xlu0.b32.start [1/16] %v1144, 128
  %1913 = vxpose.xlu0.b32.cont [2/16] 0.0, 128
  %1914 = vxpose.xlu0.b32.cont [3/16] 0.0, 128
  %1915 = vxpose.xlu0.b32.cont [4/16] 0.0, 128
  %1916 = vxpose.xlu0.b32.cont [5/16] 0.0, 128
  %1917 = vxpose.xlu0.b32.cont [6/16] 0.0, 128
  %1918 = vxpose.xlu0.b32.cont [7/16] 0.0, 128
  %1919 = vxpose.xlu0.b32.cont [8/16] 0.0, 128
  %1920 = vxpose.xlu0.b32.cont [9/16] 0.0, 128
  %1921 = vxpose.xlu0.b32.cont [10/16] 0.0, 128
  %1922 = vxpose.xlu0.b32.cont [11/16] 0.0, 128
  %1923 = vxpose.xlu0.b32.cont [12/16] 0.0, 128
  %1924 = vxpose.xlu0.b32.cont [13/16] 0.0, 128
  %1925 = vxpose.xlu0.b32.cont [14/16] 0.0, 128
  %1926 = vxpose.xlu0.b32.cont [15/16] 0.0, 128
  %1927 = vxpose.xlu0.b32.end [16/16] 0.0, 128
  %v1928 = vpop.trf.xlu0
  %v1929 = vpop.trf.xlu0
  %v1930 = vpop.trf.xlu0
  %v1931 = vpop.trf.xlu0
  %v1932 = vpop.trf.xlu0
  %v1933 = vpop.trf.xlu0
  %v1934 = vpop.trf.xlu0
  %v1935 = vpop.trf.xlu0
  %v1936 = vpop.trf.xlu0
  %v1937 = vpop.trf.xlu0
  %v1938 = vpop.trf.xlu0
  %v1939 = vpop.trf.xlu0
  %v1940 = vpop.trf.xlu0
  %v1941 = vpop.trf.xlu0
  %v1942 = vpop.trf.xlu0
  %v1943 = vpop.trf.xlu0
  %v1945 = vsel %vm776, %v1928, 0
  %1947 = vmatprep.subr.mxu0 0.0
  %1948 = vmatpush1.msra.mxu0 0.0
  %1949 = vmatprep.subr.mxu0 0.0
  %1950 = vmatpush1.msra.mxu0 0.0
  %1951 = vmatprep.subr.mxu0 0.0
  %1952 = vmatpush1.msra.mxu0 0.0
  %1953 = vmatprep.subr.mxu0 0.0
  %1954 = vmatpush1.msra.mxu0 0.0
  %1955 = vmatprep.subr.mxu0 0.0
  %1956 = vmatpush1.msra.mxu0 0.0
  %1957 = vmatprep.subr.mxu0 0.0
  %1958 = vmatpush1.msra.mxu0 0.0
  %1959 = vmatprep.subr.mxu0 0.0
  %1960 = vmatpush1.msra.mxu0 0.0
  %1961 = vmatprep.subr.mxu0 0.0
  %1962 = vmatpush1.msra.mxu0 0.0
  %1963 = vmatprep.subr.mxu0 0.0
  %1964 = vmatpush1.msra.mxu0 0.0
  %1965 = vmatprep.subr.mxu0 0.0
  %1966 = vmatpush1.msra.mxu0 0.0
  %1967 = vmatprep.subr.mxu0 0.0
  %1968 = vmatpush1.msra.mxu0 0.0
  %1969 = vmatprep.subr.mxu0 0.0
  %1970 = vmatpush1.msra.mxu0 0.0
  %1971 = vmatprep.subr.mxu0 0.0
  %1972 = vmatpush1.msra.mxu0 0.0
  %1973 = vmatprep.subr.mxu0 0.0
  %1974 = vmatpush1.msra.mxu0 0.0
  %1975 = vmatprep.subr.mxu0 0.0
  %1976 = vmatpush1.msra.mxu0 0.0
  %1977 = vmatprep.subr.mxu0 0.0
  %1978 = vmatpush1.msra.mxu0 %v29
  %1979 = vmatprep.subr.mxu0 0.0
  %1980 = vmatpush2.msra.mxu0 0.0
  %1981 = vmatprep.subr.mxu0 0.0
  %1982 = vmatpush2.msra.mxu0 0.0
  %1983 = vmatprep.subr.mxu0 0.0
  %1984 = vmatpush2.msra.mxu0 0.0
  %1985 = vmatprep.subr.mxu0 0.0
  %1986 = vmatpush2.msra.mxu0 0.0
  %1987 = vmatprep.subr.mxu0 0.0
  %1988 = vmatpush2.msra.mxu0 0.0
  %1989 = vmatprep.subr.mxu0 0.0
  %1990 = vmatpush2.msra.mxu0 0.0
  %1991 = vmatprep.subr.mxu0 0.0
  %1992 = vmatpush2.msra.mxu0 0.0
  %1993 = vmatprep.subr.mxu0 0.0
  %1994 = vmatpush2.msra.mxu0 0.0
  %1995 = vmatprep.subr.mxu0 0.0
  %1996 = vmatpush2.msra.mxu0 0.0
  %1997 = vmatprep.subr.mxu0 0.0
  %1998 = vmatpush2.msra.mxu0 0.0
  %1999 = vmatprep.subr.mxu0 0.0
  %2000 = vmatpush2.msra.mxu0 0.0
  %2001 = vmatprep.subr.mxu0 0.0
  %2002 = vmatpush2.msra.mxu0 0.0
  %2003 = vmatprep.subr.mxu0 0.0
  %2004 = vmatpush2.msra.mxu0 0.0
  %2005 = vmatprep.subr.mxu0 0.0
  %2006 = vmatpush2.msra.mxu0 0.0
  %2007 = vmatprep.subr.mxu0 0.0
  %2008 = vmatpush2.msra.mxu0 0.0
  %2009 = vmatprep.subr.mxu0 0.0
  %2010 = vmatpush2.msra.mxu0 0.0
  %2011 = vmatprep.mubr.f32.mxu0 0.0
  %2012 = vmatmul.mubr.f32.gmra.mxu0 %v1945
  %v2013 = vpop.f32.mrf.mxu0
  %v2014 = vadd.f32 0.0, %v2013
  %v2015 = vpop.f32.mrf.mxu0
  %2016 = vdwg.mxu0
  %2017 = vxpose.xlu0.b32.start [1/16] %v1145, 128
  %2018 = vxpose.xlu0.b32.cont [2/16] 0.0, 128
  %2019 = vxpose.xlu0.b32.cont [3/16] 0.0, 128
  %2020 = vxpose.xlu0.b32.cont [4/16] 0.0, 128
  %2021 = vxpose.xlu0.b32.cont [5/16] 0.0, 128
  %2022 = vxpose.xlu0.b32.cont [6/16] 0.0, 128
  %2023 = vxpose.xlu0.b32.cont [7/16] 0.0, 128
  %2024 = vxpose.xlu0.b32.cont [8/16] 0.0, 128
  %2025 = vxpose.xlu0.b32.cont [9/16] 0.0, 128
  %2026 = vxpose.xlu0.b32.cont [10/16] 0.0, 128
  %2027 = vxpose.xlu0.b32.cont [11/16] 0.0, 128
  %2028 = vxpose.xlu0.b32.cont [12/16] 0.0, 128
  %2029 = vxpose.xlu0.b32.cont [13/16] 0.0, 128
  %2030 = vxpose.xlu0.b32.cont [14/16] 0.0, 128
  %2031 = vxpose.xlu0.b32.cont [15/16] 0.0, 128
  %2032 = vxpose.xlu0.b32.end [16/16] 0.0, 128
  %v2033 = vpop.trf.xlu0
  %v2034 = vpop.trf.xlu0
  %v2035 = vpop.trf.xlu0
  %v2036 = vpop.trf.xlu0
  %v2037 = vpop.trf.xlu0
  %v2038 = vpop.trf.xlu0
  %v2039 = vpop.trf.xlu0
  %v2040 = vpop.trf.xlu0
  %v2041 = vpop.trf.xlu0
  %v2042 = vpop.trf.xlu0
  %v2043 = vpop.trf.xlu0
  %v2044 = vpop.trf.xlu0
  %v2045 = vpop.trf.xlu0
  %v2046 = vpop.trf.xlu0
  %v2047 = vpop.trf.xlu0
  %v2048 = vpop.trf.xlu0
  %v2050 = vsel %vm776, %v2033, 0
  %2052 = vmatprep.subr.mxu0 0.0
  %2053 = vmatpush1.msra.mxu0 0.0
  %2054 = vmatprep.subr.mxu0 0.0
  %2055 = vmatpush1.msra.mxu0 0.0
  %2056 = vmatprep.subr.mxu0 0.0
  %2057 = vmatpush1.msra.mxu0 0.0
  %2058 = vmatprep.subr.mxu0 0.0
  %2059 = vmatpush1.msra.mxu0 0.0
  %2060 = vmatprep.subr.mxu0 0.0
  %2061 = vmatpush1.msra.mxu0 0.0
  %2062 = vmatprep.subr.mxu0 0.0
  %2063 = vmatpush1.msra.mxu0 0.0
  %2064 = vmatprep.subr.mxu0 0.0
  %2065 = vmatpush1.msra.mxu0 0.0
  %2066 = vmatprep.subr.mxu0 0.0
  %2067 = vmatpush1.msra.mxu0 0.0
  %2068 = vmatprep.subr.mxu0 0.0
  %2069 = vmatpush1.msra.mxu0 0.0
  %2070 = vmatprep.subr.mxu0 0.0
  %2071 = vmatpush1.msra.mxu0 0.0
  %2072 = vmatprep.subr.mxu0 0.0
  %2073 = vmatpush1.msra.mxu0 0.0
  %2074 = vmatprep.subr.mxu0 0.0
  %2075 = vmatpush1.msra.mxu0 0.0
  %2076 = vmatprep.subr.mxu0 0.0
  %2077 = vmatpush1.msra.mxu0 0.0
  %2078 = vmatprep.subr.mxu0 0.0
  %2079 = vmatpush1.msra.mxu0 0.0
  %2080 = vmatprep.subr.mxu0 0.0
  %2081 = vmatpush1.msra.mxu0 0.0
  %2082 = vmatprep.subr.mxu0 0.0
  %2083 = vmatpush1.msra.mxu0 %v30
  %2084 = vmatprep.subr.mxu0 0.0
  %2085 = vmatpush2.msra.mxu0 0.0
  %2086 = vmatprep.subr.mxu0 0.0
  %2087 = vmatpush2.msra.mxu0 0.0
  %2088 = vmatprep.subr.mxu0 0.0
  %2089 = vmatpush2.msra.mxu0 0.0
  %2090 = vmatprep.subr.mxu0 0.0
  %2091 = vmatpush2.msra.mxu0 0.0
  %2092 = vmatprep.subr.mxu0 0.0
  %2093 = vmatpush2.msra.mxu0 0.0
  %2094 = vmatprep.subr.mxu0 0.0
  %2095 = vmatpush2.msra.mxu0 0.0
  %2096 = vmatprep.subr.mxu0 0.0
  %2097 = vmatpush2.msra.mxu0 0.0
  %2098 = vmatprep.subr.mxu0 0.0
  %2099 = vmatpush2.msra.mxu0 0.0
  %2100 = vmatprep.subr.mxu0 0.0
  %2101 = vmatpush2.msra.mxu0 0.0
  %2102 = vmatprep.subr.mxu0 0.0
  %2103 = vmatpush2.msra.mxu0 0.0
  %2104 = vmatprep.subr.mxu0 0.0
  %2105 = vmatpush2.msra.mxu0 0.0
  %2106 = vmatprep.subr.mxu0 0.0
  %2107 = vmatpush2.msra.mxu0 0.0
  %2108 = vmatprep.subr.mxu0 0.0
  %2109 = vmatpush2.msra.mxu0 0.0
  %2110 = vmatprep.subr.mxu0 0.0
  %2111 = vmatpush2.msra.mxu0 0.0
  %2112 = vmatprep.subr.mxu0 0.0
  %2113 = vmatpush2.msra.mxu0 0.0
  %2114 = vmatprep.subr.mxu0 0.0
  %2115 = vmatpush2.msra.mxu0 0.0
  %2116 = vmatprep.mubr.f32.mxu0 0.0
  %2117 = vmatmul.mubr.f32.gmra.mxu0 %v2050
  %v2118 = vpop.f32.mrf.mxu0
  %v2119 = vadd.f32 0.0, %v2118
  %v2120 = vpop.f32.mrf.mxu0
  %2121 = vdwg.mxu0
  %2122 = vxpose.xlu0.b32.start [1/16] %v1146, 128
  %2123 = vxpose.xlu0.b32.cont [2/16] 0.0, 128
  %2124 = vxpose.xlu0.b32.cont [3/16] 0.0, 128
  %2125 = vxpose.xlu0.b32.cont [4/16] 0.0, 128
  %2126 = vxpose.xlu0.b32.cont [5/16] 0.0, 128
  %2127 = vxpose.xlu0.b32.cont [6/16] 0.0, 128
  %2128 = vxpose.xlu0.b32.cont [7/16] 0.0, 128
  %2129 = vxpose.xlu0.b32.cont [8/16] 0.0, 128
  %2130 = vxpose.xlu0.b32.cont [9/16] 0.0, 128
  %2131 = vxpose.xlu0.b32.cont [10/16] 0.0, 128
  %2132 = vxpose.xlu0.b32.cont [11/16] 0.0, 128
  %2133 = vxpose.xlu0.b32.cont [12/16] 0.0, 128
  %2134 = vxpose.xlu0.b32.cont [13/16] 0.0, 128
  %2135 = vxpose.xlu0.b32.cont [14/16] 0.0, 128
  %2136 = vxpose.xlu0.b32.cont [15/16] 0.0, 128
  %2137 = vxpose.xlu0.b32.end [16/16] 0.0, 128
  %v2138 = vpop.trf.xlu0
  %v2139 = vpop.trf.xlu0
  %v2140 = vpop.trf.xlu0
  %v2141 = vpop.trf.xlu0
  %v2142 = vpop.trf.xlu0
  %v2143 = vpop.trf.xlu0
  %v2144 = vpop.trf.xlu0
  %v2145 = vpop.trf.xlu0
  %v2146 = vpop.trf.xlu0
  %v2147 = vpop.trf.xlu0
  %v2148 = vpop.trf.xlu0
  %v2149 = vpop.trf.xlu0
  %v2150 = vpop.trf.xlu0
  %v2151 = vpop.trf.xlu0
  %v2152 = vpop.trf.xlu0
  %v2153 = vpop.trf.xlu0
  %v2155 = vsel %vm776, %v2138, 0
  %2157 = vmatprep.subr.mxu0 0.0
  %2158 = vmatpush1.msra.mxu0 0.0
  %2159 = vmatprep.subr.mxu0 0.0
  %2160 = vmatpush1.msra.mxu0 0.0
  %2161 = vmatprep.subr.mxu0 0.0
  %2162 = vmatpush1.msra.mxu0 0.0
  %2163 = vmatprep.subr.mxu0 0.0
  %2164 = vmatpush1.msra.mxu0 0.0
  %2165 = vmatprep.subr.mxu0 0.0
  %2166 = vmatpush1.msra.mxu0 0.0
  %2167 = vmatprep.subr.mxu0 0.0
  %2168 = vmatpush1.msra.mxu0 0.0
  %2169 = vmatprep.subr.mxu0 0.0
  %2170 = vmatpush1.msra.mxu0 0.0
  %2171 = vmatprep.subr.mxu0 0.0
  %2172 = vmatpush1.msra.mxu0 0.0
  %2173 = vmatprep.subr.mxu0 0.0
  %2174 = vmatpush1.msra.mxu0 0.0
  %2175 = vmatprep.subr.mxu0 0.0
  %2176 = vmatpush1.msra.mxu0 0.0
  %2177 = vmatprep.subr.mxu0 0.0
  %2178 = vmatpush1.msra.mxu0 0.0
  %2179 = vmatprep.subr.mxu0 0.0
  %2180 = vmatpush1.msra.mxu0 0.0
  %2181 = vmatprep.subr.mxu0 0.0
  %2182 = vmatpush1.msra.mxu0 0.0
  %2183 = vmatprep.subr.mxu0 0.0
  %2184 = vmatpush1.msra.mxu0 0.0
  %2185 = vmatprep.subr.mxu0 0.0
  %2186 = vmatpush1.msra.mxu0 0.0
  %2187 = vmatprep.subr.mxu0 0.0
  %2188 = vmatpush1.msra.mxu0 %v31
  %2189 = vmatprep.subr.mxu0 0.0
  %2190 = vmatpush2.msra.mxu0 0.0
  %2191 = vmatprep.subr.mxu0 0.0
  %2192 = vmatpush2.msra.mxu0 0.0
  %2193 = vmatprep.subr.mxu0 0.0
  %2194 = vmatpush2.msra.mxu0 0.0
  %2195 = vmatprep.subr.mxu0 0.0
  %2196 = vmatpush2.msra.mxu0 0.0
  %2197 = vmatprep.subr.mxu0 0.0
  %2198 = vmatpush2.msra.mxu0 0.0
  %2199 = vmatprep.subr.mxu0 0.0
  %2200 = vmatpush2.msra.mxu0 0.0
  %2201 = vmatprep.subr.mxu0 0.0
  %2202 = vmatpush2.msra.mxu0 0.0
  %2203 = vmatprep.subr.mxu0 0.0
  %2204 = vmatpush2.msra.mxu0 0.0
  %2205 = vmatprep.subr.mxu0 0.0
  %2206 = vmatpush2.msra.mxu0 0.0
  %2207 = vmatprep.subr.mxu0 0.0
  %2208 = vmatpush2.msra.mxu0 0.0
  %2209 = vmatprep.subr.mxu0 0.0
  %2210 = vmatpush2.msra.mxu0 0.0
  %2211 = vmatprep.subr.mxu0 0.0
  %2212 = vmatpush2.msra.mxu0 0.0
  %2213 = vmatprep.subr.mxu0 0.0
  %2214 = vmatpush2.msra.mxu0 0.0
  %2215 = vmatprep.subr.mxu0 0.0
  %2216 = vmatpush2.msra.mxu0 0.0
  %2217 = vmatprep.subr.mxu0 0.0
  %2218 = vmatpush2.msra.mxu0 0.0
  %2219 = vmatprep.subr.mxu0 0.0
  %2220 = vmatpush2.msra.mxu0 0.0
  %2221 = vmatprep.mubr.f32.mxu0 0.0
  %2222 = vmatmul.mubr.f32.gmra.mxu0 %v2155
  %v2223 = vpop.f32.mrf.mxu0
  %v2224 = vadd.f32 0.0, %v2223
  %v2225 = vpop.f32.mrf.mxu0
  %2226 = vdwg.mxu0
  %2227 = vxpose.xlu0.b32.start [1/16] %v1147, 128
  %2228 = vxpose.xlu0.b32.cont [2/16] 0.0, 128
  %2229 = vxpose.xlu0.b32.cont [3/16] 0.0, 128
  %2230 = vxpose.xlu0.b32.cont [4/16] 0.0, 128
  %2231 = vxpose.xlu0.b32.cont [5/16] 0.0, 128
  %2232 = vxpose.xlu0.b32.cont [6/16] 0.0, 128
  %2233 = vxpose.xlu0.b32.cont [7/16] 0.0, 128
  %2234 = vxpose.xlu0.b32.cont [8/16] 0.0, 128
  %2235 = vxpose.xlu0.b32.cont [9/16] 0.0, 128
  %2236 = vxpose.xlu0.b32.cont [10/16] 0.0, 128
  %2237 = vxpose.xlu0.b32.cont [11/16] 0.0, 128
  %2238 = vxpose.xlu0.b32.cont [12/16] 0.0, 128
  %2239 = vxpose.xlu0.b32.cont [13/16] 0.0, 128
  %2240 = vxpose.xlu0.b32.cont [14/16] 0.0, 128
  %2241 = vxpose.xlu0.b32.cont [15/16] 0.0, 128
  %2242 = vxpose.xlu0.b32.end [16/16] 0.0, 128
  %v2243 = vpop.trf.xlu0
  %v2244 = vpop.trf.xlu0
  %v2245 = vpop.trf.xlu0
  %v2246 = vpop.trf.xlu0
  %v2247 = vpop.trf.xlu0
  %v2248 = vpop.trf.xlu0
  %v2249 = vpop.trf.xlu0
  %v2250 = vpop.trf.xlu0
  %v2251 = vpop.trf.xlu0
  %v2252 = vpop.trf.xlu0
  %v2253 = vpop.trf.xlu0
  %v2254 = vpop.trf.xlu0
  %v2255 = vpop.trf.xlu0
  %v2256 = vpop.trf.xlu0
  %v2257 = vpop.trf.xlu0
  %v2258 = vpop.trf.xlu0
  %v2260 = vsel %vm776, %v2243, 0
  %2262 = vmatprep.subr.mxu0 0.0
  %2263 = vmatpush1.msra.mxu0 0.0
  %2264 = vmatprep.subr.mxu0 0.0
  %2265 = vmatpush1.msra.mxu0 0.0
  %2266 = vmatprep.subr.mxu0 0.0
  %2267 = vmatpush1.msra.mxu0 0.0
  %2268 = vmatprep.subr.mxu0 0.0
  %2269 = vmatpush1.msra.mxu0 0.0
  %2270 = vmatprep.subr.mxu0 0.0
  %2271 = vmatpush1.msra.mxu0 0.0
  %2272 = vmatprep.subr.mxu0 0.0
  %2273 = vmatpush1.msra.mxu0 0.0
  %2274 = vmatprep.subr.mxu0 0.0
  %2275 = vmatpush1.msra.mxu0 0.0
  %2276 = vmatprep.subr.mxu0 0.0
  %2277 = vmatpush1.msra.mxu0 0.0
  %2278 = vmatprep.subr.mxu0 0.0
  %2279 = vmatpush1.msra.mxu0 0.0
  %2280 = vmatprep.subr.mxu0 0.0
  %2281 = vmatpush1.msra.mxu0 0.0
  %2282 = vmatprep.subr.mxu0 0.0
  %2283 = vmatpush1.msra.mxu0 0.0
  %2284 = vmatprep.subr.mxu0 0.0
  %2285 = vmatpush1.msra.mxu0 0.0
  %2286 = vmatprep.subr.mxu0 0.0
  %2287 = vmatpush1.msra.mxu0 0.0
  %2288 = vmatprep.subr.mxu0 0.0
  %2289 = vmatpush1.msra.mxu0 0.0
  %2290 = vmatprep.subr.mxu0 0.0
  %2291 = vmatpush1.msra.mxu0 0.0
  %2292 = vmatprep.subr.mxu0 0.0
  %2293 = vmatpush1.msra.mxu0 %v32
  %2294 = vmatprep.subr.mxu0 0.0
  %2295 = vmatpush2.msra.mxu0 0.0
  %2296 = vmatprep.subr.mxu0 0.0
  %2297 = vmatpush2.msra.mxu0 0.0
  %2298 = vmatprep.subr.mxu0 0.0
  %2299 = vmatpush2.msra.mxu0 0.0
  %2300 = vmatprep.subr.mxu0 0.0
  %2301 = vmatpush2.msra.mxu0 0.0
  %2302 = vmatprep.subr.mxu0 0.0
  %2303 = vmatpush2.msra.mxu0 0.0
  %2304 = vmatprep.subr.mxu0 0.0
  %2305 = vmatpush2.msra.mxu0 0.0
  %2306 = vmatprep.subr.mxu0 0.0
  %2307 = vmatpush2.msra.mxu0 0.0
  %2308 = vmatprep.subr.mxu0 0.0
  %2309 = vmatpush2.msra.mxu0 0.0
  %2310 = vmatprep.subr.mxu0 0.0
  %2311 = vmatpush2.msra.mxu0 0.0
  %2312 = vmatprep.subr.mxu0 0.0
  %2313 = vmatpush2.msra.mxu0 0.0
  %2314 = vmatprep.subr.mxu0 0.0
  %2315 = vmatpush2.msra.mxu0 0.0
  %2316 = vmatprep.subr.mxu0 0.0
  %2317 = vmatpush2.msra.mxu0 0.0
  %2318 = vmatprep.subr.mxu0 0.0
  %2319 = vmatpush2.msra.mxu0 0.0
  %2320 = vmatprep.subr.mxu0 0.0
  %2321 = vmatpush2.msra.mxu0 0.0
  %2322 = vmatprep.subr.mxu0 0.0
  %2323 = vmatpush2.msra.mxu0 0.0
  %2324 = vmatprep.subr.mxu0 0.0
  %2325 = vmatpush2.msra.mxu0 0.0
  %2326 = vmatprep.mubr.f32.mxu0 0.0
  %2327 = vmatmul.mubr.f32.gmra.mxu0 %v2260
  %v2328 = vpop.f32.mrf.mxu0
  %v2329 = vadd.f32 0.0, %v2328
  %v2330 = vpop.f32.mrf.mxu0
  %2331 = vdwg.mxu0
  %2332 = vxpose.xlu0.b32.start [1/16] %v1148, 128
  %2333 = vxpose.xlu0.b32.cont [2/16] 0.0, 128
  %2334 = vxpose.xlu0.b32.cont [3/16] 0.0, 128
  %2335 = vxpose.xlu0.b32.cont [4/16] 0.0, 128
  %2336 = vxpose.xlu0.b32.cont [5/16] 0.0, 128
  %2337 = vxpose.xlu0.b32.cont [6/16] 0.0, 128
  %2338 = vxpose.xlu0.b32.cont [7/16] 0.0, 128
  %2339 = vxpose.xlu0.b32.cont [8/16] 0.0, 128
  %2340 = vxpose.xlu0.b32.cont [9/16] 0.0, 128
  %2341 = vxpose.xlu0.b32.cont [10/16] 0.0, 128
  %2342 = vxpose.xlu0.b32.cont [11/16] 0.0, 128
  %2343 = vxpose.xlu0.b32.cont [12/16] 0.0, 128
  %2344 = vxpose.xlu0.b32.cont [13/16] 0.0, 128
  %2345 = vxpose.xlu0.b32.cont [14/16] 0.0, 128
  %2346 = vxpose.xlu0.b32.cont [15/16] 0.0, 128
  %2347 = vxpose.xlu0.b32.end [16/16] 0.0, 128
  %v2348 = vpop.trf.xlu0
  %v2349 = vpop.trf.xlu0
  %v2350 = vpop.trf.xlu0
  %v2351 = vpop.trf.xlu0
  %v2352 = vpop.trf.xlu0
  %v2353 = vpop.trf.xlu0
  %v2354 = vpop.trf.xlu0
  %v2355 = vpop.trf.xlu0
  %v2356 = vpop.trf.xlu0
  %v2357 = vpop.trf.xlu0
  %v2358 = vpop.trf.xlu0
  %v2359 = vpop.trf.xlu0
  %v2360 = vpop.trf.xlu0
  %v2361 = vpop.trf.xlu0
  %v2362 = vpop.trf.xlu0
  %v2363 = vpop.trf.xlu0
  %v2365 = vsel %vm776, %v2348, 0
  %2367 = vmatprep.subr.mxu0 0.0
  %2368 = vmatpush1.msra.mxu0 0.0
  %2369 = vmatprep.subr.mxu0 0.0
  %2370 = vmatpush1.msra.mxu0 0.0
  %2371 = vmatprep.subr.mxu0 0.0
  %2372 = vmatpush1.msra.mxu0 0.0
  %2373 = vmatprep.subr.mxu0 0.0
  %2374 = vmatpush1.msra.mxu0 0.0
  %2375 = vmatprep.subr.mxu0 0.0
  %2376 = vmatpush1.msra.mxu0 0.0
  %2377 = vmatprep.subr.mxu0 0.0
  %2378 = vmatpush1.msra.mxu0 0.0
  %2379 = vmatprep.subr.mxu0 0.0
  %2380 = vmatpush1.msra.mxu0 0.0
  %2381 = vmatprep.subr.mxu0 0.0
  %2382 = vmatpush1.msra.mxu0 0.0
  %2383 = vmatprep.subr.mxu0 0.0
  %2384 = vmatpush1.msra.mxu0 0.0
  %2385 = vmatprep.subr.mxu0 0.0
  %2386 = vmatpush1.msra.mxu0 0.0
  %2387 = vmatprep.subr.mxu0 0.0
  %2388 = vmatpush1.msra.mxu0 0.0
  %2389 = vmatprep.subr.mxu0 0.0
  %2390 = vmatpush1.msra.mxu0 0.0
  %2391 = vmatprep.subr.mxu0 0.0
  %2392 = vmatpush1.msra.mxu0 0.0
  %2393 = vmatprep.subr.mxu0 0.0
  %2394 = vmatpush1.msra.mxu0 0.0
  %2395 = vmatprep.subr.mxu0 0.0
  %2396 = vmatpush1.msra.mxu0 0.0
  %2397 = vmatprep.subr.mxu0 0.0
  %2398 = vmatpush1.msra.mxu0 %v33
  %2399 = vmatprep.subr.mxu0 0.0
  %2400 = vmatpush2.msra.mxu0 0.0
  %2401 = vmatprep.subr.mxu0 0.0
  %2402 = vmatpush2.msra.mxu0 0.0
  %2403 = vmatprep.subr.mxu0 0.0
  %2404 = vmatpush2.msra.mxu0 0.0
  %2405 = vmatprep.subr.mxu0 0.0
  %2406 = vmatpush2.msra.mxu0 0.0
  %2407 = vmatprep.subr.mxu0 0.0
  %2408 = vmatpush2.msra.mxu0 0.0
  %2409 = vmatprep.subr.mxu0 0.0
  %2410 = vmatpush2.msra.mxu0 0.0
  %2411 = vmatprep.subr.mxu0 0.0
  %2412 = vmatpush2.msra.mxu0 0.0
  %2413 = vmatprep.subr.mxu0 0.0
  %2414 = vmatpush2.msra.mxu0 0.0
  %2415 = vmatprep.subr.mxu0 0.0
  %2416 = vmatpush2.msra.mxu0 0.0
  %2417 = vmatprep.subr.mxu0 0.0
  %2418 = vmatpush2.msra.mxu0 0.0
  %2419 = vmatprep.subr.mxu0 0.0
  %2420 = vmatpush2.msra.mxu0 0.0
  %2421 = vmatprep.subr.mxu0 0.0
  %2422 = vmatpush2.msra.mxu0 0.0
  %2423 = vmatprep.subr.mxu0 0.0
  %2424 = vmatpush2.msra.mxu0 0.0
  %2425 = vmatprep.subr.mxu0 0.0
  %2426 = vmatpush2.msra.mxu0 0.0
  %2427 = vmatprep.subr.mxu0 0.0
  %2428 = vmatpush2.msra.mxu0 0.0
  %2429 = vmatprep.subr.mxu0 0.0
  %2430 = vmatpush2.msra.mxu0 0.0
  %2431 = vmatprep.mubr.f32.mxu0 0.0
  %2432 = vmatmul.mubr.f32.gmra.mxu0 %v2365
  %v2433 = vpop.f32.mrf.mxu0
  %v2434 = vadd.f32 0.0, %v2433
  %v2435 = vpop.f32.mrf.mxu0
  %2436 = vdwg.mxu0
  %2437 = vxpose.xlu0.b32.start [1/16] %v1149, 128
  %2438 = vxpose.xlu0.b32.cont [2/16] 0.0, 128
  %2439 = vxpose.xlu0.b32.cont [3/16] 0.0, 128
  %2440 = vxpose.xlu0.b32.cont [4/16] 0.0, 128
  %2441 = vxpose.xlu0.b32.cont [5/16] 0.0, 128
  %2442 = vxpose.xlu0.b32.cont [6/16] 0.0, 128
  %2443 = vxpose.xlu0.b32.cont [7/16] 0.0, 128
  %2444 = vxpose.xlu0.b32.cont [8/16] 0.0, 128
  %2445 = vxpose.xlu0.b32.cont [9/16] 0.0, 128
  %2446 = vxpose.xlu0.b32.cont [10/16] 0.0, 128
  %2447 = vxpose.xlu0.b32.cont [11/16] 0.0, 128
  %2448 = vxpose.xlu0.b32.cont [12/16] 0.0, 128
  %2449 = vxpose.xlu0.b32.cont [13/16] 0.0, 128
  %2450 = vxpose.xlu0.b32.cont [14/16] 0.0, 128
  %2451 = vxpose.xlu0.b32.cont [15/16] 0.0, 128
  %2452 = vxpose.xlu0.b32.end [16/16] 0.0, 128
  %v2453 = vpop.trf.xlu0
  %v2454 = vpop.trf.xlu0
  %v2455 = vpop.trf.xlu0
  %v2456 = vpop.trf.xlu0
  %v2457 = vpop.trf.xlu0
  %v2458 = vpop.trf.xlu0
  %v2459 = vpop.trf.xlu0
  %v2460 = vpop.trf.xlu0
  %v2461 = vpop.trf.xlu0
  %v2462 = vpop.trf.xlu0
  %v2463 = vpop.trf.xlu0
  %v2464 = vpop.trf.xlu0
  %v2465 = vpop.trf.xlu0
  %v2466 = vpop.trf.xlu0
  %v2467 = vpop.trf.xlu0
  %v2468 = vpop.trf.xlu0
  %v2470 = vsel %vm776, %v2453, 0
  %2472 = vmatprep.subr.mxu0 0.0
  %2473 = vmatpush1.msra.mxu0 0.0
  %2474 = vmatprep.subr.mxu0 0.0
  %2475 = vmatpush1.msra.mxu0 0.0
  %2476 = vmatprep.subr.mxu0 0.0
  %2477 = vmatpush1.msra.mxu0 0.0
  %2478 = vmatprep.subr.mxu0 0.0
  %2479 = vmatpush1.msra.mxu0 0.0
  %2480 = vmatprep.subr.mxu0 0.0
  %2481 = vmatpush1.msra.mxu0 0.0
  %2482 = vmatprep.subr.mxu0 0.0
  %2483 = vmatpush1.msra.mxu0 0.0
  %2484 = vmatprep.subr.mxu0 0.0
  %2485 = vmatpush1.msra.mxu0 0.0
  %2486 = vmatprep.subr.mxu0 0.0
  %2487 = vmatpush1.msra.mxu0 0.0
  %2488 = vmatprep.subr.mxu0 0.0
  %2489 = vmatpush1.msra.mxu0 0.0
  %2490 = vmatprep.subr.mxu0 0.0
  %2491 = vmatpush1.msra.mxu0 0.0
  %2492 = vmatprep.subr.mxu0 0.0
  %2493 = vmatpush1.msra.mxu0 0.0
  %2494 = vmatprep.subr.mxu0 0.0
  %2495 = vmatpush1.msra.mxu0 0.0
  %2496 = vmatprep.subr.mxu0 0.0
  %2497 = vmatpush1.msra.mxu0 0.0
  %2498 = vmatprep.subr.mxu0 0.0
  %2499 = vmatpush1.msra.mxu0 0.0
  %2500 = vmatprep.subr.mxu0 0.0
  %2501 = vmatpush1.msra.mxu0 0.0
  %2502 = vmatprep.subr.mxu0 0.0
  %2503 = vmatpush1.msra.mxu0 %v34
  %2504 = vmatprep.subr.mxu0 0.0
  %2505 = vmatpush2.msra.mxu0 0.0
  %2506 = vmatprep.subr.mxu0 0.0
  %2507 = vmatpush2.msra.mxu0 0.0
  %2508 = vmatprep.subr.mxu0 0.0
  %2509 = vmatpush2.msra.mxu0 0.0
  %2510 = vmatprep.subr.mxu0 0.0
  %2511 = vmatpush2.msra.mxu0 0.0
  %2512 = vmatprep.subr.mxu0 0.0
  %2513 = vmatpush2.msra.mxu0 0.0
  %2514 = vmatprep.subr.mxu0 0.0
  %2515 = vmatpush2.msra.mxu0 0.0
  %2516 = vmatprep.subr.mxu0 0.0
  %2517 = vmatpush2.msra.mxu0 0.0
  %2518 = vmatprep.subr.mxu0 0.0
  %2519 = vmatpush2.msra.mxu0 0.0
  %2520 = vmatprep.subr.mxu0 0.0
  %2521 = vmatpush2.msra.mxu0 0.0
  %2522 = vmatprep.subr.mxu0 0.0
  %2523 = vmatpush2.msra.mxu0 0.0
  %2524 = vmatprep.subr.mxu0 0.0
  %2525 = vmatpush2.msra.mxu0 0.0
  %2526 = vmatprep.subr.mxu0 0.0
  %2527 = vmatpush2.msra.mxu0 0.0
  %2528 = vmatprep.subr.mxu0 0.0
  %2529 = vmatpush2.msra.mxu0 0.0
  %2530 = vmatprep.subr.mxu0 0.0
  %2531 = vmatpush2.msra.mxu0 0.0
  %2532 = vmatprep.subr.mxu0 0.0
  %2533 = vmatpush2.msra.mxu0 0.0
  %2534 = vmatprep.subr.mxu0 0.0
  %2535 = vmatpush2.msra.mxu0 0.0
  %2536 = vmatprep.mubr.f32.mxu0 0.0
  %2537 = vmatmul.mubr.f32.gmra.mxu0 %v2470
  %v2538 = vpop.f32.mrf.mxu0
  %v2539 = vadd.f32 0.0, %v2538
  %v2540 = vpop.f32.mrf.mxu0
  %2541 = vdwg.mxu0
  %2542 = vxpose.xlu0.b32.start [1/16] %v1150, 128
  %2543 = vxpose.xlu0.b32.cont [2/16] 0.0, 128
  %2544 = vxpose.xlu0.b32.cont [3/16] 0.0, 128
  %2545 = vxpose.xlu0.b32.cont [4/16] 0.0, 128
  %2546 = vxpose.xlu0.b32.cont [5/16] 0.0, 128
  %2547 = vxpose.xlu0.b32.cont [6/16] 0.0, 128
  %2548 = vxpose.xlu0.b32.cont [7/16] 0.0, 128
  %2549 = vxpose.xlu0.b32.cont [8/16] 0.0, 128
  %2550 = vxpose.xlu0.b32.cont [9/16] 0.0, 128
  %2551 = vxpose.xlu0.b32.cont [10/16] 0.0, 128
  %2552 = vxpose.xlu0.b32.cont [11/16] 0.0, 128
  %2553 = vxpose.xlu0.b32.cont [12/16] 0.0, 128
  %2554 = vxpose.xlu0.b32.cont [13/16] 0.0, 128
  %2555 = vxpose.xlu0.b32.cont [14/16] 0.0, 128
  %2556 = vxpose.xlu0.b32.cont [15/16] 0.0, 128
  %2557 = vxpose.xlu0.b32.end [16/16] 0.0, 128
  %v2558 = vpop.trf.xlu0
  %v2559 = vpop.trf.xlu0
  %v2560 = vpop.trf.xlu0
  %v2561 = vpop.trf.xlu0
  %v2562 = vpop.trf.xlu0
  %v2563 = vpop.trf.xlu0
  %v2564 = vpop.trf.xlu0
  %v2565 = vpop.trf.xlu0
  %v2566 = vpop.trf.xlu0
  %v2567 = vpop.trf.xlu0
  %v2568 = vpop.trf.xlu0
  %v2569 = vpop.trf.xlu0
  %v2570 = vpop.trf.xlu0
  %v2571 = vpop.trf.xlu0
  %v2572 = vpop.trf.xlu0
  %v2573 = vpop.trf.xlu0
  %v2575 = vsel %vm776, %v2558, 0
  %2577 = vmatprep.subr.mxu0 0.0
  %2578 = vmatpush1.msra.mxu0 0.0
  %2579 = vmatprep.subr.mxu0 0.0
  %2580 = vmatpush1.msra.mxu0 0.0
  %2581 = vmatprep.subr.mxu0 0.0
  %2582 = vmatpush1.msra.mxu0 0.0
  %2583 = vmatprep.subr.mxu0 0.0
  %2584 = vmatpush1.msra.mxu0 0.0
  %2585 = vmatprep.subr.mxu0 0.0
  %2586 = vmatpush1.msra.mxu0 0.0
  %2587 = vmatprep.subr.mxu0 0.0
  %2588 = vmatpush1.msra.mxu0 0.0
  %2589 = vmatprep.subr.mxu0 0.0
  %2590 = vmatpush1.msra.mxu0 0.0
  %2591 = vmatprep.subr.mxu0 0.0
  %2592 = vmatpush1.msra.mxu0 0.0
  %2593 = vmatprep.subr.mxu0 0.0
  %2594 = vmatpush1.msra.mxu0 0.0
  %2595 = vmatprep.subr.mxu0 0.0
  %2596 = vmatpush1.msra.mxu0 0.0
  %2597 = vmatprep.subr.mxu0 0.0
  %2598 = vmatpush1.msra.mxu0 0.0
  %2599 = vmatprep.subr.mxu0 0.0
  %2600 = vmatpush1.msra.mxu0 0.0
  %2601 = vmatprep.subr.mxu0 0.0
  %2602 = vmatpush1.msra.mxu0 0.0
  %2603 = vmatprep.subr.mxu0 0.0
  %2604 = vmatpush1.msra.mxu0 0.0
  %2605 = vmatprep.subr.mxu0 0.0
  %2606 = vmatpush1.msra.mxu0 0.0
  %2607 = vmatprep.subr.mxu0 0.0
  %2608 = vmatpush1.msra.mxu0 %v35
  %2609 = vmatprep.subr.mxu0 0.0
  %2610 = vmatpush2.msra.mxu0 0.0
  %2611 = vmatprep.subr.mxu0 0.0
  %2612 = vmatpush2.msra.mxu0 0.0
  %2613 = vmatprep.subr.mxu0 0.0
  %2614 = vmatpush2.msra.mxu0 0.0
  %2615 = vmatprep.subr.mxu0 0.0
  %2616 = vmatpush2.msra.mxu0 0.0
  %2617 = vmatprep.subr.mxu0 0.0
  %2618 = vmatpush2.msra.mxu0 0.0
  %2619 = vmatprep.subr.mxu0 0.0
  %2620 = vmatpush2.msra.mxu0 0.0
  %2621 = vmatprep.subr.mxu0 0.0
  %2622 = vmatpush2.msra.mxu0 0.0
  %2623 = vmatprep.subr.mxu0 0.0
  %2624 = vmatpush2.msra.mxu0 0.0
  %2625 = vmatprep.subr.mxu0 0.0
  %2626 = vmatpush2.msra.mxu0 0.0
  %2627 = vmatprep.subr.mxu0 0.0
  %2628 = vmatpush2.msra.mxu0 0.0
  %2629 = vmatprep.subr.mxu0 0.0
  %2630 = vmatpush2.msra.mxu0 0.0
  %2631 = vmatprep.subr.mxu0 0.0
  %2632 = vmatpush2.msra.mxu0 0.0
  %2633 = vmatprep.subr.mxu0 0.0
  %2634 = vmatpush2.msra.mxu0 0.0
  %2635 = vmatprep.subr.mxu0 0.0
  %2636 = vmatpush2.msra.mxu0 0.0
  %2637 = vmatprep.subr.mxu0 0.0
  %2638 = vmatpush2.msra.mxu0 0.0
  %2639 = vmatprep.subr.mxu0 0.0
  %2640 = vmatpush2.msra.mxu0 0.0
  %2641 = vmatprep.mubr.f32.mxu0 0.0
  %2642 = vmatmul.mubr.f32.gmra.mxu0 %v2575
  %v2643 = vpop.f32.mrf.mxu0
  %v2644 = vadd.f32 0.0, %v2643
  %v2645 = vpop.f32.mrf.mxu0
  %2646 = vdwg.mxu0
  %2647 = vxpose.xlu0.b32.start [1/16] %v1151, 128
  %2648 = vxpose.xlu0.b32.cont [2/16] 0.0, 128
  %2649 = vxpose.xlu0.b32.cont [3/16] 0.0, 128
  %2650 = vxpose.xlu0.b32.cont [4/16] 0.0, 128
  %2651 = vxpose.xlu0.b32.cont [5/16] 0.0, 128
  %2652 = vxpose.xlu0.b32.cont [6/16] 0.0, 128
  %2653 = vxpose.xlu0.b32.cont [7/16] 0.0, 128
  %2654 = vxpose.xlu0.b32.cont [8/16] 0.0, 128
  %2655 = vxpose.xlu0.b32.cont [9/16] 0.0, 128
  %2656 = vxpose.xlu0.b32.cont [10/16] 0.0, 128
  %2657 = vxpose.xlu0.b32.cont [11/16] 0.0, 128
  %2658 = vxpose.xlu0.b32.cont [12/16] 0.0, 128
  %2659 = vxpose.xlu0.b32.cont [13/16] 0.0, 128
  %2660 = vxpose.xlu0.b32.cont [14/16] 0.0, 128
  %2661 = vxpose.xlu0.b32.cont [15/16] 0.0, 128
  %2662 = vxpose.xlu0.b32.end [16/16] 0.0, 128
  %v2663 = vpop.trf.xlu0
  %v2664 = vpop.trf.xlu0
  %v2665 = vpop.trf.xlu0
  %v2666 = vpop.trf.xlu0
  %v2667 = vpop.trf.xlu0
  %v2668 = vpop.trf.xlu0
  %v2669 = vpop.trf.xlu0
  %v2670 = vpop.trf.xlu0
  %v2671 = vpop.trf.xlu0
  %v2672 = vpop.trf.xlu0
  %v2673 = vpop.trf.xlu0
  %v2674 = vpop.trf.xlu0
  %v2675 = vpop.trf.xlu0
  %v2676 = vpop.trf.xlu0
  %v2677 = vpop.trf.xlu0
  %v2678 = vpop.trf.xlu0
  %v2680 = vsel %vm776, %v2663, 0
  %2682 = vmatprep.subr.mxu0 0.0
  %2683 = vmatpush1.msra.mxu0 0.0
  %2684 = vmatprep.subr.mxu0 0.0
  %2685 = vmatpush1.msra.mxu0 0.0
  %2686 = vmatprep.subr.mxu0 0.0
  %2687 = vmatpush1.msra.mxu0 0.0
  %2688 = vmatprep.subr.mxu0 0.0
  %2689 = vmatpush1.msra.mxu0 0.0
  %2690 = vmatprep.subr.mxu0 0.0
  %2691 = vmatpush1.msra.mxu0 0.0
  %2692 = vmatprep.subr.mxu0 0.0
  %2693 = vmatpush1.msra.mxu0 0.0
  %2694 = vmatprep.subr.mxu0 0.0
  %2695 = vmatpush1.msra.mxu0 0.0
  %2696 = vmatprep.subr.mxu0 0.0
  %2697 = vmatpush1.msra.mxu0 0.0
  %2698 = vmatprep.subr.mxu0 0.0
  %2699 = vmatpush1.msra.mxu0 0.0
  %2700 = vmatprep.subr.mxu0 0.0
  %2701 = vmatpush1.msra.mxu0 0.0
  %2702 = vmatprep.subr.mxu0 0.0
  %2703 = vmatpush1.msra.mxu0 0.0
  %2704 = vmatprep.subr.mxu0 0.0
  %2705 = vmatpush1.msra.mxu0 0.0
  %2706 = vmatprep.subr.mxu0 0.0
  %2707 = vmatpush1.msra.mxu0 0.0
  %2708 = vmatprep.subr.mxu0 0.0
  %2709 = vmatpush1.msra.mxu0 0.0
  %2710 = vmatprep.subr.mxu0 0.0
  %2711 = vmatpush1.msra.mxu0 0.0
  %2712 = vmatprep.subr.mxu0 0.0
  %2713 = vmatpush1.msra.mxu0 %v36
  %2714 = vmatprep.subr.mxu0 0.0
  %2715 = vmatpush2.msra.mxu0 0.0
  %2716 = vmatprep.subr.mxu0 0.0
  %2717 = vmatpush2.msra.mxu0 0.0
  %2718 = vmatprep.subr.mxu0 0.0
  %2719 = vmatpush2.msra.mxu0 0.0
  %2720 = vmatprep.subr.mxu0 0.0
  %2721 = vmatpush2.msra.mxu0 0.0
  %2722 = vmatprep.subr.mxu0 0.0
  %2723 = vmatpush2.msra.mxu0 0.0
  %2724 = vmatprep.subr.mxu0 0.0
  %2725 = vmatpush2.msra.mxu0 0.0
  %2726 = vmatprep.subr.mxu0 0.0
  %2727 = vmatpush2.msra.mxu0 0.0
  %2728 = vmatprep.subr.mxu0 0.0
  %2729 = vmatpush2.msra.mxu0 0.0
  %2730 = vmatprep.subr.mxu0 0.0
  %2731 = vmatpush2.msra.mxu0 0.0
  %2732 = vmatprep.subr.mxu0 0.0
  %2733 = vmatpush2.msra.mxu0 0.0
  %2734 = vmatprep.subr.mxu0 0.0
  %2735 = vmatpush2.msra.mxu0 0.0
  %2736 = vmatprep.subr.mxu0 0.0
  %2737 = vmatpush2.msra.mxu0 0.0
  %2738 = vmatprep.subr.mxu0 0.0
  %2739 = vmatpush2.msra.mxu0 0.0
  %2740 = vmatprep.subr.mxu0 0.0
  %2741 = vmatpush2.msra.mxu0 0.0
  %2742 = vmatprep.subr.mxu0 0.0
  %2743 = vmatpush2.msra.mxu0 0.0
  %2744 = vmatprep.subr.mxu0 0.0
  %2745 = vmatpush2.msra.mxu0 0.0
  %2746 = vmatprep.mubr.f32.mxu0 0.0
  %2747 = vmatmul.mubr.f32.gmra.mxu0 %v2680
  %v2748 = vpop.f32.mrf.mxu0
  %v2749 = vadd.f32 0.0, %v2748
  %v2750 = vpop.f32.mrf.mxu0
  %2751 = vdwg.mxu0
  %2752 = vxpose.xlu0.b32.start [1/16] %v1152, 128
  %2753 = vxpose.xlu0.b32.cont [2/16] 0.0, 128
  %2754 = vxpose.xlu0.b32.cont [3/16] 0.0, 128
  %2755 = vxpose.xlu0.b32.cont [4/16] 0.0, 128
  %2756 = vxpose.xlu0.b32.cont [5/16] 0.0, 128
  %2757 = vxpose.xlu0.b32.cont [6/16] 0.0, 128
  %2758 = vxpose.xlu0.b32.cont [7/16] 0.0, 128
  %2759 = vxpose.xlu0.b32.cont [8/16] 0.0, 128
  %2760 = vxpose.xlu0.b32.cont [9/16] 0.0, 128
  %2761 = vxpose.xlu0.b32.cont [10/16] 0.0, 128
  %2762 = vxpose.xlu0.b32.cont [11/16] 0.0, 128
  %2763 = vxpose.xlu0.b32.cont [12/16] 0.0, 128
  %2764 = vxpose.xlu0.b32.cont [13/16] 0.0, 128
  %2765 = vxpose.xlu0.b32.cont [14/16] 0.0, 128
  %2766 = vxpose.xlu0.b32.cont [15/16] 0.0, 128
  %2767 = vxpose.xlu0.b32.end [16/16] 0.0, 128
  %v2768 = vpop.trf.xlu0
  %v2769 = vpop.trf.xlu0
  %v2770 = vpop.trf.xlu0
  %v2771 = vpop.trf.xlu0
  %v2772 = vpop.trf.xlu0
  %v2773 = vpop.trf.xlu0
  %v2774 = vpop.trf.xlu0
  %v2775 = vpop.trf.xlu0
  %v2776 = vpop.trf.xlu0
  %v2777 = vpop.trf.xlu0
  %v2778 = vpop.trf.xlu0
  %v2779 = vpop.trf.xlu0
  %v2780 = vpop.trf.xlu0
  %v2781 = vpop.trf.xlu0
  %v2782 = vpop.trf.xlu0
  %v2783 = vpop.trf.xlu0
  %v2785 = vsel %vm776, %v2768, 0
  %2787 = vmatprep.subr.mxu0 0.0
  %2788 = vmatpush1.msra.mxu0 0.0
  %2789 = vmatprep.subr.mxu0 0.0
  %2790 = vmatpush1.msra.mxu0 0.0
  %2791 = vmatprep.subr.mxu0 0.0
  %2792 = vmatpush1.msra.mxu0 0.0
  %2793 = vmatprep.subr.mxu0 0.0
  %2794 = vmatpush1.msra.mxu0 0.0
  %2795 = vmatprep.subr.mxu0 0.0
  %2796 = vmatpush1.msra.mxu0 0.0
  %2797 = vmatprep.subr.mxu0 0.0
  %2798 = vmatpush1.msra.mxu0 0.0
  %2799 = vmatprep.subr.mxu0 0.0
  %2800 = vmatpush1.msra.mxu0 0.0
  %2801 = vmatprep.subr.mxu0 0.0
  %2802 = vmatpush1.msra.mxu0 0.0
  %2803 = vmatprep.subr.mxu0 0.0
  %2804 = vmatpush1.msra.mxu0 0.0
  %2805 = vmatprep.subr.mxu0 0.0
  %2806 = vmatpush1.msra.mxu0 0.0
  %2807 = vmatprep.subr.mxu0 0.0
  %2808 = vmatpush1.msra.mxu0 0.0
  %2809 = vmatprep.subr.mxu0 0.0
  %2810 = vmatpush1.msra.mxu0 0.0
  %2811 = vmatprep.subr.mxu0 0.0
  %2812 = vmatpush1.msra.mxu0 0.0
  %2813 = vmatprep.subr.mxu0 0.0
  %2814 = vmatpush1.msra.mxu0 0.0
  %2815 = vmatprep.subr.mxu0 0.0
  %2816 = vmatpush1.msra.mxu0 0.0
  %2817 = vmatprep.subr.mxu0 0.0
  %2818 = vmatpush1.msra.mxu0 %v37
  %2819 = vmatprep.subr.mxu0 0.0
  %2820 = vmatpush2.msra.mxu0 0.0
  %2821 = vmatprep.subr.mxu0 0.0
  %2822 = vmatpush2.msra.mxu0 0.0
  %2823 = vmatprep.subr.mxu0 0.0
  %2824 = vmatpush2.msra.mxu0 0.0
  %2825 = vmatprep.subr.mxu0 0.0
  %2826 = vmatpush2.msra.mxu0 0.0
  %2827 = vmatprep.subr.mxu0 0.0
  %2828 = vmatpush2.msra.mxu0 0.0
  %2829 = vmatprep.subr.mxu0 0.0
  %2830 = vmatpush2.msra.mxu0 0.0
  %2831 = vmatprep.subr.mxu0 0.0
  %2832 = vmatpush2.msra.mxu0 0.0
  %2833 = vmatprep.subr.mxu0 0.0
  %2834 = vmatpush2.msra.mxu0 0.0
  %2835 = vmatprep.subr.mxu0 0.0
  %2836 = vmatpush2.msra.mxu0 0.0
  %2837 = vmatprep.subr.mxu0 0.0
  %2838 = vmatpush2.msra.mxu0 0.0
  %2839 = vmatprep.subr.mxu0 0.0
  %2840 = vmatpush2.msra.mxu0 0.0
  %2841 = vmatprep.subr.mxu0 0.0
  %2842 = vmatpush2.msra.mxu0 0.0
  %2843 = vmatprep.subr.mxu0 0.0
  %2844 = vmatpush2.msra.mxu0 0.0
  %2845 = vmatprep.subr.mxu0 0.0
  %2846 = vmatpush2.msra.mxu0 0.0
  %2847 = vmatprep.subr.mxu0 0.0
  %2848 = vmatpush2.msra.mxu0 0.0
  %2849 = vmatprep.subr.mxu0 0.0
  %2850 = vmatpush2.msra.mxu0 0.0
  %2851 = vmatprep.mubr.f32.mxu0 0.0
  %2852 = vmatmul.mubr.f32.gmra.mxu0 %v2785
  %v2853 = vpop.f32.mrf.mxu0
  %v2854 = vadd.f32 0.0, %v2853
  %v2855 = vpop.f32.mrf.mxu0
  %2856 = vdwg.mxu0
  %2857 = vxpose.xlu0.b32.start [1/16] %v1153, 128
  %2858 = vxpose.xlu0.b32.cont [2/16] 0.0, 128
  %2859 = vxpose.xlu0.b32.cont [3/16] 0.0, 128
  %2860 = vxpose.xlu0.b32.cont [4/16] 0.0, 128
  %2861 = vxpose.xlu0.b32.cont [5/16] 0.0, 128
  %2862 = vxpose.xlu0.b32.cont [6/16] 0.0, 128
  %2863 = vxpose.xlu0.b32.cont [7/16] 0.0, 128
  %2864 = vxpose.xlu0.b32.cont [8/16] 0.0, 128
  %2865 = vxpose.xlu0.b32.cont [9/16] 0.0, 128
  %2866 = vxpose.xlu0.b32.cont [10/16] 0.0, 128
  %2867 = vxpose.xlu0.b32.cont [11/16] 0.0, 128
  %2868 = vxpose.xlu0.b32.cont [12/16] 0.0, 128
  %2869 = vxpose.xlu0.b32.cont [13/16] 0.0, 128
  %2870 = vxpose.xlu0.b32.cont [14/16] 0.0, 128
  %2871 = vxpose.xlu0.b32.cont [15/16] 0.0, 128
  %2872 = vxpose.xlu0.b32.end [16/16] 0.0, 128
  %v2873 = vpop.trf.xlu0
  %v2874 = vpop.trf.xlu0
  %v2875 = vpop.trf.xlu0
  %v2876 = vpop.trf.xlu0
  %v2877 = vpop.trf.xlu0
  %v2878 = vpop.trf.xlu0
  %v2879 = vpop.trf.xlu0
  %v2880 = vpop.trf.xlu0
  %v2881 = vpop.trf.xlu0
  %v2882 = vpop.trf.xlu0
  %v2883 = vpop.trf.xlu0
  %v2884 = vpop.trf.xlu0
  %v2885 = vpop.trf.xlu0
  %v2886 = vpop.trf.xlu0
  %v2887 = vpop.trf.xlu0
  %v2888 = vpop.trf.xlu0
  %v2890 = vsel %vm776, %v2873, 0
  %2892 = vmatprep.subr.mxu0 0.0
  %2893 = vmatpush1.msra.mxu0 0.0
  %2894 = vmatprep.subr.mxu0 0.0
  %2895 = vmatpush1.msra.mxu0 0.0
  %2896 = vmatprep.subr.mxu0 0.0
  %2897 = vmatpush1.msra.mxu0 0.0
  %2898 = vmatprep.subr.mxu0 0.0
  %2899 = vmatpush1.msra.mxu0 0.0
  %2900 = vmatprep.subr.mxu0 0.0
  %2901 = vmatpush1.msra.mxu0 0.0
  %2902 = vmatprep.subr.mxu0 0.0
  %2903 = vmatpush1.msra.mxu0 0.0
  %2904 = vmatprep.subr.mxu0 0.0
  %2905 = vmatpush1.msra.mxu0 0.0
  %2906 = vmatprep.subr.mxu0 0.0
  %2907 = vmatpush1.msra.mxu0 0.0
  %2908 = vmatprep.subr.mxu0 0.0
  %2909 = vmatpush1.msra.mxu0 0.0
  %2910 = vmatprep.subr.mxu0 0.0
  %2911 = vmatpush1.msra.mxu0 0.0
  %2912 = vmatprep.subr.mxu0 0.0
  %2913 = vmatpush1.msra.mxu0 0.0
  %2914 = vmatprep.subr.mxu0 0.0
  %2915 = vmatpush1.msra.mxu0 0.0
  %2916 = vmatprep.subr.mxu0 0.0
  %2917 = vmatpush1.msra.mxu0 0.0
  %2918 = vmatprep.subr.mxu0 0.0
  %2919 = vmatpush1.msra.mxu0 0.0
  %2920 = vmatprep.subr.mxu0 0.0
  %2921 = vmatpush1.msra.mxu0 0.0
  %2922 = vmatprep.subr.mxu0 0.0
  %2923 = vmatpush1.msra.mxu0 %v38
  %2924 = vmatprep.subr.mxu0 0.0
  %2925 = vmatpush2.msra.mxu0 0.0
  %2926 = vmatprep.subr.mxu0 0.0
  %2927 = vmatpush2.msra.mxu0 0.0
  %2928 = vmatprep.subr.mxu0 0.0
  %2929 = vmatpush2.msra.mxu0 0.0
  %2930 = vmatprep.subr.mxu0 0.0
  %2931 = vmatpush2.msra.mxu0 0.0
  %2932 = vmatprep.subr.mxu0 0.0
  %2933 = vmatpush2.msra.mxu0 0.0
  %2934 = vmatprep.subr.mxu0 0.0
  %2935 = vmatpush2.msra.mxu0 0.0
  %2936 = vmatprep.subr.mxu0 0.0
  %2937 = vmatpush2.msra.mxu0 0.0
  %2938 = vmatprep.subr.mxu0 0.0
  %2939 = vmatpush2.msra.mxu0 0.0
  %2940 = vmatprep.subr.mxu0 0.0
  %2941 = vmatpush2.msra.mxu0 0.0
  %2942 = vmatprep.subr.mxu0 0.0
  %2943 = vmatpush2.msra.mxu0 0.0
  %2944 = vmatprep.subr.mxu0 0.0
  %2945 = vmatpush2.msra.mxu0 0.0
  %2946 = vmatprep.subr.mxu0 0.0
  %2947 = vmatpush2.msra.mxu0 0.0
  %2948 = vmatprep.subr.mxu0 0.0
  %2949 = vmatpush2.msra.mxu0 0.0
  %2950 = vmatprep.subr.mxu0 0.0
  %2951 = vmatpush2.msra.mxu0 0.0
  %2952 = vmatprep.subr.mxu0 0.0
  %2953 = vmatpush2.msra.mxu0 0.0
  %2954 = vmatprep.subr.mxu0 0.0
  %2955 = vmatpush2.msra.mxu0 0.0
  %2956 = vmatprep.mubr.f32.mxu0 0.0
  %2957 = vmatmul.mubr.f32.gmra.mxu0 %v2890
  %v2958 = vpop.f32.mrf.mxu0
  %v2959 = vadd.f32 0.0, %v2958
  %v2960 = vpop.f32.mrf.mxu0
  %2961 = vdwg.mxu0
  %2962 = vxpose.xlu0.b32.start [1/16] %v1154, 128
  %2963 = vxpose.xlu0.b32.cont [2/16] 0.0, 128
  %2964 = vxpose.xlu0.b32.cont [3/16] 0.0, 128
  %2965 = vxpose.xlu0.b32.cont [4/16] 0.0, 128
  %2966 = vxpose.xlu0.b32.cont [5/16] 0.0, 128
  %2967 = vxpose.xlu0.b32.cont [6/16] 0.0, 128
  %2968 = vxpose.xlu0.b32.cont [7/16] 0.0, 128
  %2969 = vxpose.xlu0.b32.cont [8/16] 0.0, 128
  %2970 = vxpose.xlu0.b32.cont [9/16] 0.0, 128
  %2971 = vxpose.xlu0.b32.cont [10/16] 0.0, 128
  %2972 = vxpose.xlu0.b32.cont [11/16] 0.0, 128
  %2973 = vxpose.xlu0.b32.cont [12/16] 0.0, 128
  %2974 = vxpose.xlu0.b32.cont [13/16] 0.0, 128
  %2975 = vxpose.xlu0.b32.cont [14/16] 0.0, 128
  %2976 = vxpose.xlu0.b32.cont [15/16] 0.0, 128
  %2977 = vxpose.xlu0.b32.end [16/16] 0.0, 128
  %v2978 = vpop.trf.xlu0
  %v2979 = vpop.trf.xlu0
  %v2980 = vpop.trf.xlu0
  %v2981 = vpop.trf.xlu0
  %v2982 = vpop.trf.xlu0
  %v2983 = vpop.trf.xlu0
  %v2984 = vpop.trf.xlu0
  %v2985 = vpop.trf.xlu0
  %v2986 = vpop.trf.xlu0
  %v2987 = vpop.trf.xlu0
  %v2988 = vpop.trf.xlu0
  %v2989 = vpop.trf.xlu0
  %v2990 = vpop.trf.xlu0
  %v2991 = vpop.trf.xlu0
  %v2992 = vpop.trf.xlu0
  %v2993 = vpop.trf.xlu0
  %v2995 = vsel %vm776, %v2978, 0
  %2997 = vmatprep.subr.mxu0 0.0
  %2998 = vmatpush1.msra.mxu0 0.0
  %2999 = vmatprep.subr.mxu0 0.0
  %3000 = vmatpush1.msra.mxu0 0.0
  %3001 = vmatprep.subr.mxu0 0.0
  %3002 = vmatpush1.msra.mxu0 0.0
  %3003 = vmatprep.subr.mxu0 0.0
  %3004 = vmatpush1.msra.mxu0 0.0
  %3005 = vmatprep.subr.mxu0 0.0
  %3006 = vmatpush1.msra.mxu0 0.0
  %3007 = vmatprep.subr.mxu0 0.0
  %3008 = vmatpush1.msra.mxu0 0.0
  %3009 = vmatprep.subr.mxu0 0.0
  %3010 = vmatpush1.msra.mxu0 0.0
  %3011 = vmatprep.subr.mxu0 0.0
  %3012 = vmatpush1.msra.mxu0 0.0
  %3013 = vmatprep.subr.mxu0 0.0
  %3014 = vmatpush1.msra.mxu0 0.0
  %3015 = vmatprep.subr.mxu0 0.0
  %3016 = vmatpush1.msra.mxu0 0.0
  %3017 = vmatprep.subr.mxu0 0.0
  %3018 = vmatpush1.msra.mxu0 0.0
  %3019 = vmatprep.subr.mxu0 0.0
  %3020 = vmatpush1.msra.mxu0 0.0
  %3021 = vmatprep.subr.mxu0 0.0
  %3022 = vmatpush1.msra.mxu0 0.0
  %3023 = vmatprep.subr.mxu0 0.0
  %3024 = vmatpush1.msra.mxu0 0.0
  %3025 = vmatprep.subr.mxu0 0.0
  %3026 = vmatpush1.msra.mxu0 0.0
  %3027 = vmatprep.subr.mxu0 0.0
  %3028 = vmatpush1.msra.mxu0 %v39
  %3029 = vmatprep.subr.mxu0 0.0
  %3030 = vmatpush2.msra.mxu0 0.0
  %3031 = vmatprep.subr.mxu0 0.0
  %3032 = vmatpush2.msra.mxu0 0.0
  %3033 = vmatprep.subr.mxu0 0.0
  %3034 = vmatpush2.msra.mxu0 0.0
  %3035 = vmatprep.subr.mxu0 0.0
  %3036 = vmatpush2.msra.mxu0 0.0
  %3037 = vmatprep.subr.mxu0 0.0
  %3038 = vmatpush2.msra.mxu0 0.0
  %3039 = vmatprep.subr.mxu0 0.0
  %3040 = vmatpush2.msra.mxu0 0.0
  %3041 = vmatprep.subr.mxu0 0.0
  %3042 = vmatpush2.msra.mxu0 0.0
  %3043 = vmatprep.subr.mxu0 0.0
  %3044 = vmatpush2.msra.mxu0 0.0
  %3045 = vmatprep.subr.mxu0 0.0
  %3046 = vmatpush2.msra.mxu0 0.0
  %3047 = vmatprep.subr.mxu0 0.0
  %3048 = vmatpush2.msra.mxu0 0.0
  %3049 = vmatprep.subr.mxu0 0.0
  %3050 = vmatpush2.msra.mxu0 0.0
  %3051 = vmatprep.subr.mxu0 0.0
  %3052 = vmatpush2.msra.mxu0 0.0
  %3053 = vmatprep.subr.mxu0 0.0
  %3054 = vmatpush2.msra.mxu0 0.0
  %3055 = vmatprep.subr.mxu0 0.0
  %3056 = vmatpush2.msra.mxu0 0.0
  %3057 = vmatprep.subr.mxu0 0.0
  %3058 = vmatpush2.msra.mxu0 0.0
  %3059 = vmatprep.subr.mxu0 0.0
  %3060 = vmatpush2.msra.mxu0 0.0
  %3061 = vmatprep.mubr.f32.mxu0 0.0
  %3062 = vmatmul.mubr.f32.gmra.mxu0 %v2995
  %v3063 = vpop.f32.mrf.mxu0
  %v3064 = vadd.f32 0.0, %v3063
  %v3065 = vpop.f32.mrf.mxu0
  %3066 = vdwg.mxu0
  %3067 = vxpose.xlu0.b32.start [1/16] %v1155, 128
  %3068 = vxpose.xlu0.b32.cont [2/16] 0.0, 128
  %3069 = vxpose.xlu0.b32.cont [3/16] 0.0, 128
  %3070 = vxpose.xlu0.b32.cont [4/16] 0.0, 128
  %3071 = vxpose.xlu0.b32.cont [5/16] 0.0, 128
  %3072 = vxpose.xlu0.b32.cont [6/16] 0.0, 128
  %3073 = vxpose.xlu0.b32.cont [7/16] 0.0, 128
  %3074 = vxpose.xlu0.b32.cont [8/16] 0.0, 128
  %3075 = vxpose.xlu0.b32.cont [9/16] 0.0, 128
  %3076 = vxpose.xlu0.b32.cont [10/16] 0.0, 128
  %3077 = vxpose.xlu0.b32.cont [11/16] 0.0, 128
  %3078 = vxpose.xlu0.b32.cont [12/16] 0.0, 128
  %3079 = vxpose.xlu0.b32.cont [13/16] 0.0, 128
  %3080 = vxpose.xlu0.b32.cont [14/16] 0.0, 128
  %3081 = vxpose.xlu0.b32.cont [15/16] 0.0, 128
  %3082 = vxpose.xlu0.b32.end [16/16] 0.0, 128
  %v3083 = vpop.trf.xlu0
  %v3084 = vpop.trf.xlu0
  %v3085 = vpop.trf.xlu0
  %v3086 = vpop.trf.xlu0
  %v3087 = vpop.trf.xlu0
  %v3088 = vpop.trf.xlu0
  %v3089 = vpop.trf.xlu0
  %v3090 = vpop.trf.xlu0
  %v3091 = vpop.trf.xlu0
  %v3092 = vpop.trf.xlu0
  %v3093 = vpop.trf.xlu0
  %v3094 = vpop.trf.xlu0
  %v3095 = vpop.trf.xlu0
  %v3096 = vpop.trf.xlu0
  %v3097 = vpop.trf.xlu0
  %v3098 = vpop.trf.xlu0
  %v3100 = vsel %vm776, %v3083, 0
  %3102 = vmatprep.subr.mxu0 0.0
  %3103 = vmatpush1.msra.mxu0 0.0
  %3104 = vmatprep.subr.mxu0 0.0
  %3105 = vmatpush1.msra.mxu0 0.0
  %3106 = vmatprep.subr.mxu0 0.0
  %3107 = vmatpush1.msra.mxu0 0.0
  %3108 = vmatprep.subr.mxu0 0.0
  %3109 = vmatpush1.msra.mxu0 0.0
  %3110 = vmatprep.subr.mxu0 0.0
  %3111 = vmatpush1.msra.mxu0 0.0
  %3112 = vmatprep.subr.mxu0 0.0
  %3113 = vmatpush1.msra.mxu0 0.0
  %3114 = vmatprep.subr.mxu0 0.0
  %3115 = vmatpush1.msra.mxu0 0.0
  %3116 = vmatprep.subr.mxu0 0.0
  %3117 = vmatpush1.msra.mxu0 0.0
  %3118 = vmatprep.subr.mxu0 0.0
  %3119 = vmatpush1.msra.mxu0 0.0
  %3120 = vmatprep.subr.mxu0 0.0
  %3121 = vmatpush1.msra.mxu0 0.0
  %3122 = vmatprep.subr.mxu0 0.0
  %3123 = vmatpush1.msra.mxu0 0.0
  %3124 = vmatprep.subr.mxu0 0.0
  %3125 = vmatpush1.msra.mxu0 0.0
  %3126 = vmatprep.subr.mxu0 0.0
  %3127 = vmatpush1.msra.mxu0 0.0
  %3128 = vmatprep.subr.mxu0 0.0
  %3129 = vmatpush1.msra.mxu0 0.0
  %3130 = vmatprep.subr.mxu0 0.0
  %3131 = vmatpush1.msra.mxu0 0.0
  %3132 = vmatprep.subr.mxu0 0.0
  %3133 = vmatpush1.msra.mxu0 %v40
  %3134 = vmatprep.subr.mxu0 0.0
  %3135 = vmatpush2.msra.mxu0 0.0
  %3136 = vmatprep.subr.mxu0 0.0
  %3137 = vmatpush2.msra.mxu0 0.0
  %3138 = vmatprep.subr.mxu0 0.0
  %3139 = vmatpush2.msra.mxu0 0.0
  %3140 = vmatprep.subr.mxu0 0.0
  %3141 = vmatpush2.msra.mxu0 0.0
  %3142 = vmatprep.subr.mxu0 0.0
  %3143 = vmatpush2.msra.mxu0 0.0
  %3144 = vmatprep.subr.mxu0 0.0
  %3145 = vmatpush2.msra.mxu0 0.0
  %3146 = vmatprep.subr.mxu0 0.0
  %3147 = vmatpush2.msra.mxu0 0.0
  %3148 = vmatprep.subr.mxu0 0.0
  %3149 = vmatpush2.msra.mxu0 0.0
  %3150 = vmatprep.subr.mxu0 0.0
  %3151 = vmatpush2.msra.mxu0 0.0
  %3152 = vmatprep.subr.mxu0 0.0
  %3153 = vmatpush2.msra.mxu0 0.0
  %3154 = vmatprep.subr.mxu0 0.0
  %3155 = vmatpush2.msra.mxu0 0.0
  %3156 = vmatprep.subr.mxu0 0.0
  %3157 = vmatpush2.msra.mxu0 0.0
  %3158 = vmatprep.subr.mxu0 0.0
  %3159 = vmatpush2.msra.mxu0 0.0
  %3160 = vmatprep.subr.mxu0 0.0
  %3161 = vmatpush2.msra.mxu0 0.0
  %3162 = vmatprep.subr.mxu0 0.0
  %3163 = vmatpush2.msra.mxu0 0.0
  %3164 = vmatprep.subr.mxu0 0.0
  %3165 = vmatpush2.msra.mxu0 0.0
  %3166 = vmatprep.mubr.f32.mxu0 0.0
  %3167 = vmatmul.mubr.f32.gmra.mxu0 %v3100
  %v3168 = vpop.f32.mrf.mxu0
  %v3169 = vadd.f32 0.0, %v3168
  %v3170 = vpop.f32.mrf.mxu0
  %3171 = vdwg.mxu0
  %3172 = vxpose.xlu0.b32.start [1/16] %v1156, 128
  %3173 = vxpose.xlu0.b32.cont [2/16] 0.0, 128
  %3174 = vxpose.xlu0.b32.cont [3/16] 0.0, 128
  %3175 = vxpose.xlu0.b32.cont [4/16] 0.0, 128
  %3176 = vxpose.xlu0.b32.cont [5/16] 0.0, 128
  %3177 = vxpose.xlu0.b32.cont [6/16] 0.0, 128
  %3178 = vxpose.xlu0.b32.cont [7/16] 0.0, 128
  %3179 = vxpose.xlu0.b32.cont [8/16] 0.0, 128
  %3180 = vxpose.xlu0.b32.cont [9/16] 0.0, 128
  %3181 = vxpose.xlu0.b32.cont [10/16] 0.0, 128
  %3182 = vxpose.xlu0.b32.cont [11/16] 0.0, 128
  %3183 = vxpose.xlu0.b32.cont [12/16] 0.0, 128
  %3184 = vxpose.xlu0.b32.cont [13/16] 0.0, 128
  %3185 = vxpose.xlu0.b32.cont [14/16] 0.0, 128
  %3186 = vxpose.xlu0.b32.cont [15/16] 0.0, 128
  %3187 = vxpose.xlu0.b32.end [16/16] 0.0, 128
  %v3188 = vpop.trf.xlu0
  %v3189 = vpop.trf.xlu0
  %v3190 = vpop.trf.xlu0
  %v3191 = vpop.trf.xlu0
  %v3192 = vpop.trf.xlu0
  %v3193 = vpop.trf.xlu0
  %v3194 = vpop.trf.xlu0
  %v3195 = vpop.trf.xlu0
  %v3196 = vpop.trf.xlu0
  %v3197 = vpop.trf.xlu0
  %v3198 = vpop.trf.xlu0
  %v3199 = vpop.trf.xlu0
  %v3200 = vpop.trf.xlu0
  %v3201 = vpop.trf.xlu0
  %v3202 = vpop.trf.xlu0
  %v3203 = vpop.trf.xlu0
  %v3205 = vsel %vm776, %v3188, 0
  %3207 = vmatprep.subr.mxu0 0.0
  %3208 = vmatpush1.msra.mxu0 0.0
  %3209 = vmatprep.subr.mxu0 0.0
  %3210 = vmatpush1.msra.mxu0 0.0
  %3211 = vmatprep.subr.mxu0 0.0
  %3212 = vmatpush1.msra.mxu0 0.0
  %3213 = vmatprep.subr.mxu0 0.0
  %3214 = vmatpush1.msra.mxu0 0.0
  %3215 = vmatprep.subr.mxu0 0.0
  %3216 = vmatpush1.msra.mxu0 0.0
  %3217 = vmatprep.subr.mxu0 0.0
  %3218 = vmatpush1.msra.mxu0 0.0
  %3219 = vmatprep.subr.mxu0 0.0
  %3220 = vmatpush1.msra.mxu0 0.0
  %3221 = vmatprep.subr.mxu0 0.0
  %3222 = vmatpush1.msra.mxu0 0.0
  %3223 = vmatprep.subr.mxu0 0.0
  %3224 = vmatpush1.msra.mxu0 0.0
  %3225 = vmatprep.subr.mxu0 0.0
  %3226 = vmatpush1.msra.mxu0 0.0
  %3227 = vmatprep.subr.mxu0 0.0
  %3228 = vmatpush1.msra.mxu0 0.0
  %3229 = vmatprep.subr.mxu0 0.0
  %3230 = vmatpush1.msra.mxu0 0.0
  %3231 = vmatprep.subr.mxu0 0.0
  %3232 = vmatpush1.msra.mxu0 0.0
  %3233 = vmatprep.subr.mxu0 0.0
  %3234 = vmatpush1.msra.mxu0 0.0
  %3235 = vmatprep.subr.mxu0 0.0
  %3236 = vmatpush1.msra.mxu0 0.0
  %3237 = vmatprep.subr.mxu0 0.0
  %3238 = vmatpush1.msra.mxu0 %v41
  %3239 = vmatprep.subr.mxu0 0.0
  %3240 = vmatpush2.msra.mxu0 0.0
  %3241 = vmatprep.subr.mxu0 0.0
  %3242 = vmatpush2.msra.mxu0 0.0
  %3243 = vmatprep.subr.mxu0 0.0
  %3244 = vmatpush2.msra.mxu0 0.0
  %3245 = vmatprep.subr.mxu0 0.0
  %3246 = vmatpush2.msra.mxu0 0.0
  %3247 = vmatprep.subr.mxu0 0.0
  %3248 = vmatpush2.msra.mxu0 0.0
  %3249 = vmatprep.subr.mxu0 0.0
  %3250 = vmatpush2.msra.mxu0 0.0
  %3251 = vmatprep.subr.mxu0 0.0
  %3252 = vmatpush2.msra.mxu0 0.0
  %3253 = vmatprep.subr.mxu0 0.0
  %3254 = vmatpush2.msra.mxu0 0.0
  %3255 = vmatprep.subr.mxu0 0.0
  %3256 = vmatpush2.msra.mxu0 0.0
  %3257 = vmatprep.subr.mxu0 0.0
  %3258 = vmatpush2.msra.mxu0 0.0
  %3259 = vmatprep.subr.mxu0 0.0
  %3260 = vmatpush2.msra.mxu0 0.0
  %3261 = vmatprep.subr.mxu0 0.0
  %3262 = vmatpush2.msra.mxu0 0.0
  %3263 = vmatprep.subr.mxu0 0.0
  %3264 = vmatpush2.msra.mxu0 0.0
  %3265 = vmatprep.subr.mxu0 0.0
  %3266 = vmatpush2.msra.mxu0 0.0
  %3267 = vmatprep.subr.mxu0 0.0
  %3268 = vmatpush2.msra.mxu0 0.0
  %3269 = vmatprep.subr.mxu0 0.0
  %3270 = vmatpush2.msra.mxu0 0.0
  %3271 = vmatprep.mubr.f32.mxu0 0.0
  %3272 = vmatmul.mubr.f32.gmra.mxu0 %v3205
  %v3273 = vpop.f32.mrf.mxu0
  %v3274 = vadd.f32 0.0, %v3273
  %v3275 = vpop.f32.mrf.mxu0
  %3276 = vdwg.mxu0
  %v3277 = vcombine.low %v1279, %v1489
  %v3278 = vcombine.high %v1279, %v1489
  %v3280 = vunpack.c.l.s4 1983009808
  %v3281 = vunpack.c.0.s8 %v3280
  %v3282 = vlaneseq
  %v3283 = vshrl.u32 %v3282, 7
  %v3284 = vsub.s32 %v3281, %v3283
  %v3285 = vrot.slane %v3277, %v3284
  %v3287 = vunpack.c.l.s4 1983009808
  %v3288 = vunpack.c.0.s8 %v3287
  %v3289 = vlaneseq
  %v3290 = vshrl.u32 %v3289, 7
  %v3291 = vsub.s32 %v3288, %v3290
  %v3292 = vrot.slane %v3278, %v3291
  %v3293 = vcombine.low %v1384, %v1594
  %v3294 = vcombine.high %v1384, %v1594
  %v3296 = vunpack.c.l.s4 1983009808
  %v3297 = vunpack.c.0.s8 %v3296
  %v3298 = vlaneseq
  %v3299 = vshrl.u32 %v3298, 7
  %v3300 = vsub.s32 %v3297, %v3299
  %v3301 = vrot.slane %v3293, %v3300
  %v3303 = vunpack.c.l.s4 1983009808
  %v3304 = vunpack.c.0.s8 %v3303
  %v3305 = vlaneseq
  %v3306 = vshrl.u32 %v3305, 7
  %v3307 = vsub.s32 %v3304, %v3306
  %v3308 = vrot.slane %v3294, %v3307
  %v3309 = vcombine.low %v1699, %v1909
  %v3310 = vcombine.high %v1699, %v1909
  %v3312 = vunpack.c.l.s4 1983009808
  %v3313 = vunpack.c.0.s8 %v3312
  %v3314 = vlaneseq
  %v3315 = vshrl.u32 %v3314, 7
  %v3316 = vsub.s32 %v3313, %v3315
  %v3317 = vrot.slane %v3309, %v3316
  %v3319 = vunpack.c.l.s4 1983009808
  %v3320 = vunpack.c.0.s8 %v3319
  %v3321 = vlaneseq
  %v3322 = vshrl.u32 %v3321, 7
  %v3323 = vsub.s32 %v3320, %v3322
  %v3324 = vrot.slane %v3310, %v3323
  %v3325 = vcombine.low %v1804, %v2014
  %v3326 = vcombine.high %v1804, %v2014
  %v3328 = vunpack.c.l.s4 1983009808
  %v3329 = vunpack.c.0.s8 %v3328
  %v3330 = vlaneseq
  %v3331 = vshrl.u32 %v3330, 7
  %v3332 = vsub.s32 %v3329, %v3331
  %v3333 = vrot.slane %v3325, %v3332
  %v3335 = vunpack.c.l.s4 1983009808
  %v3336 = vunpack.c.0.s8 %v3335
  %v3337 = vlaneseq
  %v3338 = vshrl.u32 %v3337, 7
  %v3339 = vsub.s32 %v3336, %v3338
  %v3340 = vrot.slane %v3326, %v3339
  %v3341 = vcombine.low %v3285, %v3301
  %v3342 = vcombine.high %v3285, %v3301
  %v3344 = vunpack.c.l.s4 1934713408
  %v3345 = vunpack.c.0.s8 %v3344
  %v3346 = vlaneseq
  %v3347 = vshrl.u32 %v3346, 7
  %v3348 = vsub.s32 %v3345, %v3347
  %v3349 = vrot.slane %v3341, %v3348
  %v3351 = vunpack.c.l.s4 1934713408
  %v3352 = vunpack.c.0.s8 %v3351
  %v3353 = vlaneseq
  %v3354 = vshrl.u32 %v3353, 7
  %v3355 = vsub.s32 %v3352, %v3354
  %v3356 = vrot.slane %v3342, %v3355
  %v3357 = vcombine.low %v3292, %v3308
  %v3358 = vcombine.high %v3292, %v3308
  %v3360 = vunpack.c.l.s4 1934713408
  %v3361 = vunpack.c.0.s8 %v3360
  %v3362 = vlaneseq
  %v3363 = vshrl.u32 %v3362, 7
  %v3364 = vsub.s32 %v3361, %v3363
  %v3365 = vrot.slane %v3357, %v3364
  %v3367 = vunpack.c.l.s4 1934713408
  %v3368 = vunpack.c.0.s8 %v3367
  %v3369 = vlaneseq
  %v3370 = vshrl.u32 %v3369, 7
  %v3371 = vsub.s32 %v3368, %v3370
  %v3372 = vrot.slane %v3358, %v3371
  %v3373 = vcombine.low %v3317, %v3333
  %v3374 = vcombine.high %v3317, %v3333
  %v3376 = vunpack.c.l.s4 1934713408
  %v3377 = vunpack.c.0.s8 %v3376
  %v3378 = vlaneseq
  %v3379 = vshrl.u32 %v3378, 7
  %v3380 = vsub.s32 %v3377, %v3379
  %v3381 = vrot.slane %v3373, %v3380
  %v3383 = vunpack.c.l.s4 1934713408
  %v3384 = vunpack.c.0.s8 %v3383
  %v3385 = vlaneseq
  %v3386 = vshrl.u32 %v3385, 7
  %v3387 = vsub.s32 %v3384, %v3386
  %v3388 = vrot.slane %v3374, %v3387
  %v3389 = vcombine.low %v3324, %v3340
  %v3390 = vcombine.high %v3324, %v3340
  %v3392 = vunpack.c.l.s4 1934713408
  %v3393 = vunpack.c.0.s8 %v3392
  %v3394 = vlaneseq
  %v3395 = vshrl.u32 %v3394, 7
  %v3396 = vsub.s32 %v3393, %v3395
  %v3397 = vrot.slane %v3389, %v3396
  %v3399 = vunpack.c.l.s4 1934713408
  %v3400 = vunpack.c.0.s8 %v3399
  %v3401 = vlaneseq
  %v3402 = vshrl.u32 %v3401, 7
  %v3403 = vsub.s32 %v3400, %v3402
  %v3404 = vrot.slane %v3390, %v3403
  %v3405 = vcombine.low %v3349, %v3381
  %v3406 = vcombine.high %v3349, %v3381
  %v3407 = vcombine.low %v3356, %v3388
  %v3408 = vcombine.high %v3356, %v3388
  %v3409 = vcombine.low %v3365, %v3397
  %v3410 = vcombine.high %v3365, %v3397
  %v3411 = vcombine.low %v3372, %v3404
  %v3412 = vcombine.high %v3372, %v3404
  %v3413 = vcombine.low %v2119, %v2329
  %v3414 = vcombine.high %v2119, %v2329
  %v3416 = vunpack.c.l.s4 1983009808
  %v3417 = vunpack.c.0.s8 %v3416
  %v3418 = vlaneseq
  %v3419 = vshrl.u32 %v3418, 7
  %v3420 = vsub.s32 %v3417, %v3419
  %v3421 = vrot.slane %v3413, %v3420
  %v3423 = vunpack.c.l.s4 1983009808
  %v3424 = vunpack.c.0.s8 %v3423
  %v3425 = vlaneseq
  %v3426 = vshrl.u32 %v3425, 7
  %v3427 = vsub.s32 %v3424, %v3426
  %v3428 = vrot.slane %v3414, %v3427
  %v3429 = vcombine.low %v2224, %v2434
  %v3430 = vcombine.high %v2224, %v2434
  %v3432 = vunpack.c.l.s4 1983009808
  %v3433 = vunpack.c.0.s8 %v3432
  %v3434 = vlaneseq
  %v3435 = vshrl.u32 %v3434, 7
  %v3436 = vsub.s32 %v3433, %v3435
  %v3437 = vrot.slane %v3429, %v3436
  %v3439 = vunpack.c.l.s4 1983009808
  %v3440 = vunpack.c.0.s8 %v3439
  %v3441 = vlaneseq
  %v3442 = vshrl.u32 %v3441, 7
  %v3443 = vsub.s32 %v3440, %v3442
  %v3444 = vrot.slane %v3430, %v3443
  %v3445 = vcombine.low %v2539, %v2749
  %v3446 = vcombine.high %v2539, %v2749
  %v3448 = vunpack.c.l.s4 1983009808
  %v3449 = vunpack.c.0.s8 %v3448
  %v3450 = vlaneseq
  %v3451 = vshrl.u32 %v3450, 7
  %v3452 = vsub.s32 %v3449, %v3451
  %v3453 = vrot.slane %v3445, %v3452
  %v3455 = vunpack.c.l.s4 1983009808
  %v3456 = vunpack.c.0.s8 %v3455
  %v3457 = vlaneseq
  %v3458 = vshrl.u32 %v3457, 7
  %v3459 = vsub.s32 %v3456, %v3458
  %v3460 = vrot.slane %v3446, %v3459
  %v3461 = vcombine.low %v2644, %v2854
  %v3462 = vcombine.high %v2644, %v2854
  %v3464 = vunpack.c.l.s4 1983009808
  %v3465 = vunpack.c.0.s8 %v3464
  %v3466 = vlaneseq
  %v3467 = vshrl.u32 %v3466, 7
  %v3468 = vsub.s32 %v3465, %v3467
  %v3469 = vrot.slane %v3461, %v3468
  %v3471 = vunpack.c.l.s4 1983009808
  %v3472 = vunpack.c.0.s8 %v3471
  %v3473 = vlaneseq
  %v3474 = vshrl.u32 %v3473, 7
  %v3475 = vsub.s32 %v3472, %v3474
  %v3476 = vrot.slane %v3462, %v3475
  %v3477 = vcombine.low %v3421, %v3437
  %v3478 = vcombine.high %v3421, %v3437
  %v3480 = vunpack.c.l.s4 1934713408
  %v3481 = vunpack.c.0.s8 %v3480
  %v3482 = vlaneseq
  %v3483 = vshrl.u32 %v3482, 7
  %v3484 = vsub.s32 %v3481, %v3483
  %v3485 = vrot.slane %v3477, %v3484
  %v3487 = vunpack.c.l.s4 1934713408
  %v3488 = vunpack.c.0.s8 %v3487
  %v3489 = vlaneseq
  %v3490 = vshrl.u32 %v3489, 7
  %v3491 = vsub.s32 %v3488, %v3490
  %v3492 = vrot.slane %v3478, %v3491
  %v3493 = vcombine.low %v3428, %v3444
  %v3494 = vcombine.high %v3428, %v3444
  %v3496 = vunpack.c.l.s4 1934713408
  %v3497 = vunpack.c.0.s8 %v3496
  %v3498 = vlaneseq
  %v3499 = vshrl.u32 %v3498, 7
  %v3500 = vsub.s32 %v3497, %v3499
  %v3501 = vrot.slane %v3493, %v3500
  %v3503 = vunpack.c.l.s4 1934713408
  %v3504 = vunpack.c.0.s8 %v3503
  %v3505 = vlaneseq
  %v3506 = vshrl.u32 %v3505, 7
  %v3507 = vsub.s32 %v3504, %v3506
  %v3508 = vrot.slane %v3494, %v3507
  %v3509 = vcombine.low %v3453, %v3469
  %v3510 = vcombine.high %v3453, %v3469
  %v3512 = vunpack.c.l.s4 1934713408
  %v3513 = vunpack.c.0.s8 %v3512
  %v3514 = vlaneseq
  %v3515 = vshrl.u32 %v3514, 7
  %v3516 = vsub.s32 %v3513, %v3515
  %v3517 = vrot.slane %v3509, %v3516
  %v3519 = vunpack.c.l.s4 1934713408
  %v3520 = vunpack.c.0.s8 %v3519
  %v3521 = vlaneseq
  %v3522 = vshrl.u32 %v3521, 7
  %v3523 = vsub.s32 %v3520, %v3522
  %v3524 = vrot.slane %v3510, %v3523
  %v3525 = vcombine.low %v3460, %v3476
  %v3526 = vcombine.high %v3460, %v3476
  %v3528 = vunpack.c.l.s4 1934713408
  %v3529 = vunpack.c.0.s8 %v3528
  %v3530 = vlaneseq
  %v3531 = vshrl.u32 %v3530, 7
  %v3532 = vsub.s32 %v3529, %v3531
  %v3533 = vrot.slane %v3525, %v3532
  %v3535 = vunpack.c.l.s4 1934713408
  %v3536 = vunpack.c.0.s8 %v3535
  %v3537 = vlaneseq
  %v3538 = vshrl.u32 %v3537, 7
  %v3539 = vsub.s32 %v3536, %v3538
  %v3540 = vrot.slane %v3526, %v3539
  %v3541 = vcombine.low %v3485, %v3517
  %v3542 = vcombine.high %v3485, %v3517
  %v3543 = vcombine.low %v3492, %v3524
  %v3544 = vcombine.high %v3492, %v3524
  %v3545 = vcombine.low %v3501, %v3533
  %v3546 = vcombine.high %v3501, %v3533
  %v3547 = vcombine.low %v3508, %v3540
  %v3548 = vcombine.high %v3508, %v3540
  %v3549 = vcombine.low %v2959, %v3169
  %v3550 = vcombine.high %v2959, %v3169
  %v3552 = vunpack.c.l.s4 1983009808
  %v3553 = vunpack.c.0.s8 %v3552
  %v3554 = vlaneseq
  %v3555 = vshrl.u32 %v3554, 7
  %v3556 = vsub.s32 %v3553, %v3555
  %v3557 = vrot.slane %v3549, %v3556
  %v3559 = vunpack.c.l.s4 1983009808
  %v3560 = vunpack.c.0.s8 %v3559
  %v3561 = vlaneseq
  %v3562 = vshrl.u32 %v3561, 7
  %v3563 = vsub.s32 %v3560, %v3562
  %v3564 = vrot.slane %v3550, %v3563
  %v3565 = vcombine.low %v3064, %v3274
  %v3566 = vcombine.high %v3064, %v3274
  %v3568 = vunpack.c.l.s4 1983009808
  %v3569 = vunpack.c.0.s8 %v3568
  %v3570 = vlaneseq
  %v3571 = vshrl.u32 %v3570, 7
  %v3572 = vsub.s32 %v3569, %v3571
  %v3573 = vrot.slane %v3565, %v3572
  %v3575 = vunpack.c.l.s4 1983009808
  %v3576 = vunpack.c.0.s8 %v3575
  %v3577 = vlaneseq
  %v3578 = vshrl.u32 %v3577, 7
  %v3579 = vsub.s32 %v3576, %v3578
  %v3580 = vrot.slane %v3566, %v3579
  %v3581 = vcombine.low %v3557, %v3573
  %v3582 = vcombine.high %v3557, %v3573
  %v3584 = vunpack.c.l.s4 1934713408
  %v3585 = vunpack.c.0.s8 %v3584
  %v3586 = vlaneseq
  %v3587 = vshrl.u32 %v3586, 7
  %v3588 = vsub.s32 %v3585, %v3587
  %v3589 = vrot.slane %v3581, %v3588
  %v3591 = vunpack.c.l.s4 1934713408
  %v3592 = vunpack.c.0.s8 %v3591
  %v3593 = vlaneseq
  %v3594 = vshrl.u32 %v3593, 7
  %v3595 = vsub.s32 %v3592, %v3594
  %v3596 = vrot.slane %v3582, %v3595
  %v3597 = vcombine.low %v3564, %v3580
  %v3598 = vcombine.high %v3564, %v3580
  %v3600 = vunpack.c.l.s4 1934713408
  %v3601 = vunpack.c.0.s8 %v3600
  %v3602 = vlaneseq
  %v3603 = vshrl.u32 %v3602, 7
  %v3604 = vsub.s32 %v3601, %v3603
  %v3605 = vrot.slane %v3597, %v3604
  %v3607 = vunpack.c.l.s4 1934713408
  %v3608 = vunpack.c.0.s8 %v3607
  %v3609 = vlaneseq
  %v3610 = vshrl.u32 %v3609, 7
  %v3611 = vsub.s32 %v3608, %v3610
  %v3612 = vrot.slane %v3598, %v3611
  %v3613 = vcombine.high %v3589, 0.0
  %v3614 = vcombine.high %v3596, 0.0
  %v3615 = vcombine.high %v3605, 0.0
  %v3616 = vcombine.high %v3612, 0.0
  %3620 = vrot.lane.b32.xlu0 %v3406, 32
  %v3621 = vpop.permute.xlu0 %3620
  %3622 = vrot.lane.b32.xlu0 %v3542, 32
  %v3623 = vpop.permute.xlu0 %3622
  %3624 = vrot.lane.b32.xlu0 %v3613, 32
  %v3625 = vpop.permute.xlu0 %3624
  %3632 = vrot.lane.b32.xlu0 %v3407, 64
  %v3633 = vpop.permute.xlu0 %3632
  %3634 = vrot.lane.b32.xlu0 %v3543, 64
  %v3635 = vpop.permute.xlu0 %3634
  %3636 = vrot.lane.b32.xlu0 %v3596, 64
  %v3637 = vpop.permute.xlu0 %3636
  %3644 = vrot.lane.b32.xlu0 %v3408, 96
  %v3645 = vpop.permute.xlu0 %3644
  %3646 = vrot.lane.b32.xlu0 %v3544, 96
  %v3647 = vpop.permute.xlu0 %3646
  %3648 = vrot.lane.b32.xlu0 %v3614, 96
  %v3649 = vpop.permute.xlu0 %3648
  %3656 = vrot.lane.b32.xlu0 %v3410, 32
  %v3657 = vpop.permute.xlu0 %3656
  %3658 = vrot.lane.b32.xlu0 %v3546, 32
  %v3659 = vpop.permute.xlu0 %3658
  %3660 = vrot.lane.b32.xlu0 %v3615, 32
  %v3661 = vpop.permute.xlu0 %3660
  %3668 = vrot.lane.b32.xlu0 %v3411, 64
  %v3669 = vpop.permute.xlu0 %3668
  %3670 = vrot.lane.b32.xlu0 %v3547, 64
  %v3671 = vpop.permute.xlu0 %3670
  %3672 = vrot.lane.b32.xlu0 %v3612, 64
  %v3673 = vpop.permute.xlu0 %3672
  %3680 = vrot.lane.b32.xlu0 %v3412, 96
  %v3681 = vpop.permute.xlu0 %3680
  %3682 = vrot.lane.b32.xlu0 %v3548, 96
  %v3683 = vpop.permute.xlu0 %3682
  %3684 = vrot.lane.b32.xlu0 %v3616, 96
  %v3685 = vpop.permute.xlu0 %3684
  %v3689 = vsel %vm46, %v3405, %v3621
  %v3690 = vsel %vm46, %v3541, %v3623
  %v3691 = vsel %vm46, %v3589, %v3625
  %vm3692 = vcmask 523264
  %v3693 = vsel %vm3692, %v3689, %v3633
  %v3694 = vsel %vm3692, %v3690, %v3635
  %v3695 = vsel %vm3692, %v3691, %v3637
  %vm3696 = vcmask 785408
  %v3697 = vsel %vm3696, %v3693, %v3645
  %v3698 = vsel %vm3696, %v3694, %v3647
  %v3699 = vsel %vm3696, %v3695, %v3649
  %v3700 = vsel %vm46, %v3409, %v3657
  %v3701 = vsel %vm46, %v3545, %v3659
  %v3702 = vsel %vm46, %v3605, %v3661
  %v3703 = vsel %vm3692, %v3700, %v3669
  %v3704 = vsel %vm3692, %v3701, %v3671
  %v3705 = vsel %vm3692, %v3702, %v3673
  %v3706 = vsel %vm3696, %v3703, %v3681
  %v3707 = vsel %vm3696, %v3704, %v3683
  %v3708 = vsel %vm3696, %v3705, %v3685
  %3709 = vst [vmem:[%s5] sm:$0xff] %v3697
  %3710 = vst [vmem:[%s5 + $0x8] sm:$0xff] %v3706
  %3711 = vst [vmem:[%s5 + $0x10] sm:$0xff] %v3698
  %3712 = vst [vmem:[%s5 + $0x18] sm:$0xff] %v3707
  %3713 = vst [vmem:[%s5 + $0x20] sm:$0xf] %v3699
  %3714 = vst [vmem:[%s5 + $0x28] sm:$0xf] %v3708
  // Predicated region
  $region22: #{bahdanau_attention.1} parent=0 // pred_check
    _
  $region23: #{bahdanau_attention.1} parent=0 // pred_check_branch
    %3716 = sbr.rel (0) target = $region25
  $region24: #{bahdanau_attention.1} parent=0 // pred_region
    _
  $region25: #{bahdanau_attention.1} parent=0 // pred_fallthru
    _
  // Predicated region
  $region26: #{bahdanau_attention.1} parent=0 // pred_check
    _
  $region27: #{bahdanau_attention.1} parent=0 // pred_check_branch
    %3718 = sbr.rel (0) target = $region29
  $region28: #{bahdanau_attention.1} parent=0 // pred_region
    _
  $region29: #{bahdanau_attention.1} parent=0 // pred_fallthru
    _
  // Predicated region
  $region30: #{bahdanau_attention.1} parent=0 // pred_check
    _
  $region31: #{bahdanau_attention.1} parent=0 // pred_check_branch
    %3720 = sbr.rel (0) target = $region33
  $region32: #{bahdanau_attention.1} parent=0 // pred_region
    _
  $region33: #{bahdanau_attention.1} parent=0 // pred_fallthru
    _
  // Predicated region
  $region34: #{bahdanau_attention.1} parent=0 // pred_check
    _
  $region35: #{bahdanau_attention.1} parent=0 // pred_check_branch
    %3722 = sbr.rel (0) target = $region37
  $region36: #{bahdanau_attention.1} parent=0 // pred_region
    _
  $region37: #{bahdanau_attention.1} parent=0 // pred_fallthru
    _

</llo_original>
